<compile_context>
chip_gen: v6e
topology: v6e:2x2x1
jax: 0.10.0
libtpu: 0.0.40
codegen_flags: <defaults>
</compile_context>

<pallas_src>
import functools

import jax
import jax.numpy as jnp
from jax.experimental import pallas as pl
from jax.experimental.pallas import tpu as pltpu


# ----------------------------- shared math ----------------------------------
def _gelu(x):
    # tanh-approximate GELU (see TODO above).
    c = 0.7978845608028654  # sqrt(2/pi)
    return 0.5 * x * (1.0 + jnp.tanh(c * (x + 0.044715 * x * x * x)))


def _layernorm(x, gamma, beta, eps=1e-5):
    mu = jnp.mean(x, axis=-1, keepdims=True)
    var = jnp.mean(jnp.square(x - mu), axis=-1, keepdims=True)
    return (x - mu) * jax.lax.rsqrt(var + eps) * gamma + beta


# ------------------------------- kernel --------------------------------------
def _tsmlp_kernel(*refs, scale, causal, shift_size, has_attn, shift_impl, eps):
    if has_attn:
        (x_ref, g_pre_ref, b_pre_ref,
         w_q_ref, w_k_ref, w_v_ref, w_ao_ref, b_ao_ref,
         w_ir_ref, b_ir_ref, w_ig_ref, b_ig_ref,
         g_ts_ref, b_ts_ref, w_po_ref, b_po_ref,
         g_f_ref, b_f_ref, o_ref) = refs
    else:
        (x_ref, g_pre_ref, b_pre_ref,
         w_ir_ref, b_ir_ref, w_ig_ref, b_ig_ref,
         g_ts_ref, b_ts_ref, w_po_ref, b_po_ref,
         g_f_ref, b_f_ref, o_ref) = refs

    x = x_ref[...].astype(jnp.float32)                        # (N, adim)
    xn = _layernorm(x, g_pre_ref[...], b_pre_ref[...], eps)   # pre_norm

    tiny = None
    if has_attn:
        # tiny single-head attention on the pre-normed input; q/k/v come from
        # host-side-split (tile-aligned) weight slabs -> no in-kernel slicing.
        q = jnp.dot(xn, w_q_ref[...], preferred_element_type=jnp.float32)
        k = jnp.dot(xn, w_k_ref[...], preferred_element_type=jnp.float32)
        v = jnp.dot(xn, w_v_ref[...], preferred_element_type=jnp.float32)
        sim = jnp.dot(q, k.T, preferred_element_type=jnp.float32) * scale
        if causal:
            n = sim.shape[0]
            row = jax.lax.broadcasted_iota(jnp.int32, (n, n), 0)
            col = jax.lax.broadcasted_iota(jnp.int32, (n, n), 1)
            sim = jnp.where(col > row, -jnp.finfo(jnp.float32).max, sim)
        sim = sim - jnp.max(sim, axis=-1, keepdims=True)
        p = jnp.exp(sim)
        inv = pl.reciprocal(jnp.sum(p, axis=-1, keepdims=True), approx=True)
        attn = p * inv
        ctx = jnp.dot(attn, v, preferred_element_type=jnp.float32)
        tiny = (jnp.dot(ctx, w_ao_ref[...], preferred_element_type=jnp.float32)
                + b_ao_ref[...])                               # (N, eunits//2)

    # proj_in + GELU, with res/gate halves split host-side (GELU is
    # elementwise, so the split commutes exactly with the PyTorch chunk()).
    res = _gelu(jnp.dot(xn, w_ir_ref[...], preferred_element_type=jnp.float32)
                + b_ir_ref[...])                               # (N, half)
    gate = _gelu(jnp.dot(xn, w_ig_ref[...], preferred_element_type=jnp.float32)
                 + b_ig_ref[...])                              # (N, half)
    gate = _layernorm(gate, g_ts_ref[...], b_ts_ref[...], eps)

    # --- TemporalShiftGatingUnit: first quarter shifted forward in time by s
    #     (zeros at t < s), second quarter shifted backward by s (zeros at the
    #     end). Exactly mirrors the torch.cat construction in the module.
    n_seq, d_half = gate.shape
    dq = d_half // 2
    s = shift_size
    g_front = gate[:, :dq]
    g_back = gate[:, dq:]
    if shift_impl == "concat":
        zpad = jnp.zeros((s, dq), jnp.float32)
        g1 = jnp.concatenate([zpad, g_front[: n_seq - s, :]], axis=0)
        g2 = jnp.concatenate([g_back[s:, :], zpad], axis=0)
    else:
        # Fallback: banded permutation matmul -- numerically identical
        # (0/1 matrix, exactly one term per output row) and bulletproof to
        # lower; only used if unaligned sublane concatenation is unsupported.
        r = jax.lax.broadcasted_iota(jnp.int32, (n_seq, n_seq), 0)
        c = jax.lax.broadcasted_iota(jnp.int32, (n_seq, n_seq), 1)
        g1 = jnp.dot((r == c + s).astype(jnp.float32), g_front,
                     preferred_element_type=jnp.float32)
        g2 = jnp.dot((c == r + s).astype(jnp.float32), g_back,
                     preferred_element_type=jnp.float32)
    gate = jnp.concatenate([g1, g2], axis=1)                   # (N, half)

    if has_attn:
        gate = gate + tiny

    y = _gelu(gate) * res                                      # (N, half)
    z = (jnp.dot(y, w_po_ref[...], preferred_element_type=jnp.float32)
         + b_po_ref[...])                                      # proj_out
    out = x + z                                                # residual add
    out = _layernorm(out, g_f_ref[...], b_f_ref[...], eps)     # encoder norm
    o_ref[...] = out.astype(o_ref.dtype)


# ------------------------------ wrapper --------------------------------------
def tsmlp_encoder_pallas(x, params, *, attn_dim=0, causal=False, shift_size=1):
    B, N, adim = x.shape
    eunits = params["w_in"].shape[1]
    half = eunits // 2
    assert half % 2 == 0
    has_attn = attn_dim > 0

    g2d = lambda a: a.reshape(1, -1)

    # Host-side, lane-aligned weight splits (no in-kernel lane slicing).
    w_in, b_in = params["w_in"], params["b_in"]
    inputs = [x, g2d(params["g_pre"]), g2d(params["b_pre"])]
    if has_attn:
        w_qkv = params["w_qkv"]
        inputs += [w_qkv[:, :attn_dim],
                   w_qkv[:, attn_dim:2 * attn_dim],
                   w_qkv[:, 2 * attn_dim:],
                   params["w_ao"], g2d(params["b_ao"])]
    inputs += [w_in[:, :half], g2d(b_in[:half]),
               w_in[:, half:], g2d(b_in[half:]),
               g2d(params["g_ts"]), g2d(params["b_ts"]),
               params["w_po"], g2d(params["b_po"]),
               g2d(params["g_f"]), g2d(params["b_f"])]

    # Batch dim squeezed from the kernel view (clean 2-D (N, adim) Refs).
    x_spec = pl.BlockSpec((None, N, adim), lambda b: (b, 0, 0))
    in_specs = [x_spec] + [pl.BlockSpec(a.shape, lambda b: (0, 0))
                           for a in inputs[1:]]
    out_spec = pl.BlockSpec((None, N, adim), lambda b: (b, 0, 0))

    def build(shift_impl):
        kernel = functools.partial(
            _tsmlp_kernel,
            scale=(float(attn_dim) ** -0.5) if has_attn else 1.0,
            causal=causal, shift_size=shift_size, has_attn=has_attn,
            shift_impl=shift_impl, eps=1e-5)
        return pl.pallas_call(
            kernel,
            out_shape=jax.ShapeDtypeStruct((B, N, adim), x.dtype),
            grid_spec=pltpu.PrefetchScalarGridSpec(
                num_scalar_prefetch=0,
                grid=(B,),
                in_specs=in_specs,
                out_specs=out_spec),
            compiler_params=pltpu.CompilerParams(
                dimension_semantics=("parallel",)),
        )

    try:
        return jax.block_until_ready(build("concat")(*inputs))
    except Exception:
        # Some Mosaic versions reject unaligned sublane concatenation; the
        # permutation-matmul shift computes the exact same result.
        return jax.block_until_ready(build("matmul")(*inputs))


# ---------------------------- pure-JAX reference ------------------------------
def tsmlp_encoder_ref(x, p, *, attn_dim=0, causal=False, shift_size=1):
    """Mirrors TSMLPEncoder.forward (weights stored as [in, out])."""
    eps = 1e-5
    residual = x
    xn = _layernorm(x, p["g_pre"], p["b_pre"], eps)
    tiny = None
    if attn_dim > 0:
        scale = float(attn_dim) ** -0.5
        qkv = jnp.einsum("bnd,de->bne", xn, p["w_qkv"])
        q, k, v = jnp.split(qkv, 3, axis=-1)
        sim = jnp.einsum("bid,bjd->bij", q, k) * scale
        if causal:
            n = sim.shape[-1]
            mask = jnp.triu(jnp.ones((n, n), dtype=bool), k=1)
            sim = jnp.where(mask[None], -jnp.finfo(sim.dtype).max, sim)
        attn = jax.nn.softmax(sim, axis=-1)
        ctx = jnp.einsum("bij,bjd->bid", attn, v)
        tiny = jnp.einsum("bid,de->bie", ctx, p["w_ao"]) + p["b_ao"]
    u = _gelu(jnp.einsum("bnd,de->bne", xn, p["w_in"]) + p["b_in"])
    res, gate = jnp.split(u, 2, axis=-1)
    gate = _layernorm(gate, p["g_ts"], p["b_ts"], eps)
    b_, t_, d_ = gate.shape
    s = shift_size
    pad = jnp.zeros((b_, s, d_ // 2), gate.dtype)
    g1 = jnp.concatenate([pad, gate[:, :, : d_ // 2]], axis=1)
    g2 = jnp.concatenate([gate[:, :, d_ // 2:], pad], axis=1)
    gate = jnp.concatenate([g1[:, :-s, :], g2[:, s:, :]], axis=2)
    if tiny is not None:
        gate = gate + tiny
    y = _gelu(gate) * res
    z = jnp.einsum("bnd,de->bne", y, p["w_po"]) + p["b_po"]
    return _layernorm(residual + z, p["g_f"], p["b_f"], eps)


# --------------------------------- test ---------------------------------------
if __name__ == "__main__":
    key = jax.random.PRNGKey(0)
    ks = jax.random.split(key, 16)

    # Small but lane-dense shapes (feature dims multiples of 128, seq mult of 8).
    B, N = 2, 16
    adim = 128                    # args.hidden_size
    eunits = 4 * adim             # 512
    half = eunits // 2            # 256
    attn_dim = 128                # tiny-attention width
    shift_size = 1                # args.shift_size
    causal = True

    def rnd(k, shape, scale=1.0):
        return scale * jax.random.normal(k, shape, dtype=jnp.float32)

    params = {
        "g_pre": 1.0 + 0.1 * rnd(ks[0], (adim,)),
        "b_pre": 0.1 * rnd(ks[1], (adim,)),
        "w_qkv": rnd(ks[2], (adim, 3 * attn_dim), adim ** -0.5),
        "w_ao":  rnd(ks[3], (attn_dim, half), attn_dim ** -0.5),
        "b_ao":  0.02 * rnd(ks[4], (half,)),
        "w_in":  rnd(ks[5], (adim, eunits), adim ** -0.5),
        "b_in":  0.02 * rnd(ks[6], (eunits,)),
        "g_ts":  1.0 + 0.1 * rnd(ks[7], (half,)),
        "b_ts":  0.1 * rnd(ks[8], (half,)),
        "w_po":  rnd(ks[9], (half, adim), half ** -0.5),
        "b_po":  0.02 * rnd(ks[10], (adim,)),
        "g_f":   1.0 + 0.1 * rnd(ks[11], (adim,)),
        "b_f":   0.1 * rnd(ks[12], (adim,)),
    }
    x = rnd(ks[13], (B, N, adim))

    # Config 1: tiny causal attention enabled (attn_dim > 0).
    y = tsmlp_encoder_pallas(x, params, attn_dim=attn_dim, causal=causal,
                             shift_size=shift_size)
    y = jax.block_until_ready(y)
    y_ref = tsmlp_encoder_ref(x, params, attn_dim=attn_dim, causal=causal,
                              shift_size=shift_size)
    assert y.shape == (B, N, adim)
    # approx reciprocal in the in-kernel softmax + MXU accumulation-order
    # differences -> modest tolerance; structural bugs give O(1) errors here.
    assert jnp.allclose(y, y_ref, atol=1e-2, rtol=1e-2), (
        f"attn config mismatch, max abs err={float(jnp.max(jnp.abs(y - y_ref)))}")

    # Config 2: attn_dim == 0 (the TSMLPEncoder default, no attention branch).
    y0 = tsmlp_encoder_pallas(x, params, attn_dim=0, shift_size=shift_size)
    y0 = jax.block_until_ready(y0)
    y0_ref = tsmlp_encoder_ref(x, params, attn_dim=0, shift_size=shift_size)
    assert jnp.allclose(y0, y0_ref, atol=2e-3, rtol=2e-3), (
        f"no-attn config mismatch, max abs err={float(jnp.max(jnp.abs(y0 - y0_ref)))}")

    print("KERNEL_OK")
</pallas_src>

<mosaic_0001>
module attributes {stable_mosaic.version = 11 : i64} {
  func.func @_tsmlp_kernel(%arg0: i32, %arg1: memref<1x16x128xf32, #tpu.memory_space<vmem>>, %arg2: memref<1x128xf32, #tpu.memory_space<vmem>>, %arg3: memref<1x128xf32, #tpu.memory_space<vmem>>, %arg4: memref<128x128xf32, #tpu.memory_space<vmem>>, %arg5: memref<128x128xf32, #tpu.memory_space<vmem>>, %arg6: memref<128x128xf32, #tpu.memory_space<vmem>>, %arg7: memref<128x256xf32, #tpu.memory_space<vmem>>, %arg8: memref<1x256xf32, #tpu.memory_space<vmem>>, %arg9: memref<128x256xf32, #tpu.memory_space<vmem>>, %arg10: memref<1x256xf32, #tpu.memory_space<vmem>>, %arg11: memref<128x256xf32, #tpu.memory_space<vmem>>, %arg12: memref<1x256xf32, #tpu.memory_space<vmem>>, %arg13: memref<1x256xf32, #tpu.memory_space<vmem>>, %arg14: memref<1x256xf32, #tpu.memory_space<vmem>>, %arg15: memref<256x128xf32, #tpu.memory_space<vmem>>, %arg16: memref<1x128xf32, #tpu.memory_space<vmem>>, %arg17: memref<1x128xf32, #tpu.memory_space<vmem>>, %arg18: memref<1x128xf32, #tpu.memory_space<vmem>>, %arg19: memref<1x16x128xf32, #tpu.memory_space<vmem>>) attributes {dimension_semantics = [#tpu.dimension_semantics<parallel>], iteration_bounds = array<i64: 2>, scalar_prefetch = 0 : i64, scratch_operands = 0 : i64, tpu.core_type = #tpu.core_type<tc>, window_params = [{transform_indices = @transform_0, window_bounds = array<i64: 1, 16, 128>}, {pipeline_mode = #tpu.pipeline_mode<synchronous>, transform_indices = @transform_1, window_bounds = array<i64: 1, 128>}, {pipeline_mode = #tpu.pipeline_mode<synchronous>, transform_indices = @transform_2, window_bounds = array<i64: 1, 128>}, {pipeline_mode = #tpu.pipeline_mode<synchronous>, transform_indices = @transform_3, window_bounds = array<i64: 128, 128>}, {pipeline_mode = #tpu.pipeline_mode<synchronous>, transform_indices = @transform_4, window_bounds = array<i64: 128, 128>}, {pipeline_mode = #tpu.pipeline_mode<synchronous>, transform_indices = @transform_5, window_bounds = array<i64: 128, 128>}, {pipeline_mode = #tpu.pipeline_mode<synchronous>, transform_indices = @transform_6, window_bounds = array<i64: 128, 256>}, {pipeline_mode = #tpu.pipeline_mode<synchronous>, transform_indices = @transform_7, window_bounds = array<i64: 1, 256>}, {pipeline_mode = #tpu.pipeline_mode<synchronous>, transform_indices = @transform_8, window_bounds = array<i64: 128, 256>}, {pipeline_mode = #tpu.pipeline_mode<synchronous>, transform_indices = @transform_9, window_bounds = array<i64: 1, 256>}, {pipeline_mode = #tpu.pipeline_mode<synchronous>, transform_indices = @transform_10, window_bounds = array<i64: 128, 256>}, {pipeline_mode = #tpu.pipeline_mode<synchronous>, transform_indices = @transform_11, window_bounds = array<i64: 1, 256>}, {pipeline_mode = #tpu.pipeline_mode<synchronous>, transform_indices = @transform_12, window_bounds = array<i64: 1, 256>}, {pipeline_mode = #tpu.pipeline_mode<synchronous>, transform_indices = @transform_13, window_bounds = array<i64: 1, 256>}, {pipeline_mode = #tpu.pipeline_mode<synchronous>, transform_indices = @transform_14, window_bounds = array<i64: 256, 128>}, {pipeline_mode = #tpu.pipeline_mode<synchronous>, transform_indices = @transform_15, window_bounds = array<i64: 1, 128>}, {pipeline_mode = #tpu.pipeline_mode<synchronous>, transform_indices = @transform_16, window_bounds = array<i64: 1, 128>}, {pipeline_mode = #tpu.pipeline_mode<synchronous>, transform_indices = @transform_17, window_bounds = array<i64: 1, 128>}, {transform_indices = @transform_18, window_bounds = array<i64: 1, 16, 128>}]} {
    %c0 = arith.constant 0 : index
    %c0_0 = arith.constant 0 : index
    %c0_1 = arith.constant 0 : index
    %0 = vector.load %arg1[%c0, %c0_0, %c0_1] : memref<1x16x128xf32, #tpu.memory_space<vmem>>, vector<1x16x128xf32>
    %1 = vector.shape_cast %0 : vector<1x16x128xf32> to vector<16x128xf32>
    %c0_2 = arith.constant 0 : index
    %c0_3 = arith.constant 0 : index
    %2 = vector.load %arg2[%c0_2, %c0_3] : memref<1x128xf32, #tpu.memory_space<vmem>>, vector<1x128xf32>
    %c0_4 = arith.constant 0 : index
    %c0_5 = arith.constant 0 : index
    %3 = vector.load %arg3[%c0_4, %c0_5] : memref<1x128xf32, #tpu.memory_space<vmem>>, vector<1x128xf32>
    %cst = arith.constant dense<0.000000e+00> : vector<16xf32>
    %4 = vector.multi_reduction <add>, %1, %cst [1] : vector<16x128xf32> to vector<16xf32>
    %5 = vector.shape_cast %4 : vector<16xf32> to vector<16x1xf32>
    %cst_6 = arith.constant 1.280000e+02 : f32
    %6 = vector.broadcast %cst_6 : f32 to vector<16x1xf32>
    %7 = arith.divf %5, %6 : vector<16x1xf32>
    %8 = vector.broadcast %7 : vector<16x1xf32> to vector<16x128xf32>
    %9 = arith.subf %1, %8 : vector<16x128xf32>
    %10 = arith.mulf %9, %9 : vector<16x128xf32>
    %cst_7 = arith.constant dense<0.000000e+00> : vector<16xf32>
    %11 = vector.multi_reduction <add>, %10, %cst_7 [1] : vector<16x128xf32> to vector<16xf32>
    %12 = vector.shape_cast %11 : vector<16xf32> to vector<16x1xf32>
    %cst_8 = arith.constant 1.280000e+02 : f32
    %13 = vector.broadcast %cst_8 : f32 to vector<16x1xf32>
    %14 = arith.divf %12, %13 : vector<16x1xf32>
    %15 = vector.broadcast %7 : vector<16x1xf32> to vector<16x128xf32>
    %16 = arith.subf %1, %15 : vector<16x128xf32>
    %cst_9 = arith.constant 9.99999974E-6 : f32
    %17 = vector.broadcast %cst_9 : f32 to vector<16x1xf32>
    %18 = arith.addf %14, %17 : vector<16x1xf32>
    %19 = math.rsqrt %18 : vector<16x1xf32>
    %20 = vector.broadcast %19 : vector<16x1xf32> to vector<16x128xf32>
    %21 = arith.mulf %16, %20 : vector<16x128xf32>
    %22 = vector.broadcast %2 : vector<1x128xf32> to vector<16x128xf32>
    %23 = arith.mulf %21, %22 : vector<16x128xf32>
    %24 = vector.broadcast %3 : vector<1x128xf32> to vector<16x128xf32>
    %25 = arith.addf %23, %24 : vector<16x128xf32>
    %c0_10 = arith.constant 0 : index
    %c0_11 = arith.constant 0 : index
    %26 = vector.load %arg4[%c0_10, %c0_11] : memref<128x128xf32, #tpu.memory_space<vmem>>, vector<128x128xf32>
    %cst_12 = arith.constant dense<0.000000e+00> : vector<16x128xf32>
    %27 = tpu.matmul %25, %26, %cst_12 {dimension_numbers = #tpu.dot_dimension_numbers<[1], [0], [0], [1], [0, 0, 1, 1], [], []>} : vector<16x128xf32>, vector<128x128xf32>, vector<16x128xf32> -> vector<16x128xf32>
    %c0_13 = arith.constant 0 : index
    %c0_14 = arith.constant 0 : index
    %28 = vector.load %arg5[%c0_13, %c0_14] : memref<128x128xf32, #tpu.memory_space<vmem>>, vector<128x128xf32>
    %cst_15 = arith.constant dense<0.000000e+00> : vector<16x128xf32>
    %29 = tpu.matmul %25, %28, %cst_15 {dimension_numbers = #tpu.dot_dimension_numbers<[1], [0], [0], [1], [0, 0, 1, 1], [], []>} : vector<16x128xf32>, vector<128x128xf32>, vector<16x128xf32> -> vector<16x128xf32>
    %c0_16 = arith.constant 0 : index
    %c0_17 = arith.constant 0 : index
    %30 = vector.load %arg6[%c0_16, %c0_17] : memref<128x128xf32, #tpu.memory_space<vmem>>, vector<128x128xf32>
    %cst_18 = arith.constant dense<0.000000e+00> : vector<16x128xf32>
    %31 = tpu.matmul %25, %30, %cst_18 {dimension_numbers = #tpu.dot_dimension_numbers<[1], [0], [0], [1], [0, 0, 1, 1], [], []>} : vector<16x128xf32>, vector<128x128xf32>, vector<16x128xf32> -> vector<16x128xf32>
    %32 = tpu.transpose %29, [1, 0] : vector<16x128xf32> -> vector<128x16xf32>
    %cst_19 = arith.constant dense<0.000000e+00> : vector<16x16xf32>
    %33 = tpu.matmul %27, %32, %cst_19 {dimension_numbers = #tpu.dot_dimension_numbers<[1], [0], [0], [1], [0, 0, 1, 1], [], []>} : vector<16x128xf32>, vector<128x16xf32>, vector<16x16xf32> -> vector<16x16xf32>
    %cst_20 = arith.constant 0.0883883461 : f32
    %34 = vector.broadcast %cst_20 : f32 to vector<16x16xf32>
    %35 = arith.mulf %33, %34 : vector<16x16xf32>
    %36 = tpu.iota {dimensions = array<i32: 0>} : vector<16x16xi32>
    %37 = tpu.iota {dimensions = array<i32: 1>} : vector<16x16xi32>
    %38 = arith.cmpi sgt, %37, %36 : vector<16x16xi32>
    %cst_21 = arith.constant -3.40282347E+38 : f32
    %39 = vector.broadcast %cst_21 : f32 to vector<16x16xf32>
    %40 = arith.select %38, %39, %35 : vector<16x16xi1>, vector<16x16xf32>
    %cst_22 = arith.constant dense<0xFF800000> : vector<16xf32>
    %41 = vector.multi_reduction <maximumf>, %40, %cst_22 [1] : vector<16x16xf32> to vector<16xf32>
    %42 = vector.shape_cast %41 : vector<16xf32> to vector<16x1xf32>
    %43 = vector.broadcast %42 : vector<16x1xf32> to vector<16x16xf32>
    %44 = arith.subf %40, %43 : vector<16x16xf32>
    %45 = math.exp %44 : vector<16x16xf32>
    %cst_23 = arith.constant dense<0.000000e+00> : vector<16xf32>
    %46 = vector.multi_reduction <add>, %45, %cst_23 [1] : vector<16x16xf32> to vector<16xf32>
    %47 = vector.shape_cast %46 : vector<16xf32> to vector<16x1xf32>
    %48 = tpu.reciprocal %47 {approx = true} : vector<16x1xf32> -> vector<16x1xf32>
    %49 = vector.broadcast %48 : vector<16x1xf32> to vector<16x16xf32>
    %50 = arith.mulf %45, %49 : vector<16x16xf32>
    %cst_24 = arith.constant dense<0.000000e+00> : vector<16x128xf32>
    %51 = tpu.matmul %50, %31, %cst_24 {dimension_numbers = #tpu.dot_dimension_numbers<[1], [0], [0], [1], [0, 0, 1, 1], [], []>} : vector<16x16xf32>, vector<16x128xf32>, vector<16x128xf32> -> vector<16x128xf32>
    %c0_25 = arith.constant 0 : index
    %c0_26 = arith.constant 0 : index
    %52 = vector.load %arg7[%c0_25, %c0_26] : memref<128x256xf32, #tpu.memory_space<vmem>>, vector<128x256xf32>
    %cst_27 = arith.constant dense<0.000000e+00> : vector<16x256xf32>
    %53 = tpu.matmul %51, %52, %cst_27 {dimension_numbers = #tpu.dot_dimension_numbers<[1], [0], [0], [1], [0, 0, 1, 1], [], []>} : vector<16x128xf32>, vector<128x256xf32>, vector<16x256xf32> -> vector<16x256xf32>
    %c0_28 = arith.constant 0 : index
    %c0_29 = arith.constant 0 : index
    %54 = vector.load %arg8[%c0_28, %c0_29] : memref<1x256xf32, #tpu.memory_space<vmem>>, vector<1x256xf32>
    %55 = vector.broadcast %54 : vector<1x256xf32> to vector<16x256xf32>
    %56 = arith.addf %53, %55 : vector<16x256xf32>
    %c0_30 = arith.constant 0 : index
    %c0_31 = arith.constant 0 : index
    %57 = vector.load %arg9[%c0_30, %c0_31] : memref<128x256xf32, #tpu.memory_space<vmem>>, vector<128x256xf32>
    %cst_32 = arith.constant dense<0.000000e+00> : vector<16x256xf32>
    %58 = tpu.matmul %25, %57, %cst_32 {dimension_numbers = #tpu.dot_dimension_numbers<[1], [0], [0], [1], [0, 0, 1, 1], [], []>} : vector<16x128xf32>, vector<128x256xf32>, vector<16x256xf32> -> vector<16x256xf32>
    %c0_33 = arith.constant 0 : index
    %c0_34 = arith.constant 0 : index
    %59 = vector.load %arg10[%c0_33, %c0_34] : memref<1x256xf32, #tpu.memory_space<vmem>>, vector<1x256xf32>
    %60 = vector.broadcast %59 : vector<1x256xf32> to vector<16x256xf32>
    %61 = arith.addf %58, %60 : vector<16x256xf32>
    %cst_35 = arith.constant 5.000000e-01 : f32
    %62 = vector.broadcast %cst_35 : f32 to vector<16x256xf32>
    %63 = arith.mulf %62, %61 : vector<16x256xf32>
    %cst_36 = arith.constant 4.471500e-02 : f32
    %64 = vector.broadcast %cst_36 : f32 to vector<16x256xf32>
    %65 = arith.mulf %64, %61 : vector<16x256xf32>
    %66 = arith.mulf %65, %61 : vector<16x256xf32>
    %67 = arith.mulf %66, %61 : vector<16x256xf32>
    %68 = arith.addf %61, %67 : vector<16x256xf32>
    %cst_37 = arith.constant 0.797884583 : f32
    %69 = vector.broadcast %cst_37 : f32 to vector<16x256xf32>
    %70 = arith.mulf %69, %68 : vector<16x256xf32>
    %71 = math.tanh %70 : vector<16x256xf32>
    %cst_38 = arith.constant 1.000000e+00 : f32
    %72 = vector.broadcast %cst_38 : f32 to vector<16x256xf32>
    %73 = arith.addf %72, %71 : vector<16x256xf32>
    %74 = arith.mulf %63, %73 : vector<16x256xf32>
    %c0_39 = arith.constant 0 : index
    %c0_40 = arith.constant 0 : index
    %75 = vector.load %arg11[%c0_39, %c0_40] : memref<128x256xf32, #tpu.memory_space<vmem>>, vector<128x256xf32>
    %cst_41 = arith.constant dense<0.000000e+00> : vector<16x256xf32>
    %76 = tpu.matmul %25, %75, %cst_41 {dimension_numbers = #tpu.dot_dimension_numbers<[1], [0], [0], [1], [0, 0, 1, 1], [], []>} : vector<16x128xf32>, vector<128x256xf32>, vector<16x256xf32> -> vector<16x256xf32>
    %c0_42 = arith.constant 0 : index
    %c0_43 = arith.constant 0 : index
    %77 = vector.load %arg12[%c0_42, %c0_43] : memref<1x256xf32, #tpu.memory_space<vmem>>, vector<1x256xf32>
    %78 = vector.broadcast %77 : vector<1x256xf32> to vector<16x256xf32>
    %79 = arith.addf %76, %78 : vector<16x256xf32>
    %cst_44 = arith.constant 5.000000e-01 : f32
    %80 = vector.broadcast %cst_44 : f32 to vector<16x256xf32>
    %81 = arith.mulf %80, %79 : vector<16x256xf32>
    %cst_45 = arith.constant 4.471500e-02 : f32
    %82 = vector.broadcast %cst_45 : f32 to vector<16x256xf32>
    %83 = arith.mulf %82, %79 : vector<16x256xf32>
    %84 = arith.mulf %83, %79 : vector<16x256xf32>
    %85 = arith.mulf %84, %79 : vector<16x256xf32>
    %86 = arith.addf %79, %85 : vector<16x256xf32>
    %cst_46 = arith.constant 0.797884583 : f32
    %87 = vector.broadcast %cst_46 : f32 to vector<16x256xf32>
    %88 = arith.mulf %87, %86 : vector<16x256xf32>
    %89 = math.tanh %88 : vector<16x256xf32>
    %cst_47 = arith.constant 1.000000e+00 : f32
    %90 = vector.broadcast %cst_47 : f32 to vector<16x256xf32>
    %91 = arith.addf %90, %89 : vector<16x256xf32>
    %92 = arith.mulf %81, %91 : vector<16x256xf32>
    %c0_48 = arith.constant 0 : index
    %c0_49 = arith.constant 0 : index
    %93 = vector.load %arg13[%c0_48, %c0_49] : memref<1x256xf32, #tpu.memory_space<vmem>>, vector<1x256xf32>
    %c0_50 = arith.constant 0 : index
    %c0_51 = arith.constant 0 : index
    %94 = vector.load %arg14[%c0_50, %c0_51] : memref<1x256xf32, #tpu.memory_space<vmem>>, vector<1x256xf32>
    %cst_52 = arith.constant dense<0.000000e+00> : vector<16xf32>
    %95 = vector.multi_reduction <add>, %92, %cst_52 [1] : vector<16x256xf32> to vector<16xf32>
    %96 = vector.shape_cast %95 : vector<16xf32> to vector<16x1xf32>
    %cst_53 = arith.constant 2.560000e+02 : f32
    %97 = vector.broadcast %cst_53 : f32 to vector<16x1xf32>
    %98 = arith.divf %96, %97 : vector<16x1xf32>
    %99 = vector.broadcast %98 : vector<16x1xf32> to vector<16x256xf32>
    %100 = arith.subf %92, %99 : vector<16x256xf32>
    %101 = arith.mulf %100, %100 : vector<16x256xf32>
    %cst_54 = arith.constant dense<0.000000e+00> : vector<16xf32>
    %102 = vector.multi_reduction <add>, %101, %cst_54 [1] : vector<16x256xf32> to vector<16xf32>
    %103 = vector.shape_cast %102 : vector<16xf32> to vector<16x1xf32>
    %cst_55 = arith.constant 2.560000e+02 : f32
    %104 = vector.broadcast %cst_55 : f32 to vector<16x1xf32>
    %105 = arith.divf %103, %104 : vector<16x1xf32>
    %106 = vector.broadcast %98 : vector<16x1xf32> to vector<16x256xf32>
    %107 = arith.subf %92, %106 : vector<16x256xf32>
    %cst_56 = arith.constant 9.99999974E-6 : f32
    %108 = vector.broadcast %cst_56 : f32 to vector<16x1xf32>
    %109 = arith.addf %105, %108 : vector<16x1xf32>
    %110 = math.rsqrt %109 : vector<16x1xf32>
    %111 = vector.broadcast %110 : vector<16x1xf32> to vector<16x256xf32>
    %112 = arith.mulf %107, %111 : vector<16x256xf32>
    %113 = vector.broadcast %93 : vector<1x256xf32> to vector<16x256xf32>
    %114 = arith.mulf %112, %113 : vector<16x256xf32>
    %115 = vector.broadcast %94 : vector<1x256xf32> to vector<16x256xf32>
    %116 = arith.addf %114, %115 : vector<16x256xf32>
    %117 = vector.extract_strided_slice %116 {offsets = [0, 0], sizes = [16, 128], strides = [1, 1]} : vector<16x256xf32> to vector<16x128xf32>
    %118 = vector.extract_strided_slice %116 {offsets = [0, 128], sizes = [16, 128], strides = [1, 1]} : vector<16x256xf32> to vector<16x128xf32>
    %cst_57 = arith.constant 0.000000e+00 : f32
    %119 = vector.broadcast %cst_57 : f32 to vector<1x128xf32>
    %120 = vector.extract_strided_slice %117 {offsets = [0, 0], sizes = [15, 128], strides = [1, 1]} : vector<16x128xf32> to vector<15x128xf32>
    %121 = tpu.concatenate %119, %120 in 0 : vector<1x128xf32>, vector<15x128xf32> -> vector<16x128xf32>
    %122 = vector.extract_strided_slice %118 {offsets = [1, 0], sizes = [15, 128], strides = [1, 1]} : vector<16x128xf32> to vector<15x128xf32>
    %123 = tpu.concatenate %122, %119 in 0 : vector<15x128xf32>, vector<1x128xf32> -> vector<16x128xf32>
    %124 = tpu.concatenate %121, %123 in 1 : vector<16x128xf32>, vector<16x128xf32> -> vector<16x256xf32>
    %125 = arith.addf %124, %56 : vector<16x256xf32>
    %cst_58 = arith.constant 5.000000e-01 : f32
    %126 = vector.broadcast %cst_58 : f32 to vector<16x256xf32>
    %127 = arith.mulf %126, %125 : vector<16x256xf32>
    %cst_59 = arith.constant 4.471500e-02 : f32
    %128 = vector.broadcast %cst_59 : f32 to vector<16x256xf32>
    %129 = arith.mulf %128, %125 : vector<16x256xf32>
    %130 = arith.mulf %129, %125 : vector<16x256xf32>
    %131 = arith.mulf %130, %125 : vector<16x256xf32>
    %132 = arith.addf %125, %131 : vector<16x256xf32>
    %cst_60 = arith.constant 0.797884583 : f32
    %133 = vector.broadcast %cst_60 : f32 to vector<16x256xf32>
    %134 = arith.mulf %133, %132 : vector<16x256xf32>
    %135 = math.tanh %134 : vector<16x256xf32>
    %cst_61 = arith.constant 1.000000e+00 : f32
    %136 = vector.broadcast %cst_61 : f32 to vector<16x256xf32>
    %137 = arith.addf %136, %135 : vector<16x256xf32>
    %138 = arith.mulf %127, %137 : vector<16x256xf32>
    %139 = arith.mulf %138, %74 : vector<16x256xf32>
    %c0_62 = arith.constant 0 : index
    %c0_63 = arith.constant 0 : index
    %140 = vector.load %arg15[%c0_62, %c0_63] : memref<256x128xf32, #tpu.memory_space<vmem>>, vector<256x128xf32>
    %cst_64 = arith.constant dense<0.000000e+00> : vector<16x128xf32>
    %141 = tpu.matmul %139, %140, %cst_64 {dimension_numbers = #tpu.dot_dimension_numbers<[1], [0], [0], [1], [0, 0, 1, 1], [], []>} : vector<16x256xf32>, vector<256x128xf32>, vector<16x128xf32> -> vector<16x128xf32>
    %c0_65 = arith.constant 0 : index
    %c0_66 = arith.constant 0 : index
    %142 = vector.load %arg16[%c0_65, %c0_66] : memref<1x128xf32, #tpu.memory_space<vmem>>, vector<1x128xf32>
    %143 = vector.broadcast %142 : vector<1x128xf32> to vector<16x128xf32>
    %144 = arith.addf %141, %143 : vector<16x128xf32>
    %145 = arith.addf %1, %144 : vector<16x128xf32>
    %c0_67 = arith.constant 0 : index
    %c0_68 = arith.constant 0 : index
    %146 = vector.load %arg17[%c0_67, %c0_68] : memref<1x128xf32, #tpu.memory_space<vmem>>, vector<1x128xf32>
    %c0_69 = arith.constant 0 : index
    %c0_70 = arith.constant 0 : index
    %147 = vector.load %arg18[%c0_69, %c0_70] : memref<1x128xf32, #tpu.memory_space<vmem>>, vector<1x128xf32>
    %cst_71 = arith.constant dense<0.000000e+00> : vector<16xf32>
    %148 = vector.multi_reduction <add>, %145, %cst_71 [1] : vector<16x128xf32> to vector<16xf32>
    %149 = vector.shape_cast %148 : vector<16xf32> to vector<16x1xf32>
    %cst_72 = arith.constant 1.280000e+02 : f32
    %150 = vector.broadcast %cst_72 : f32 to vector<16x1xf32>
    %151 = arith.divf %149, %150 : vector<16x1xf32>
    %152 = vector.broadcast %151 : vector<16x1xf32> to vector<16x128xf32>
    %153 = arith.subf %145, %152 : vector<16x128xf32>
    %154 = arith.mulf %153, %153 : vector<16x128xf32>
    %cst_73 = arith.constant dense<0.000000e+00> : vector<16xf32>
    %155 = vector.multi_reduction <add>, %154, %cst_73 [1] : vector<16x128xf32> to vector<16xf32>
    %156 = vector.shape_cast %155 : vector<16xf32> to vector<16x1xf32>
    %cst_74 = arith.constant 1.280000e+02 : f32
    %157 = vector.broadcast %cst_74 : f32 to vector<16x1xf32>
    %158 = arith.divf %156, %157 : vector<16x1xf32>
    %159 = vector.broadcast %151 : vector<16x1xf32> to vector<16x128xf32>
    %160 = arith.subf %145, %159 : vector<16x128xf32>
    %cst_75 = arith.constant 9.99999974E-6 : f32
    %161 = vector.broadcast %cst_75 : f32 to vector<16x1xf32>
    %162 = arith.addf %158, %161 : vector<16x1xf32>
    %163 = math.rsqrt %162 : vector<16x1xf32>
    %164 = vector.broadcast %163 : vector<16x1xf32> to vector<16x128xf32>
    %165 = arith.mulf %160, %164 : vector<16x128xf32>
    %166 = vector.broadcast %146 : vector<1x128xf32> to vector<16x128xf32>
    %167 = arith.mulf %165, %166 : vector<16x128xf32>
    %168 = vector.broadcast %147 : vector<1x128xf32> to vector<16x128xf32>
    %169 = arith.addf %167, %168 : vector<16x128xf32>
    %c0_76 = arith.constant 0 : index
    %c0_77 = arith.constant 0 : index
    %c0_78 = arith.constant 0 : index
    %170 = vector.load %arg19[%c0_76, %c0_77, %c0_78] : memref<1x16x128xf32, #tpu.memory_space<vmem>>, vector<1x16x128xf32>
    %171 = vector.shape_cast %170 : vector<1x16x128xf32> to vector<16x128xf32>
    %172 = vector.shape_cast %169 : vector<16x128xf32> to vector<1x16x128xf32>
    tpu.vector_store %arg19[%c0_76, %c0_77, %c0_78], %172 {strides = array<i32>} : memref<1x16x128xf32, #tpu.memory_space<vmem>>, vector<1x16x128xf32>,
    return
  }
  func.func @transform_0(%arg0: i32) -> (i32, i32, i32) {
    %c0_i32 = arith.constant 0 : i32
    %c0_i32_0 = arith.constant 0 : i32
    %c0_i32_1 = arith.constant 0 : i32
    return %arg0, %c0_i32, %c0_i32_0 : i32, i32, i32
  }
  func.func @transform_1(%arg0: i32) -> (i32, i32) {
    %c0_i32 = arith.constant 0 : i32
    %c0_i32_0 = arith.constant 0 : i32
    %c0_i32_1 = arith.constant 0 : i32
    return %c0_i32, %c0_i32_0 : i32, i32
  }
  func.func @transform_2(%arg0: i32) -> (i32, i32) {
    %c0_i32 = arith.constant 0 : i32
    %c0_i32_0 = arith.constant 0 : i32
    %c0_i32_1 = arith.constant 0 : i32
    return %c0_i32, %c0_i32_0 : i32, i32
  }
  func.func @transform_3(%arg0: i32) -> (i32, i32) {
    %c0_i32 = arith.constant 0 : i32
    %c0_i32_0 = arith.constant 0 : i32
    %c0_i32_1 = arith.constant 0 : i32
    return %c0_i32, %c0_i32_0 : i32, i32
  }
  func.func @transform_4(%arg0: i32) -> (i32, i32) {
    %c0_i32 = arith.constant 0 : i32
    %c0_i32_0 = arith.constant 0 : i32
    %c0_i32_1 = arith.constant 0 : i32
    return %c0_i32, %c0_i32_0 : i32, i32
  }
  func.func @transform_5(%arg0: i32) -> (i32, i32) {
    %c0_i32 = arith.constant 0 : i32
    %c0_i32_0 = arith.constant 0 : i32
    %c0_i32_1 = arith.constant 0 : i32
    return %c0_i32, %c0_i32_0 : i32, i32
  }
  func.func @transform_6(%arg0: i32) -> (i32, i32) {
    %c0_i32 = arith.constant 0 : i32
    %c0_i32_0 = arith.constant 0 : i32
    %c0_i32_1 = arith.constant 0 : i32
    return %c0_i32, %c0_i32_0 : i32, i32
  }
  func.func @transform_7(%arg0: i32) -> (i32, i32) {
    %c0_i32 = arith.constant 0 : i32
    %c0_i32_0 = arith.constant 0 : i32
    %c0_i32_1 = arith.constant 0 : i32
    return %c0_i32, %c0_i32_0 : i32, i32
  }
  func.func @transform_8(%arg0: i32) -> (i32, i32) {
    %c0_i32 = arith.constant 0 : i32
    %c0_i32_0 = arith.constant 0 : i32
    %c0_i32_1 = arith.constant 0 : i32
    return %c0_i32, %c0_i32_0 : i32, i32
  }
  func.func @transform_9(%arg0: i32) -> (i32, i32) {
    %c0_i32 = arith.constant 0 : i32
    %c0_i32_0 = arith.constant 0 : i32
    %c0_i32_1 = arith.constant 0 : i32
    return %c0_i32, %c0_i32_0 : i32, i32
  }
  func.func @transform_10(%arg0: i32) -> (i32, i32) {
    %c0_i32 = arith.constant 0 : i32
    %c0_i32_0 = arith.constant 0 : i32
    %c0_i32_1 = arith.constant 0 : i32
    return %c0_i32, %c0_i32_0 : i32, i32
  }
  func.func @transform_11(%arg0: i32) -> (i32, i32) {
    %c0_i32 = arith.constant 0 : i32
    %c0_i32_0 = arith.constant 0 : i32
    %c0_i32_1 = arith.constant 0 : i32
    return %c0_i32, %c0_i32_0 : i32, i32
  }
  func.func @transform_12(%arg0: i32) -> (i32, i32) {
    %c0_i32 = arith.constant 0 : i32
    %c0_i32_0 = arith.constant 0 : i32
    %c0_i32_1 = arith.constant 0 : i32
    return %c0_i32, %c0_i32_0 : i32, i32
  }
  func.func @transform_13(%arg0: i32) -> (i32, i32) {
    %c0_i32 = arith.constant 0 : i32
    %c0_i32_0 = arith.constant 0 : i32
    %c0_i32_1 = arith.constant 0 : i32
    return %c0_i32, %c0_i32_0 : i32, i32
  }
  func.func @transform_14(%arg0: i32) -> (i32, i32) {
    %c0_i32 = arith.constant 0 : i32
    %c0_i32_0 = arith.constant 0 : i32
    %c0_i32_1 = arith.constant 0 : i32
    return %c0_i32, %c0_i32_0 : i32, i32
  }
  func.func @transform_15(%arg0: i32) -> (i32, i32) {
    %c0_i32 = arith.constant 0 : i32
    %c0_i32_0 = arith.constant 0 : i32
    %c0_i32_1 = arith.constant 0 : i32
    return %c0_i32, %c0_i32_0 : i32, i32
  }
  func.func @transform_16(%arg0: i32) -> (i32, i32) {
    %c0_i32 = arith.constant 0 : i32
    %c0_i32_0 = arith.constant 0 : i32
    %c0_i32_1 = arith.constant 0 : i32
    return %c0_i32, %c0_i32_0 : i32, i32
  }
  func.func @transform_17(%arg0: i32) -> (i32, i32) {
    %c0_i32 = arith.constant 0 : i32
    %c0_i32_0 = arith.constant 0 : i32
    %c0_i32_1 = arith.constant 0 : i32
    return %c0_i32, %c0_i32_0 : i32, i32
  }
  func.func @transform_18(%arg0: i32) -> (i32, i32, i32) {
    %c0_i32 = arith.constant 0 : i32
    %c0_i32_0 = arith.constant 0 : i32
    %c0_i32_1 = arith.constant 0 : i32
    return %arg0, %c0_i32, %c0_i32_0 : i32, i32, i32
  }
}

module attributes {stable_mosaic.version = 11 : i64} {
  func.func @_tsmlp_kernel(%arg0: i32, %arg1: memref<1x16x128xf32, #tpu.memory_space<vmem>>, %arg2: memref<1x128xf32, #tpu.memory_space<vmem>>, %arg3: memref<1x128xf32, #tpu.memory_space<vmem>>, %arg4: memref<128x128xf32, #tpu.memory_space<vmem>>, %arg5: memref<128x128xf32, #tpu.memory_space<vmem>>, %arg6: memref<128x128xf32, #tpu.memory_space<vmem>>, %arg7: memref<128x256xf32, #tpu.memory_space<vmem>>, %arg8: memref<1x256xf32, #tpu.memory_space<vmem>>, %arg9: memref<128x256xf32, #tpu.memory_space<vmem>>, %arg10: memref<1x256xf32, #tpu.memory_space<vmem>>, %arg11: memref<128x256xf32, #tpu.memory_space<vmem>>, %arg12: memref<1x256xf32, #tpu.memory_space<vmem>>, %arg13: memref<1x256xf32, #tpu.memory_space<vmem>>, %arg14: memref<1x256xf32, #tpu.memory_space<vmem>>, %arg15: memref<256x128xf32, #tpu.memory_space<vmem>>, %arg16: memref<1x128xf32, #tpu.memory_space<vmem>>, %arg17: memref<1x128xf32, #tpu.memory_space<vmem>>, %arg18: memref<1x128xf32, #tpu.memory_space<vmem>>, %arg19: memref<1x16x128xf32, #tpu.memory_space<vmem>>) attributes {dimension_semantics = [#tpu.dimension_semantics<parallel>], iteration_bounds = array<i64: 2>, scalar_prefetch = 0 : i64, scratch_operands = 0 : i64, tpu.core_type = #tpu.core_type<tc>, window_params = [{transform_indices = @transform_0, window_bounds = array<i64: 1, 16, 128>}, {pipeline_mode = #tpu.pipeline_mode<synchronous>, transform_indices = @transform_1, window_bounds = array<i64: 1, 128>}, {pipeline_mode = #tpu.pipeline_mode<synchronous>, transform_indices = @transform_2, window_bounds = array<i64: 1, 128>}, {pipeline_mode = #tpu.pipeline_mode<synchronous>, transform_indices = @transform_3, window_bounds = array<i64: 128, 128>}, {pipeline_mode = #tpu.pipeline_mode<synchronous>, transform_indices = @transform_4, window_bounds = array<i64: 128, 128>}, {pipeline_mode = #tpu.pipeline_mode<synchronous>, transform_indices = @transform_5, window_bounds = array<i64: 128, 128>}, {pipeline_mode = #tpu.pipeline_mode<synchronous>, transform_indices = @transform_6, window_bounds = array<i64: 128, 256>}, {pipeline_mode = #tpu.pipeline_mode<synchronous>, transform_indices = @transform_7, window_bounds = array<i64: 1, 256>}, {pipeline_mode = #tpu.pipeline_mode<synchronous>, transform_indices = @transform_8, window_bounds = array<i64: 128, 256>}, {pipeline_mode = #tpu.pipeline_mode<synchronous>, transform_indices = @transform_9, window_bounds = array<i64: 1, 256>}, {pipeline_mode = #tpu.pipeline_mode<synchronous>, transform_indices = @transform_10, window_bounds = array<i64: 128, 256>}, {pipeline_mode = #tpu.pipeline_mode<synchronous>, transform_indices = @transform_11, window_bounds = array<i64: 1, 256>}, {pipeline_mode = #tpu.pipeline_mode<synchronous>, transform_indices = @transform_12, window_bounds = array<i64: 1, 256>}, {pipeline_mode = #tpu.pipeline_mode<synchronous>, transform_indices = @transform_13, window_bounds = array<i64: 1, 256>}, {pipeline_mode = #tpu.pipeline_mode<synchronous>, transform_indices = @transform_14, window_bounds = array<i64: 256, 128>}, {pipeline_mode = #tpu.pipeline_mode<synchronous>, transform_indices = @transform_15, window_bounds = array<i64: 1, 128>}, {pipeline_mode = #tpu.pipeline_mode<synchronous>, transform_indices = @transform_16, window_bounds = array<i64: 1, 128>}, {pipeline_mode = #tpu.pipeline_mode<synchronous>, transform_indices = @transform_17, window_bounds = array<i64: 1, 128>}, {transform_indices = @transform_18, window_bounds = array<i64: 1, 16, 128>}]} {
    %c0 = arith.constant 0 : index
    %c0_0 = arith.constant 0 : index
    %c0_1 = arith.constant 0 : index
    %0 = vector.load %arg1[%c0, %c0_0, %c0_1] : memref<1x16x128xf32, #tpu.memory_space<vmem>>, vector<1x16x128xf32>
    %1 = vector.shape_cast %0 : vector<1x16x128xf32> to vector<16x128xf32>
    %c0_2 = arith.constant 0 : index
    %c0_3 = arith.constant 0 : index
    %2 = vector.load %arg2[%c0_2, %c0_3] : memref<1x128xf32, #tpu.memory_space<vmem>>, vector<1x128xf32>
    %c0_4 = arith.constant 0 : index
    %c0_5 = arith.constant 0 : index
    %3 = vector.load %arg3[%c0_4, %c0_5] : memref<1x128xf32, #tpu.memory_space<vmem>>, vector<1x128xf32>
    %cst = arith.constant dense<0.000000e+00> : vector<16xf32>
    %4 = vector.multi_reduction <add>, %1, %cst [1] : vector<16x128xf32> to vector<16xf32>
    %5 = vector.shape_cast %4 : vector<16xf32> to vector<16x1xf32>
    %cst_6 = arith.constant 1.280000e+02 : f32
    %6 = vector.broadcast %cst_6 : f32 to vector<16x1xf32>
    %7 = arith.divf %5, %6 : vector<16x1xf32>
    %8 = vector.broadcast %7 : vector<16x1xf32> to vector<16x128xf32>
    %9 = arith.subf %1, %8 : vector<16x128xf32>
    %10 = arith.mulf %9, %9 : vector<16x128xf32>
    %cst_7 = arith.constant dense<0.000000e+00> : vector<16xf32>
    %11 = vector.multi_reduction <add>, %10, %cst_7 [1] : vector<16x128xf32> to vector<16xf32>
    %12 = vector.shape_cast %11 : vector<16xf32> to vector<16x1xf32>
    %cst_8 = arith.constant 1.280000e+02 : f32
    %13 = vector.broadcast %cst_8 : f32 to vector<16x1xf32>
    %14 = arith.divf %12, %13 : vector<16x1xf32>
    %15 = vector.broadcast %7 : vector<16x1xf32> to vector<16x128xf32>
    %16 = arith.subf %1, %15 : vector<16x128xf32>
    %cst_9 = arith.constant 9.99999974E-6 : f32
    %17 = vector.broadcast %cst_9 : f32 to vector<16x1xf32>
    %18 = arith.addf %14, %17 : vector<16x1xf32>
    %19 = math.rsqrt %18 : vector<16x1xf32>
    %20 = vector.broadcast %19 : vector<16x1xf32> to vector<16x128xf32>
    %21 = arith.mulf %16, %20 : vector<16x128xf32>
    %22 = vector.broadcast %2 : vector<1x128xf32> to vector<16x128xf32>
    %23 = arith.mulf %21, %22 : vector<16x128xf32>
    %24 = vector.broadcast %3 : vector<1x128xf32> to vector<16x128xf32>
    %25 = arith.addf %23, %24 : vector<16x128xf32>
    %c0_10 = arith.constant 0 : index
    %c0_11 = arith.constant 0 : index
    %26 = vector.load %arg4[%c0_10, %c0_11] : memref<128x128xf32, #tpu.memory_space<vmem>>, vector<128x128xf32>
    %cst_12 = arith.constant dense<0.000000e+00> : vector<16x128xf32>
    %27 = tpu.matmul %25, %26, %cst_12 {dimension_numbers = #tpu.dot_dimension_numbers<[1], [0], [0], [1], [0, 0, 1, 1], [], []>} : vector<16x128xf32>, vector<128x128xf32>, vector<16x128xf32> -> vector<16x128xf32>
    %c0_13 = arith.constant 0 : index
    %c0_14 = arith.constant 0 : index
    %28 = vector.load %arg5[%c0_13, %c0_14] : memref<128x128xf32, #tpu.memory_space<vmem>>, vector<128x128xf32>
    %cst_15 = arith.constant dense<0.000000e+00> : vector<16x128xf32>
    %29 = tpu.matmul %25, %28, %cst_15 {dimension_numbers = #tpu.dot_dimension_numbers<[1], [0], [0], [1], [0, 0, 1, 1], [], []>} : vector<16x128xf32>, vector<128x128xf32>, vector<16x128xf32> -> vector<16x128xf32>
    %c0_16 = arith.constant 0 : index
    %c0_17 = arith.constant 0 : index
    %30 = vector.load %arg6[%c0_16, %c0_17] : memref<128x128xf32, #tpu.memory_space<vmem>>, vector<128x128xf32>
    %cst_18 = arith.constant dense<0.000000e+00> : vector<16x128xf32>
    %31 = tpu.matmul %25, %30, %cst_18 {dimension_numbers = #tpu.dot_dimension_numbers<[1], [0], [0], [1], [0, 0, 1, 1], [], []>} : vector<16x128xf32>, vector<128x128xf32>, vector<16x128xf32> -> vector<16x128xf32>
    %32 = tpu.transpose %29, [1, 0] : vector<16x128xf32> -> vector<128x16xf32>
    %cst_19 = arith.constant dense<0.000000e+00> : vector<16x16xf32>
    %33 = tpu.matmul %27, %32, %cst_19 {dimension_numbers = #tpu.dot_dimension_numbers<[1], [0], [0], [1], [0, 0, 1, 1], [], []>} : vector<16x128xf32>, vector<128x16xf32>, vector<16x16xf32> -> vector<16x16xf32>
    %cst_20 = arith.constant 0.0883883461 : f32
    %34 = vector.broadcast %cst_20 : f32 to vector<16x16xf32>
    %35 = arith.mulf %33, %34 : vector<16x16xf32>
    %36 = tpu.iota {dimensions = array<i32: 0>} : vector<16x16xi32>
    %37 = tpu.iota {dimensions = array<i32: 1>} : vector<16x16xi32>
    %38 = arith.cmpi sgt, %37, %36 : vector<16x16xi32>
    %cst_21 = arith.constant -3.40282347E+38 : f32
    %39 = vector.broadcast %cst_21 : f32 to vector<16x16xf32>
    %40 = arith.select %38, %39, %35 : vector<16x16xi1>, vector<16x16xf32>
    %cst_22 = arith.constant dense<0xFF800000> : vector<16xf32>
    %41 = vector.multi_reduction <maximumf>, %40, %cst_22 [1] : vector<16x16xf32> to vector<16xf32>
    %42 = vector.shape_cast %41 : vector<16xf32> to vector<16x1xf32>
    %43 = vector.broadcast %42 : vector<16x1xf32> to vector<16x16xf32>
    %44 = arith.subf %40, %43 : vector<16x16xf32>
    %45 = math.exp %44 : vector<16x16xf32>
    %cst_23 = arith.constant dense<0.000000e+00> : vector<16xf32>
    %46 = vector.multi_reduction <add>, %45, %cst_23 [1] : vector<16x16xf32> to vector<16xf32>
    %47 = vector.shape_cast %46 : vector<16xf32> to vector<16x1xf32>
    %48 = tpu.reciprocal %47 {approx = true} : vector<16x1xf32> -> vector<16x1xf32>
    %49 = vector.broadcast %48 : vector<16x1xf32> to vector<16x16xf32>
    %50 = arith.mulf %45, %49 : vector<16x16xf32>
    %cst_24 = arith.constant dense<0.000000e+00> : vector<16x128xf32>
    %51 = tpu.matmul %50, %31, %cst_24 {dimension_numbers = #tpu.dot_dimension_numbers<[1], [0], [0], [1], [0, 0, 1, 1], [], []>} : vector<16x16xf32>, vector<16x128xf32>, vector<16x128xf32> -> vector<16x128xf32>
    %c0_25 = arith.constant 0 : index
    %c0_26 = arith.constant 0 : index
    %52 = vector.load %arg7[%c0_25, %c0_26] : memref<128x256xf32, #tpu.memory_space<vmem>>, vector<128x256xf32>
    %cst_27 = arith.constant dense<0.000000e+00> : vector<16x256xf32>
    %53 = tpu.matmul %51, %52, %cst_27 {dimension_numbers = #tpu.dot_dimension_numbers<[1], [0], [0], [1], [0, 0, 1, 1], [], []>} : vector<16x128xf32>, vector<128x256xf32>, vector<16x256xf32> -> vector<16x256xf32>
    %c0_28 = arith.constant 0 : index
    %c0_29 = arith.constant 0 : index
    %54 = vector.load %arg8[%c0_28, %c0_29] : memref<1x256xf32, #tpu.memory_space<vmem>>, vector<1x256xf32>
    %55 = vector.broadcast %54 : vector<1x256xf32> to vector<16x256xf32>
    %56 = arith.addf %53, %55 : vector<16x256xf32>
    %c0_30 = arith.constant 0 : index
    %c0_31 = arith.constant 0 : index
    %57 = vector.load %arg9[%c0_30, %c0_31] : memref<128x256xf32, #tpu.memory_space<vmem>>, vector<128x256xf32>
    %cst_32 = arith.constant dense<0.000000e+00> : vector<16x256xf32>
    %58 = tpu.matmul %25, %57, %cst_32 {dimension_numbers = #tpu.dot_dimension_numbers<[1], [0], [0], [1], [0, 0, 1, 1], [], []>} : vector<16x128xf32>, vector<128x256xf32>, vector<16x256xf32> -> vector<16x256xf32>
    %c0_33 = arith.constant 0 : index
    %c0_34 = arith.constant 0 : index
    %59 = vector.load %arg10[%c0_33, %c0_34] : memref<1x256xf32, #tpu.memory_space<vmem>>, vector<1x256xf32>
    %60 = vector.broadcast %59 : vector<1x256xf32> to vector<16x256xf32>
    %61 = arith.addf %58, %60 : vector<16x256xf32>
    %cst_35 = arith.constant 5.000000e-01 : f32
    %62 = vector.broadcast %cst_35 : f32 to vector<16x256xf32>
    %63 = arith.mulf %62, %61 : vector<16x256xf32>
    %cst_36 = arith.constant 4.471500e-02 : f32
    %64 = vector.broadcast %cst_36 : f32 to vector<16x256xf32>
    %65 = arith.mulf %64, %61 : vector<16x256xf32>
    %66 = arith.mulf %65, %61 : vector<16x256xf32>
    %67 = arith.mulf %66, %61 : vector<16x256xf32>
    %68 = arith.addf %61, %67 : vector<16x256xf32>
    %cst_37 = arith.constant 0.797884583 : f32
    %69 = vector.broadcast %cst_37 : f32 to vector<16x256xf32>
    %70 = arith.mulf %69, %68 : vector<16x256xf32>
    %71 = math.tanh %70 : vector<16x256xf32>
    %cst_38 = arith.constant 1.000000e+00 : f32
    %72 = vector.broadcast %cst_38 : f32 to vector<16x256xf32>
    %73 = arith.addf %72, %71 : vector<16x256xf32>
    %74 = arith.mulf %63, %73 : vector<16x256xf32>
    %c0_39 = arith.constant 0 : index
    %c0_40 = arith.constant 0 : index
    %75 = vector.load %arg11[%c0_39, %c0_40] : memref<128x256xf32, #tpu.memory_space<vmem>>, vector<128x256xf32>
    %cst_41 = arith.constant dense<0.000000e+00> : vector<16x256xf32>
    %76 = tpu.matmul %25, %75, %cst_41 {dimension_numbers = #tpu.dot_dimension_numbers<[1], [0], [0], [1], [0, 0, 1, 1], [], []>} : vector<16x128xf32>, vector<128x256xf32>, vector<16x256xf32> -> vector<16x256xf32>
    %c0_42 = arith.constant 0 : index
    %c0_43 = arith.constant 0 : index
    %77 = vector.load %arg12[%c0_42, %c0_43] : memref<1x256xf32, #tpu.memory_space<vmem>>, vector<1x256xf32>
    %78 = vector.broadcast %77 : vector<1x256xf32> to vector<16x256xf32>
    %79 = arith.addf %76, %78 : vector<16x256xf32>
    %cst_44 = arith.constant 5.000000e-01 : f32
    %80 = vector.broadcast %cst_44 : f32 to vector<16x256xf32>
    %81 = arith.mulf %80, %79 : vector<16x256xf32>
    %cst_45 = arith.constant 4.471500e-02 : f32
    %82 = vector.broadcast %cst_45 : f32 to vector<16x256xf32>
    %83 = arith.mulf %82, %79 : vector<16x256xf32>
    %84 = arith.mulf %83, %79 : vector<16x256xf32>
    %85 = arith.mulf %84, %79 : vector<16x256xf32>
    %86 = arith.addf %79, %85 : vector<16x256xf32>
    %cst_46 = arith.constant 0.797884583 : f32
    %87 = vector.broadcast %cst_46 : f32 to vector<16x256xf32>
    %88 = arith.mulf %87, %86 : vector<16x256xf32>
    %89 = math.tanh %88 : vector<16x256xf32>
    %cst_47 = arith.constant 1.000000e+00 : f32
    %90 = vector.broadcast %cst_47 : f32 to vector<16x256xf32>
    %91 = arith.addf %90, %89 : vector<16x256xf32>
    %92 = arith.mulf %81, %91 : vector<16x256xf32>
    %c0_48 = arith.constant 0 : index
    %c0_49 = arith.constant 0 : index
    %93 = vector.load %arg13[%c0_48, %c0_49] : memref<1x256xf32, #tpu.memory_space<vmem>>, vector<1x256xf32>
    %c0_50 = arith.constant 0 : index
    %c0_51 = arith.constant 0 : index
    %94 = vector.load %arg14[%c0_50, %c0_51] : memref<1x256xf32, #tpu.memory_space<vmem>>, vector<1x256xf32>
    %cst_52 = arith.constant dense<0.000000e+00> : vector<16xf32>
    %95 = vector.multi_reduction <add>, %92, %cst_52 [1] : vector<16x256xf32> to vector<16xf32>
    %96 = vector.shape_cast %95 : vector<16xf32> to vector<16x1xf32>
    %cst_53 = arith.constant 2.560000e+02 : f32
    %97 = vector.broadcast %cst_53 : f32 to vector<16x1xf32>
    %98 = arith.divf %96, %97 : vector<16x1xf32>
    %99 = vector.broadcast %98 : vector<16x1xf32> to vector<16x256xf32>
    %100 = arith.subf %92, %99 : vector<16x256xf32>
    %101 = arith.mulf %100, %100 : vector<16x256xf32>
    %cst_54 = arith.constant dense<0.000000e+00> : vector<16xf32>
    %102 = vector.multi_reduction <add>, %101, %cst_54 [1] : vector<16x256xf32> to vector<16xf32>
    %103 = vector.shape_cast %102 : vector<16xf32> to vector<16x1xf32>
    %cst_55 = arith.constant 2.560000e+02 : f32
    %104 = vector.broadcast %cst_55 : f32 to vector<16x1xf32>
    %105 = arith.divf %103, %104 : vector<16x1xf32>
    %106 = vector.broadcast %98 : vector<16x1xf32> to vector<16x256xf32>
    %107 = arith.subf %92, %106 : vector<16x256xf32>
    %cst_56 = arith.constant 9.99999974E-6 : f32
    %108 = vector.broadcast %cst_56 : f32 to vector<16x1xf32>
    %109 = arith.addf %105, %108 : vector<16x1xf32>
    %110 = math.rsqrt %109 : vector<16x1xf32>
    %111 = vector.broadcast %110 : vector<16x1xf32> to vector<16x256xf32>
    %112 = arith.mulf %107, %111 : vector<16x256xf32>
    %113 = vector.broadcast %93 : vector<1x256xf32> to vector<16x256xf32>
    %114 = arith.mulf %112, %113 : vector<16x256xf32>
    %115 = vector.broadcast %94 : vector<1x256xf32> to vector<16x256xf32>
    %116 = arith.addf %114, %115 : vector<16x256xf32>
    %117 = vector.extract_strided_slice %116 {offsets = [0, 0], sizes = [16, 128], strides = [1, 1]} : vector<16x256xf32> to vector<16x128xf32>
    %118 = vector.extract_strided_slice %116 {offsets = [0, 128], sizes = [16, 128], strides = [1, 1]} : vector<16x256xf32> to vector<16x128xf32>
    %119 = tpu.iota {dimensions = array<i32: 0>} : vector<16x16xi32>
    %120 = tpu.iota {dimensions = array<i32: 1>} : vector<16x16xi32>
    %c1_i32 = arith.constant 1 : i32
    %121 = vector.broadcast %c1_i32 : i32 to vector<16x16xi32>
    %122 = arith.addi %120, %121 : vector<16x16xi32>
    %123 = arith.cmpi eq, %119, %122 : vector<16x16xi32>
    %124 = arith.extui %123 : vector<16x16xi1> to vector<16x16xi32>
    %125 = arith.sitofp %124 : vector<16x16xi32> to vector<16x16xf32>
    %cst_57 = arith.constant dense<0.000000e+00> : vector<16x128xf32>
    %126 = tpu.matmul %125, %117, %cst_57 {dimension_numbers = #tpu.dot_dimension_numbers<[1], [0], [0], [1], [0, 0, 1, 1], [], []>} : vector<16x16xf32>, vector<16x128xf32>, vector<16x128xf32> -> vector<16x128xf32>
    %c1_i32_58 = arith.constant 1 : i32
    %127 = vector.broadcast %c1_i32_58 : i32 to vector<16x16xi32>
    %128 = arith.addi %119, %127 : vector<16x16xi32>
    %129 = arith.cmpi eq, %120, %128 : vector<16x16xi32>
    %130 = arith.extui %129 : vector<16x16xi1> to vector<16x16xi32>
    %131 = arith.sitofp %130 : vector<16x16xi32> to vector<16x16xf32>
    %cst_59 = arith.constant dense<0.000000e+00> : vector<16x128xf32>
    %132 = tpu.matmul %131, %118, %cst_59 {dimension_numbers = #tpu.dot_dimension_numbers<[1], [0], [0], [1], [0, 0, 1, 1], [], []>} : vector<16x16xf32>, vector<16x128xf32>, vector<16x128xf32> -> vector<16x128xf32>
    %133 = tpu.concatenate %126, %132 in 1 : vector<16x128xf32>, vector<16x128xf32> -> vector<16x256xf32>
    %134 = arith.addf %133, %56 : vector<16x256xf32>
    %cst_60 = arith.constant 5.000000e-01 : f32
    %135 = vector.broadcast %cst_60 : f32 to vector<16x256xf32>
    %136 = arith.mulf %135, %134 : vector<16x256xf32>
    %cst_61 = arith.constant 4.471500e-02 : f32
    %137 = vector.broadcast %cst_61 : f32 to vector<16x256xf32>
    %138 = arith.mulf %137, %134 : vector<16x256xf32>
    %139 = arith.mulf %138, %134 : vector<16x256xf32>
    %140 = arith.mulf %139, %134 : vector<16x256xf32>
    %141 = arith.addf %134, %140 : vector<16x256xf32>
    %cst_62 = arith.constant 0.797884583 : f32
    %142 = vector.broadcast %cst_62 : f32 to vector<16x256xf32>
    %143 = arith.mulf %142, %141 : vector<16x256xf32>
    %144 = math.tanh %143 : vector<16x256xf32>
    %cst_63 = arith.constant 1.000000e+00 : f32
    %145 = vector.broadcast %cst_63 : f32 to vector<16x256xf32>
    %146 = arith.addf %145, %144 : vector<16x256xf32>
    %147 = arith.mulf %136, %146 : vector<16x256xf32>
    %148 = arith.mulf %147, %74 : vector<16x256xf32>
    %c0_64 = arith.constant 0 : index
    %c0_65 = arith.constant 0 : index
    %149 = vector.load %arg15[%c0_64, %c0_65] : memref<256x128xf32, #tpu.memory_space<vmem>>, vector<256x128xf32>
    %cst_66 = arith.constant dense<0.000000e+00> : vector<16x128xf32>
    %150 = tpu.matmul %148, %149, %cst_66 {dimension_numbers = #tpu.dot_dimension_numbers<[1], [0], [0], [1], [0, 0, 1, 1], [], []>} : vector<16x256xf32>, vector<256x128xf32>, vector<16x128xf32> -> vector<16x128xf32>
    %c0_67 = arith.constant 0 : index
    %c0_68 = arith.constant 0 : index
    %151 = vector.load %arg16[%c0_67, %c0_68] : memref<1x128xf32, #tpu.memory_space<vmem>>, vector<1x128xf32>
    %152 = vector.broadcast %151 : vector<1x128xf32> to vector<16x128xf32>
    %153 = arith.addf %150, %152 : vector<16x128xf32>
    %154 = arith.addf %1, %153 : vector<16x128xf32>
    %c0_69 = arith.constant 0 : index
    %c0_70 = arith.constant 0 : index
    %155 = vector.load %arg17[%c0_69, %c0_70] : memref<1x128xf32, #tpu.memory_space<vmem>>, vector<1x128xf32>
    %c0_71 = arith.constant 0 : index
    %c0_72 = arith.constant 0 : index
    %156 = vector.load %arg18[%c0_71, %c0_72] : memref<1x128xf32, #tpu.memory_space<vmem>>, vector<1x128xf32>
    %cst_73 = arith.constant dense<0.000000e+00> : vector<16xf32>
    %157 = vector.multi_reduction <add>, %154, %cst_73 [1] : vector<16x128xf32> to vector<16xf32>
    %158 = vector.shape_cast %157 : vector<16xf32> to vector<16x1xf32>
    %cst_74 = arith.constant 1.280000e+02 : f32
    %159 = vector.broadcast %cst_74 : f32 to vector<16x1xf32>
    %160 = arith.divf %158, %159 : vector<16x1xf32>
    %161 = vector.broadcast %160 : vector<16x1xf32> to vector<16x128xf32>
    %162 = arith.subf %154, %161 : vector<16x128xf32>
    %163 = arith.mulf %162, %162 : vector<16x128xf32>
    %cst_75 = arith.constant dense<0.000000e+00> : vector<16xf32>
    %164 = vector.multi_reduction <add>, %163, %cst_75 [1] : vector<16x128xf32> to vector<16xf32>
    %165 = vector.shape_cast %164 : vector<16xf32> to vector<16x1xf32>
    %cst_76 = arith.constant 1.280000e+02 : f32
    %166 = vector.broadcast %cst_76 : f32 to vector<16x1xf32>
    %167 = arith.divf %165, %166 : vector<16x1xf32>
    %168 = vector.broadcast %160 : vector<16x1xf32> to vector<16x128xf32>
    %169 = arith.subf %154, %168 : vector<16x128xf32>
    %cst_77 = arith.constant 9.99999974E-6 : f32
    %170 = vector.broadcast %cst_77 : f32 to vector<16x1xf32>
    %171 = arith.addf %167, %170 : vector<16x1xf32>
    %172 = math.rsqrt %171 : vector<16x1xf32>
    %173 = vector.broadcast %172 : vector<16x1xf32> to vector<16x128xf32>
    %174 = arith.mulf %169, %173 : vector<16x128xf32>
    %175 = vector.broadcast %155 : vector<1x128xf32> to vector<16x128xf32>
    %176 = arith.mulf %174, %175 : vector<16x128xf32>
    %177 = vector.broadcast %156 : vector<1x128xf32> to vector<16x128xf32>
    %178 = arith.addf %176, %177 : vector<16x128xf32>
    %c0_78 = arith.constant 0 : index
    %c0_79 = arith.constant 0 : index
    %c0_80 = arith.constant 0 : index
    %179 = vector.load %arg19[%c0_78, %c0_79, %c0_80] : memref<1x16x128xf32, #tpu.memory_space<vmem>>, vector<1x16x128xf32>
    %180 = vector.shape_cast %179 : vector<1x16x128xf32> to vector<16x128xf32>
    %181 = vector.shape_cast %178 : vector<16x128xf32> to vector<1x16x128xf32>
    tpu.vector_store %arg19[%c0_78, %c0_79, %c0_80], %181 {strides = array<i32>} : memref<1x16x128xf32, #tpu.memory_space<vmem>>, vector<1x16x128xf32>,
    return
  }
  func.func @transform_0(%arg0: i32) -> (i32, i32, i32) {
    %c0_i32 = arith.constant 0 : i32
    %c0_i32_0 = arith.constant 0 : i32
    %c0_i32_1 = arith.constant 0 : i32
    return %arg0, %c0_i32, %c0_i32_0 : i32, i32, i32
  }
  func.func @transform_1(%arg0: i32) -> (i32, i32) {
    %c0_i32 = arith.constant 0 : i32
    %c0_i32_0 = arith.constant 0 : i32
    %c0_i32_1 = arith.constant 0 : i32
    return %c0_i32, %c0_i32_0 : i32, i32
  }
  func.func @transform_2(%arg0: i32) -> (i32, i32) {
    %c0_i32 = arith.constant 0 : i32
    %c0_i32_0 = arith.constant 0 : i32
    %c0_i32_1 = arith.constant 0 : i32
    return %c0_i32, %c0_i32_0 : i32, i32
  }
  func.func @transform_3(%arg0: i32) -> (i32, i32) {
    %c0_i32 = arith.constant 0 : i32
    %c0_i32_0 = arith.constant 0 : i32
    %c0_i32_1 = arith.constant 0 : i32
    return %c0_i32, %c0_i32_0 : i32, i32
  }
  func.func @transform_4(%arg0: i32) -> (i32, i32) {
    %c0_i32 = arith.constant 0 : i32
    %c0_i32_0 = arith.constant 0 : i32
    %c0_i32_1 = arith.constant 0 : i32
    return %c0_i32, %c0_i32_0 : i32, i32
  }
  func.func @transform_5(%arg0: i32) -> (i32, i32) {
    %c0_i32 = arith.constant 0 : i32
    %c0_i32_0 = arith.constant 0 : i32
    %c0_i32_1 = arith.constant 0 : i32
    return %c0_i32, %c0_i32_0 : i32, i32
  }
  func.func @transform_6(%arg0: i32) -> (i32, i32) {
    %c0_i32 = arith.constant 0 : i32
    %c0_i32_0 = arith.constant 0 : i32
    %c0_i32_1 = arith.constant 0 : i32
    return %c0_i32, %c0_i32_0 : i32, i32
  }
  func.func @transform_7(%arg0: i32) -> (i32, i32) {
    %c0_i32 = arith.constant 0 : i32
    %c0_i32_0 = arith.constant 0 : i32
    %c0_i32_1 = arith.constant 0 : i32
    return %c0_i32, %c0_i32_0 : i32, i32
  }
  func.func @transform_8(%arg0: i32) -> (i32, i32) {
    %c0_i32 = arith.constant 0 : i32
    %c0_i32_0 = arith.constant 0 : i32
    %c0_i32_1 = arith.constant 0 : i32
    return %c0_i32, %c0_i32_0 : i32, i32
  }
  func.func @transform_9(%arg0: i32) -> (i32, i32) {
    %c0_i32 = arith.constant 0 : i32
    %c0_i32_0 = arith.constant 0 : i32
    %c0_i32_1 = arith.constant 0 : i32
    return %c0_i32, %c0_i32_0 : i32, i32
  }
  func.func @transform_10(%arg0: i32) -> (i32, i32) {
    %c0_i32 = arith.constant 0 : i32
    %c0_i32_0 = arith.constant 0 : i32
    %c0_i32_1 = arith.constant 0 : i32
    return %c0_i32, %c0_i32_0 : i32, i32
  }
  func.func @transform_11(%arg0: i32) -> (i32, i32) {
    %c0_i32 = arith.constant 0 : i32
    %c0_i32_0 = arith.constant 0 : i32
    %c0_i32_1 = arith.constant 0 : i32
    return %c0_i32, %c0_i32_0 : i32, i32
  }
  func.func @transform_12(%arg0: i32) -> (i32, i32) {
    %c0_i32 = arith.constant 0 : i32
    %c0_i32_0 = arith.constant 0 : i32
    %c0_i32_1 = arith.constant 0 : i32
    return %c0_i32, %c0_i32_0 : i32, i32
  }
  func.func @transform_13(%arg0: i32) -> (i32, i32) {
    %c0_i32 = arith.constant 0 : i32
    %c0_i32_0 = arith.constant 0 : i32
    %c0_i32_1 = arith.constant 0 : i32
    return %c0_i32, %c0_i32_0 : i32, i32
  }
  func.func @transform_14(%arg0: i32) -> (i32, i32) {
    %c0_i32 = arith.constant 0 : i32
    %c0_i32_0 = arith.constant 0 : i32
    %c0_i32_1 = arith.constant 0 : i32
    return %c0_i32, %c0_i32_0 : i32, i32
  }
  func.func @transform_15(%arg0: i32) -> (i32, i32) {
    %c0_i32 = arith.constant 0 : i32
    %c0_i32_0 = arith.constant 0 : i32
    %c0_i32_1 = arith.constant 0 : i32
    return %c0_i32, %c0_i32_0 : i32, i32
  }
  func.func @transform_16(%arg0: i32) -> (i32, i32) {
    %c0_i32 = arith.constant 0 : i32
    %c0_i32_0 = arith.constant 0 : i32
    %c0_i32_1 = arith.constant 0 : i32
    return %c0_i32, %c0_i32_0 : i32, i32
  }
  func.func @transform_17(%arg0: i32) -> (i32, i32) {
    %c0_i32 = arith.constant 0 : i32
    %c0_i32_0 = arith.constant 0 : i32
    %c0_i32_1 = arith.constant 0 : i32
    return %c0_i32, %c0_i32_0 : i32, i32
  }
  func.func @transform_18(%arg0: i32) -> (i32, i32, i32) {
    %c0_i32 = arith.constant 0 : i32
    %c0_i32_0 = arith.constant 0 : i32
    %c0_i32_1 = arith.constant 0 : i32
    return %arg0, %c0_i32, %c0_i32_0 : i32, i32, i32
  }
}

</mosaic_0001>

<llo_original>
// kernel: tpu_custom_call.1
$region0: #{tpu_custom_call.1}
  #allocation0 [shape = 'u32[]', space=smem, size = 0x4, offset = 0x4, fixed_abs, tag = 'smem constant byte address 0x4 - core index']
  #allocation1 [shape = 'u32[144,128]{1,0:T(1,128)}', space=vmem, size = 0x12000, scoped, tag = 'internal scratch']
  %s0 = inlined_call_operand.hbm [shape: f32[2,16,128], index: 0, kind: input, shape index: {}]
  %s1 = inlined_call_operand.hbm [shape: f32[1,128], index: 1, kind: input, shape index: {}]
  %s2 = inlined_call_operand.hbm [shape: f32[1,128], index: 2, kind: input, shape index: {}]
  %s3 = inlined_call_operand.hbm [shape: f32[128,128], index: 3, kind: input, shape index: {}]
  %s4 = inlined_call_operand.hbm [shape: f32[128,128], index: 4, kind: input, shape index: {}]
  %s5 = inlined_call_operand.hbm [shape: f32[128,128], index: 5, kind: input, shape index: {}]
  %s6 = inlined_call_operand.hbm [shape: f32[128,256], index: 6, kind: input, shape index: {}]
  %s7 = inlined_call_operand.vmem [shape: f32[1,256], index: 7, kind: input, shape index: {}]
  %s8 = inlined_call_operand.hbm [shape: f32[128,256], index: 8, kind: input, shape index: {}]
  %s9 = inlined_call_operand.vmem [shape: f32[1,256], index: 9, kind: input, shape index: {}]
  %s10 = inlined_call_operand.hbm [shape: f32[128,256], index: 10, kind: input, shape index: {}]
  %s11 = inlined_call_operand.vmem [shape: f32[1,256], index: 11, kind: input, shape index: {}]
  %s12 = inlined_call_operand.vmem [shape: f32[1,256], index: 12, kind: input, shape index: {}]
  %s13 = inlined_call_operand.vmem [shape: f32[1,256], index: 13, kind: input, shape index: {}]
  %s14 = inlined_call_operand.hbm [shape: f32[256,128], index: 14, kind: input, shape index: {}]
  %s15 = inlined_call_operand.vmem [shape: f32[1,128], index: 15, kind: input, shape index: {}]
  %s16 = inlined_call_operand.vmem [shape: f32[1,128], index: 16, kind: input, shape index: {}]
  %s17 = inlined_call_operand.vmem [shape: f32[1,128], index: 17, kind: input, shape index: {}]
  %s18 = inlined_call_operand.hbm [shape: f32[2,16,128], index: 18, kind: output, shape index: {}]
  %s19 = sld [smem:[#allocation0]]
  $region145: #{tpu_custom_call.1} parent=0
    _
  %s21 = ssub.s32 1, %s19
  %s22 = scalar_select 0, %s21, %s19
  $region1: #{tpu_custom_call.1} parent=0
    #allocation2 [shape = 'u8[16384]{0}', space=vmem, size = 0x4000, scoped, tag = 'input window, operand 0']
    #allocation3 [shape = 's32[2]{0}', space=sflag, size = 0x8, scoped, tag = 'scoped memory for tpu_custom_call.1']
    #allocation4 [shape = 's32[2]{0}', space=sflag, size = 0x8, scoped, tag = 'scoped memory for tpu_custom_call.1']
    #allocation5 [shape = 'u8[512]{0}', space=vmem, size = 0x400, scoped, tag = 'input window, operand 1, single buffered']
    #allocation6 [shape = 's32[1]{0}', space=sflag, size = 0x4, scoped, tag = 'scoped memory for tpu_custom_call.1']
    #allocation7 [shape = 'u8[512]{0}', space=vmem, size = 0x400, scoped, tag = 'input window, operand 2, single buffered']
    #allocation8 [shape = 'u8[65536]{0}', space=vmem, size = 0x10000, scoped, tag = 'input window, operand 3, single buffered']
    #allocation9 [shape = 's32[1]{0}', space=sflag, size = 0x4, scoped, tag = 'scoped memory for tpu_custom_call.1']
    #allocation10 [shape = 'u8[65536]{0}', space=vmem, size = 0x10000, scoped, tag = 'input window, operand 4, single buffered']
    #allocation11 [shape = 'u8[65536]{0}', space=vmem, size = 0x10000, scoped, tag = 'input window, operand 5, single buffered']
    #allocation12 [shape = 's32[1]{0}', space=sflag, size = 0x4, scoped, tag = 'scoped memory for tpu_custom_call.1']
    #allocation13 [shape = 'u8[131072]{0}', space=vmem, size = 0x20000, scoped, tag = 'input window, operand 6, single buffered']
    #allocation14 [shape = 'u8[131072]{0}', space=vmem, size = 0x20000, scoped, tag = 'input window, operand 8, single buffered']
    #allocation15 [shape = 's32[1]{0}', space=sflag, size = 0x4, scoped, tag = 'scoped memory for tpu_custom_call.1']
    #allocation16 [shape = 'u8[131072]{0}', space=vmem, size = 0x20000, scoped, tag = 'input window, operand 10, single buffered']
    #allocation17 [shape = 'u8[131072]{0}', space=vmem, size = 0x20000, scoped, tag = 'input window, operand 14, single buffered']
    #allocation18 [shape = 's32[1]{0}', space=sflag, size = 0x4, scoped, tag = 'scoped memory for tpu_custom_call.1']
    #allocation19 [shape = 'u8[16384]{0}', space=vmem, size = 0x4000, scoped, tag = 'output window, operand 0']
    %23 = vsyncpa [#allocation3], 0
    %s24 = scalar_lea.sflag [#allocation3], 1
    %25 = vsyncpa %s24, 0
    %26 = vsyncpa [#allocation6], 0
    %27 = vsyncpa [#allocation9], 0
    %28 = vsyncpa [#allocation12], 0
    %29 = vsyncpa [#allocation15], 0
    %30 = vsyncpa [#allocation18], 0
    %31 = vsyncpa [#allocation4], 0
    %s32 = scalar_lea.sflag [#allocation4], 1
    %33 = vsyncpa %s32, 0
    loop: start=0, step=1, limit=4
    $region2: #{tpu_custom_call.1} parent=1 // loop_pre_header
      _
    $region3: #{tpu_custom_call.1} parent=1 // loop_header
      %s35 = sphi 0, %s39
      %p36 = scmp.ge.s32.totalorder %s35, 4
      %s45 = sphi 0, %s47
      %s48 = sphi 0, %s45
      %s49 = sphi 0, %s48
      %s65 = sphi 0, %s49
      %s69 = sphi 0, %s69
      %s71 = sphi 0, %s69
      %s72 = sphi 0, %s71
      %s86 = sphi 0, %s72
      %s90 = sphi 0, %s90
      %s92 = sphi 0, %s90
      %s93 = sphi 0, %s92
      %s107 = sphi 0, %s93
      %s111 = sphi 0, %s111
      %s113 = sphi 0, %s111
      %s114 = sphi 0, %s113
      %s128 = sphi 0, %s114
      %s132 = sphi 0, %s132
      %s134 = sphi 0, %s132
      %s135 = sphi 0, %s134
      %s149 = sphi 0, %s135
      %s153 = sphi 0, %s153
      %s155 = sphi 0, %s153
      %s156 = sphi 0, %s155
      %s170 = sphi 0, %s156
      %s174 = sphi 0, %s174
      %s176 = sphi 0, %s174
      %s177 = sphi 0, %s176
      %s191 = sphi 0, %s177
      %s195 = sphi 0, %s195
      %s197 = sphi 0, %s195
      %s198 = sphi 0, %s197
      %s212 = sphi 0, %s198
      %s216 = sphi 0, %s216
      %s218 = sphi 0, %s216
      %s219 = sphi 0, %s218
      %s233 = sphi 0, %s219
      %s237 = sphi 0, %s237
      %s239 = sphi 0, %s237
      %s240 = sphi 0, %s239
      %s254 = sphi 0, %s240
      %s258 = sphi 0, %s258
      %s260 = sphi 0, %s258
      %s261 = sphi 0, %s260
      %s275 = sphi 0, %s261
      %s279 = sphi 0, %s279
      %s281 = sphi 0, %s279
      %s282 = sphi 0, %s281
      %s296 = sphi 0, %s282
      %s300 = sphi 0, %s300
      %s302 = sphi 0, %s300
      %s303 = sphi 0, %s302
      %s317 = sphi 0, %s303
      %s321 = sphi 0, %s321
      %s323 = sphi 0, %s321
      %s324 = sphi 0, %s323
      %s338 = sphi 0, %s324
      %s342 = sphi 0, %s342
      %s344 = sphi 0, %s342
      %s345 = sphi 0, %s344
      %s359 = sphi 0, %s345
      %s363 = sphi 0, %s363
      %s365 = sphi 0, %s363
      %s366 = sphi 0, %s365
      %s380 = sphi 0, %s366
      %s384 = sphi 0, %s384
      %s386 = sphi 0, %s384
      %s387 = sphi 0, %s386
      %s401 = sphi 0, %s387
      %s405 = sphi 0, %s405
      %s407 = sphi 0, %s405
      %s408 = sphi 0, %s407
      %s422 = sphi 0, %s408
      %s428 = sphi 0, %s430
      %s431 = sphi 0, %s428
      %s432 = sphi 0, %s431
      %s448 = sphi 0, %s432
    $region4: #{tpu_custom_call.1} parent=1 // loop_header_branch
      %38 = sbr.rel (%p36) target = $region8
    $region5: #{tpu_custom_call.1} parent=1 // loop_body
      %s40 = ssub.s32 %s35, 1
      %s41 = ssub.s32 %s35, 2
      %s42 = sadd.s32 %s35, 1
      %s43 = ssub.s32 %s35, %s42
      %p44 = scmp.eq.s32.totalorder %s43, 0
      %s46 = sadd.s32 %s45, 1
      %s47 = scalar_select %p44, %s45, %s46
      %p50 = pneg %p44
      %p51 = scmp.eq.s32.totalorder %s35, 1
      %p52 = por %p50, %p51
      %p53 = scmp.ne.s32.totalorder %s45, %s48
      %p54 = scmp.eq.s32.totalorder %s35, 0
      %p55 = por %p53, %p54
      %p56 = scmp.ne.s32.totalorder %s45, %s48
      %p57 = scmp.eq.s32.totalorder %s40, 1
      %p58 = por %p56, %p57
      %p59 = scmp.ne.s32.totalorder %s48, %s49
      %p60 = scmp.eq.s32.totalorder %s40, 0
      %p61 = por %p59, %p60
      %p62 = scmp.ne.s32.totalorder %s48, %s49
      %p63 = scmp.eq.s32.totalorder %s41, 1
      %p64 = por %p62, %p63
      %p66 = scmp.ne.s32.totalorder %s49, %s65
      %p67 = scmp.eq.s32.totalorder %s41, 0
      %p68 = por %p66, %p67
      %s70 = sadd.s32 %s69, 1
      %p73 = scmp.eq.s32.totalorder %s35, 1
      %p74 = scmp.ne.s32.totalorder %s69, %s71
      %p75 = scmp.eq.s32.totalorder %s35, 0
      %p76 = por %p74, %p75
      %p77 = scmp.ne.s32.totalorder %s69, %s71
      %p78 = scmp.eq.s32.totalorder %s40, 1
      %p79 = por %p77, %p78
      %p80 = scmp.ne.s32.totalorder %s71, %s72
      %p81 = scmp.eq.s32.totalorder %s40, 0
      %p82 = por %p80, %p81
      %p83 = scmp.ne.s32.totalorder %s71, %s72
      %p84 = scmp.eq.s32.totalorder %s41, 1
      %p85 = por %p83, %p84
      %p87 = scmp.ne.s32.totalorder %s72, %s86
      %p88 = scmp.eq.s32.totalorder %s41, 0
      %p89 = por %p87, %p88
      %s91 = sadd.s32 %s90, 1
      %p94 = scmp.eq.s32.totalorder %s35, 1
      %p95 = scmp.ne.s32.totalorder %s90, %s92
      %p96 = scmp.eq.s32.totalorder %s35, 0
      %p97 = por %p95, %p96
      %p98 = scmp.ne.s32.totalorder %s90, %s92
      %p99 = scmp.eq.s32.totalorder %s40, 1
      %p100 = por %p98, %p99
      %p101 = scmp.ne.s32.totalorder %s92, %s93
      %p102 = scmp.eq.s32.totalorder %s40, 0
      %p103 = por %p101, %p102
      %p104 = scmp.ne.s32.totalorder %s92, %s93
      %p105 = scmp.eq.s32.totalorder %s41, 1
      %p106 = por %p104, %p105
      %p108 = scmp.ne.s32.totalorder %s93, %s107
      %p109 = scmp.eq.s32.totalorder %s41, 0
      %p110 = por %p108, %p109
      %s112 = sadd.s32 %s111, 1
      %p115 = scmp.eq.s32.totalorder %s35, 1
      %p116 = scmp.ne.s32.totalorder %s111, %s113
      %p117 = scmp.eq.s32.totalorder %s35, 0
      %p118 = por %p116, %p117
      %p119 = scmp.ne.s32.totalorder %s111, %s113
      %p120 = scmp.eq.s32.totalorder %s40, 1
      %p121 = por %p119, %p120
      %p122 = scmp.ne.s32.totalorder %s113, %s114
      %p123 = scmp.eq.s32.totalorder %s40, 0
      %p124 = por %p122, %p123
      %p125 = scmp.ne.s32.totalorder %s113, %s114
      %p126 = scmp.eq.s32.totalorder %s41, 1
      %p127 = por %p125, %p126
      %p129 = scmp.ne.s32.totalorder %s114, %s128
      %p130 = scmp.eq.s32.totalorder %s41, 0
      %p131 = por %p129, %p130
      %s133 = sadd.s32 %s132, 1
      %p136 = scmp.eq.s32.totalorder %s35, 1
      %p137 = scmp.ne.s32.totalorder %s132, %s134
      %p138 = scmp.eq.s32.totalorder %s35, 0
      %p139 = por %p137, %p138
      %p140 = scmp.ne.s32.totalorder %s132, %s134
      %p141 = scmp.eq.s32.totalorder %s40, 1
      %p142 = por %p140, %p141
      %p143 = scmp.ne.s32.totalorder %s134, %s135
      %p144 = scmp.eq.s32.totalorder %s40, 0
      %p145 = por %p143, %p144
      %p146 = scmp.ne.s32.totalorder %s134, %s135
      %p147 = scmp.eq.s32.totalorder %s41, 1
      %p148 = por %p146, %p147
      %p150 = scmp.ne.s32.totalorder %s135, %s149
      %p151 = scmp.eq.s32.totalorder %s41, 0
      %p152 = por %p150, %p151
      %s154 = sadd.s32 %s153, 1
      %p157 = scmp.eq.s32.totalorder %s35, 1
      %p158 = scmp.ne.s32.totalorder %s153, %s155
      %p159 = scmp.eq.s32.totalorder %s35, 0
      %p160 = por %p158, %p159
      %p161 = scmp.ne.s32.totalorder %s153, %s155
      %p162 = scmp.eq.s32.totalorder %s40, 1
      %p163 = por %p161, %p162
      %p164 = scmp.ne.s32.totalorder %s155, %s156
      %p165 = scmp.eq.s32.totalorder %s40, 0
      %p166 = por %p164, %p165
      %p167 = scmp.ne.s32.totalorder %s155, %s156
      %p168 = scmp.eq.s32.totalorder %s41, 1
      %p169 = por %p167, %p168
      %p171 = scmp.ne.s32.totalorder %s156, %s170
      %p172 = scmp.eq.s32.totalorder %s41, 0
      %p173 = por %p171, %p172
      %s175 = sadd.s32 %s174, 1
      %p178 = scmp.eq.s32.totalorder %s35, 1
      %p179 = scmp.ne.s32.totalorder %s174, %s176
      %p180 = scmp.eq.s32.totalorder %s35, 0
      %p181 = por %p179, %p180
      %p182 = scmp.ne.s32.totalorder %s174, %s176
      %p183 = scmp.eq.s32.totalorder %s40, 1
      %p184 = por %p182, %p183
      %p185 = scmp.ne.s32.totalorder %s176, %s177
      %p186 = scmp.eq.s32.totalorder %s40, 0
      %p187 = por %p185, %p186
      %p188 = scmp.ne.s32.totalorder %s176, %s177
      %p189 = scmp.eq.s32.totalorder %s41, 1
      %p190 = por %p188, %p189
      %p192 = scmp.ne.s32.totalorder %s177, %s191
      %p193 = scmp.eq.s32.totalorder %s41, 0
      %p194 = por %p192, %p193
      %s196 = sadd.s32 %s195, 1
      %p199 = scmp.eq.s32.totalorder %s35, 1
      %p200 = scmp.ne.s32.totalorder %s195, %s197
      %p201 = scmp.eq.s32.totalorder %s35, 0
      %p202 = por %p200, %p201
      %p203 = scmp.ne.s32.totalorder %s195, %s197
      %p204 = scmp.eq.s32.totalorder %s40, 1
      %p205 = por %p203, %p204
      %p206 = scmp.ne.s32.totalorder %s197, %s198
      %p207 = scmp.eq.s32.totalorder %s40, 0
      %p208 = por %p206, %p207
      %p209 = scmp.ne.s32.totalorder %s197, %s198
      %p210 = scmp.eq.s32.totalorder %s41, 1
      %p211 = por %p209, %p210
      %p213 = scmp.ne.s32.totalorder %s198, %s212
      %p214 = scmp.eq.s32.totalorder %s41, 0
      %p215 = por %p213, %p214
      %s217 = sadd.s32 %s216, 1
      %p220 = scmp.eq.s32.totalorder %s35, 1
      %p221 = scmp.ne.s32.totalorder %s216, %s218
      %p222 = scmp.eq.s32.totalorder %s35, 0
      %p223 = por %p221, %p222
      %p224 = scmp.ne.s32.totalorder %s216, %s218
      %p225 = scmp.eq.s32.totalorder %s40, 1
      %p226 = por %p224, %p225
      %p227 = scmp.ne.s32.totalorder %s218, %s219
      %p228 = scmp.eq.s32.totalorder %s40, 0
      %p229 = por %p227, %p228
      %p230 = scmp.ne.s32.totalorder %s218, %s219
      %p231 = scmp.eq.s32.totalorder %s41, 1
      %p232 = por %p230, %p231
      %p234 = scmp.ne.s32.totalorder %s219, %s233
      %p235 = scmp.eq.s32.totalorder %s41, 0
      %p236 = por %p234, %p235
      %s238 = sadd.s32 %s237, 1
      %p241 = scmp.eq.s32.totalorder %s35, 1
      %p242 = scmp.ne.s32.totalorder %s237, %s239
      %p243 = scmp.eq.s32.totalorder %s35, 0
      %p244 = por %p242, %p243
      %p245 = scmp.ne.s32.totalorder %s237, %s239
      %p246 = scmp.eq.s32.totalorder %s40, 1
      %p247 = por %p245, %p246
      %p248 = scmp.ne.s32.totalorder %s239, %s240
      %p249 = scmp.eq.s32.totalorder %s40, 0
      %p250 = por %p248, %p249
      %p251 = scmp.ne.s32.totalorder %s239, %s240
      %p252 = scmp.eq.s32.totalorder %s41, 1
      %p253 = por %p251, %p252
      %p255 = scmp.ne.s32.totalorder %s240, %s254
      %p256 = scmp.eq.s32.totalorder %s41, 0
      %p257 = por %p255, %p256
      %s259 = sadd.s32 %s258, 1
      %p262 = scmp.eq.s32.totalorder %s35, 1
      %p263 = scmp.ne.s32.totalorder %s258, %s260
      %p264 = scmp.eq.s32.totalorder %s35, 0
      %p265 = por %p263, %p264
      %p266 = scmp.ne.s32.totalorder %s258, %s260
      %p267 = scmp.eq.s32.totalorder %s40, 1
      %p268 = por %p266, %p267
      %p269 = scmp.ne.s32.totalorder %s260, %s261
      %p270 = scmp.eq.s32.totalorder %s40, 0
      %p271 = por %p269, %p270
      %p272 = scmp.ne.s32.totalorder %s260, %s261
      %p273 = scmp.eq.s32.totalorder %s41, 1
      %p274 = por %p272, %p273
      %p276 = scmp.ne.s32.totalorder %s261, %s275
      %p277 = scmp.eq.s32.totalorder %s41, 0
      %p278 = por %p276, %p277
      %s280 = sadd.s32 %s279, 1
      %p283 = scmp.eq.s32.totalorder %s35, 1
      %p284 = scmp.ne.s32.totalorder %s279, %s281
      %p285 = scmp.eq.s32.totalorder %s35, 0
      %p286 = por %p284, %p285
      %p287 = scmp.ne.s32.totalorder %s279, %s281
      %p288 = scmp.eq.s32.totalorder %s40, 1
      %p289 = por %p287, %p288
      %p290 = scmp.ne.s32.totalorder %s281, %s282
      %p291 = scmp.eq.s32.totalorder %s40, 0
      %p292 = por %p290, %p291
      %p293 = scmp.ne.s32.totalorder %s281, %s282
      %p294 = scmp.eq.s32.totalorder %s41, 1
      %p295 = por %p293, %p294
      %p297 = scmp.ne.s32.totalorder %s282, %s296
      %p298 = scmp.eq.s32.totalorder %s41, 0
      %p299 = por %p297, %p298
      %s301 = sadd.s32 %s300, 1
      %p304 = scmp.eq.s32.totalorder %s35, 1
      %p305 = scmp.ne.s32.totalorder %s300, %s302
      %p306 = scmp.eq.s32.totalorder %s35, 0
      %p307 = por %p305, %p306
      %p308 = scmp.ne.s32.totalorder %s300, %s302
      %p309 = scmp.eq.s32.totalorder %s40, 1
      %p310 = por %p308, %p309
      %p311 = scmp.ne.s32.totalorder %s302, %s303
      %p312 = scmp.eq.s32.totalorder %s40, 0
      %p313 = por %p311, %p312
      %p314 = scmp.ne.s32.totalorder %s302, %s303
      %p315 = scmp.eq.s32.totalorder %s41, 1
      %p316 = por %p314, %p315
      %p318 = scmp.ne.s32.totalorder %s303, %s317
      %p319 = scmp.eq.s32.totalorder %s41, 0
      %p320 = por %p318, %p319
      %s322 = sadd.s32 %s321, 1
      %p325 = scmp.eq.s32.totalorder %s35, 1
      %p326 = scmp.ne.s32.totalorder %s321, %s323
      %p327 = scmp.eq.s32.totalorder %s35, 0
      %p328 = por %p326, %p327
      %p329 = scmp.ne.s32.totalorder %s321, %s323
      %p330 = scmp.eq.s32.totalorder %s40, 1
      %p331 = por %p329, %p330
      %p332 = scmp.ne.s32.totalorder %s323, %s324
      %p333 = scmp.eq.s32.totalorder %s40, 0
      %p334 = por %p332, %p333
      %p335 = scmp.ne.s32.totalorder %s323, %s324
      %p336 = scmp.eq.s32.totalorder %s41, 1
      %p337 = por %p335, %p336
      %p339 = scmp.ne.s32.totalorder %s324, %s338
      %p340 = scmp.eq.s32.totalorder %s41, 0
      %p341 = por %p339, %p340
      %s343 = sadd.s32 %s342, 1
      %p346 = scmp.eq.s32.totalorder %s35, 1
      %p347 = scmp.ne.s32.totalorder %s342, %s344
      %p348 = scmp.eq.s32.totalorder %s35, 0
      %p349 = por %p347, %p348
      %p350 = scmp.ne.s32.totalorder %s342, %s344
      %p351 = scmp.eq.s32.totalorder %s40, 1
      %p352 = por %p350, %p351
      %p353 = scmp.ne.s32.totalorder %s344, %s345
      %p354 = scmp.eq.s32.totalorder %s40, 0
      %p355 = por %p353, %p354
      %p356 = scmp.ne.s32.totalorder %s344, %s345
      %p357 = scmp.eq.s32.totalorder %s41, 1
      %p358 = por %p356, %p357
      %p360 = scmp.ne.s32.totalorder %s345, %s359
      %p361 = scmp.eq.s32.totalorder %s41, 0
      %p362 = por %p360, %p361
      %s364 = sadd.s32 %s363, 1
      %p367 = scmp.eq.s32.totalorder %s35, 1
      %p368 = scmp.ne.s32.totalorder %s363, %s365
      %p369 = scmp.eq.s32.totalorder %s35, 0
      %p370 = por %p368, %p369
      %p371 = scmp.ne.s32.totalorder %s363, %s365
      %p372 = scmp.eq.s32.totalorder %s40, 1
      %p373 = por %p371, %p372
      %p374 = scmp.ne.s32.totalorder %s365, %s366
      %p375 = scmp.eq.s32.totalorder %s40, 0
      %p376 = por %p374, %p375
      %p377 = scmp.ne.s32.totalorder %s365, %s366
      %p378 = scmp.eq.s32.totalorder %s41, 1
      %p379 = por %p377, %p378
      %p381 = scmp.ne.s32.totalorder %s366, %s380
      %p382 = scmp.eq.s32.totalorder %s41, 0
      %p383 = por %p381, %p382
      %s385 = sadd.s32 %s384, 1
      %p388 = scmp.eq.s32.totalorder %s35, 1
      %p389 = scmp.ne.s32.totalorder %s384, %s386
      %p390 = scmp.eq.s32.totalorder %s35, 0
      %p391 = por %p389, %p390
      %p392 = scmp.ne.s32.totalorder %s384, %s386
      %p393 = scmp.eq.s32.totalorder %s40, 1
      %p394 = por %p392, %p393
      %p395 = scmp.ne.s32.totalorder %s386, %s387
      %p396 = scmp.eq.s32.totalorder %s40, 0
      %p397 = por %p395, %p396
      %p398 = scmp.ne.s32.totalorder %s386, %s387
      %p399 = scmp.eq.s32.totalorder %s41, 1
      %p400 = por %p398, %p399
      %p402 = scmp.ne.s32.totalorder %s387, %s401
      %p403 = scmp.eq.s32.totalorder %s41, 0
      %p404 = por %p402, %p403
      %s406 = sadd.s32 %s405, 1
      %p409 = scmp.eq.s32.totalorder %s35, 1
      %p410 = scmp.ne.s32.totalorder %s405, %s407
      %p411 = scmp.eq.s32.totalorder %s35, 0
      %p412 = por %p410, %p411
      %p413 = scmp.ne.s32.totalorder %s405, %s407
      %p414 = scmp.eq.s32.totalorder %s40, 1
      %p415 = por %p413, %p414
      %p416 = scmp.ne.s32.totalorder %s407, %s408
      %p417 = scmp.eq.s32.totalorder %s40, 0
      %p418 = por %p416, %p417
      %p419 = scmp.ne.s32.totalorder %s407, %s408
      %p420 = scmp.eq.s32.totalorder %s41, 1
      %p421 = por %p419, %p420
      %p423 = scmp.ne.s32.totalorder %s408, %s422
      %p424 = scmp.eq.s32.totalorder %s41, 0
      %p425 = por %p423, %p424
      %s426 = ssub.s32 %s35, %s42
      %p427 = scmp.eq.s32.totalorder %s426, 0
      %s429 = sadd.s32 %s428, 1
      %s430 = scalar_select %p427, %s428, %s429
      %p433 = pneg %p427
      %p434 = scmp.eq.s32.totalorder %s35, 1
      %p435 = por %p433, %p434
      %p436 = scmp.ne.s32.totalorder %s428, %s431
      %p437 = scmp.eq.s32.totalorder %s35, 0
      %p438 = por %p436, %p437
      %p439 = scmp.ne.s32.totalorder %s428, %s431
      %p440 = scmp.eq.s32.totalorder %s40, 1
      %p441 = por %p439, %p440
      %p442 = scmp.ne.s32.totalorder %s431, %s432
      %p443 = scmp.eq.s32.totalorder %s40, 0
      %p444 = por %p442, %p443
      %p445 = scmp.ne.s32.totalorder %s431, %s432
      %p446 = scmp.eq.s32.totalorder %s41, 1
      %p447 = por %p445, %p446
      %p449 = scmp.ne.s32.totalorder %s432, %s448
      %p450 = scmp.eq.s32.totalorder %s41, 0
      %p451 = por %p449, %p450
      %p452 = scmp.le.s32.totalorder 1, %s35
      %p453 = scmp.lt.s32.totalorder %s35, 3
      %p454 = pnand %p452, %p453
      %p455 = pneg %p454
      // Predicated region
      $region9: #{tpu_custom_call.1} parent=5 // pred_check
        _
      $region10: #{tpu_custom_call.1} parent=5 // pred_check_branch
        %457 = sbr.rel (%p454) target = $region12
      $region11: #{tpu_custom_call.1} parent=5 // pred_region
        %s458 = ssub.s32 %s35, 1
        // Predicated region
        $region13: #{tpu_custom_call.1} parent=11 // pred_check
          %p459 = pneg %p82
        $region14: #{tpu_custom_call.1} parent=11 // pred_check_branch
          %461 = sbr.rel (%p459) target = $region16
        $region15: #{tpu_custom_call.1} parent=11 // pred_region
          %s463 = ssub.s32 16, 16
          %464 = vsyncadd [#allocation6], %s463
          %s466 = sshll.u32 [#allocation5], 4
          %s467 = int_to_ptr.vmem [resolvable:$true] %s466
          %469 = dma.hbm_to_vmem [thread:$0]  %s1, 16, %s467, [#allocation6]
        $region16: #{tpu_custom_call.1} parent=11 // pred_fallthru
          _
        // Predicated region
        $region17: #{tpu_custom_call.1} parent=11 // pred_check
          %p470 = pneg %p103
        $region18: #{tpu_custom_call.1} parent=11 // pred_check_branch
          %472 = sbr.rel (%p470) target = $region20
        $region19: #{tpu_custom_call.1} parent=11 // pred_region
          %s474 = ssub.s32 16, 16
          %475 = vsyncadd [#allocation6], %s474
          %s477 = sshll.u32 [#allocation7], 4
          %s478 = int_to_ptr.vmem [resolvable:$true] %s477
          %480 = dma.hbm_to_vmem [thread:$0]  %s2, 16, %s478, [#allocation6]
        $region20: #{tpu_custom_call.1} parent=11 // pred_fallthru
          _
        // Predicated region
        $region21: #{tpu_custom_call.1} parent=11 // pred_check
          %p481 = pneg %p124
        $region22: #{tpu_custom_call.1} parent=11 // pred_check_branch
          %483 = sbr.rel (%p481) target = $region24
        $region23: #{tpu_custom_call.1} parent=11 // pred_region
          %s485 = ssub.s32 2048, 2048
          %486 = vsyncadd [#allocation9], %s485
          %s487 = sshll.u32 [#allocation8], 4
          %s488 = int_to_ptr.vmem [resolvable:$true] %s487
          %493 = dma.hbm_to_vmem [thread:$0]  %s3, 2048, %s488, [#allocation9], 128, 128, 8
        $region24: #{tpu_custom_call.1} parent=11 // pred_fallthru
          _
        // Predicated region
        $region25: #{tpu_custom_call.1} parent=11 // pred_check
          %p494 = pneg %p145
        $region26: #{tpu_custom_call.1} parent=11 // pred_check_branch
          %496 = sbr.rel (%p494) target = $region28
        $region27: #{tpu_custom_call.1} parent=11 // pred_region
          %s498 = ssub.s32 2048, 2048
          %499 = vsyncadd [#allocation9], %s498
          %s500 = sshll.u32 [#allocation10], 4
          %s501 = int_to_ptr.vmem [resolvable:$true] %s500
          %506 = dma.hbm_to_vmem [thread:$0]  %s4, 2048, %s501, [#allocation9], 128, 128, 8
        $region28: #{tpu_custom_call.1} parent=11 // pred_fallthru
          _
        // Predicated region
        $region29: #{tpu_custom_call.1} parent=11 // pred_check
          %p507 = pneg %p166
        $region30: #{tpu_custom_call.1} parent=11 // pred_check_branch
          %509 = sbr.rel (%p507) target = $region32
        $region31: #{tpu_custom_call.1} parent=11 // pred_region
          %s511 = ssub.s32 2048, 2048
          %512 = vsyncadd [#allocation12], %s511
          %s513 = sshll.u32 [#allocation11], 4
          %s514 = int_to_ptr.vmem [resolvable:$true] %s513
          %519 = dma.hbm_to_vmem [thread:$0]  %s5, 2048, %s514, [#allocation12], 128, 128, 8
        $region32: #{tpu_custom_call.1} parent=11 // pred_fallthru
          _
        // Predicated region
        $region33: #{tpu_custom_call.1} parent=11 // pred_check
          %p520 = pneg %p187
        $region34: #{tpu_custom_call.1} parent=11 // pred_check_branch
          %522 = sbr.rel (%p520) target = $region36
        $region35: #{tpu_custom_call.1} parent=11 // pred_region
          %s524 = ssub.s32 4096, 4096
          %525 = vsyncadd [#allocation12], %s524
          %s526 = sshll.u32 [#allocation13], 4
          %s527 = int_to_ptr.vmem [resolvable:$true] %s526
          %532 = dma.hbm_to_vmem [thread:$0]  %s6, 4096, %s527, [#allocation12], 256, 256, 16
        $region36: #{tpu_custom_call.1} parent=11 // pred_fallthru
          _
        // Predicated region
        $region37: #{tpu_custom_call.1} parent=11 // pred_check
          %p533 = pneg %p208
        $region38: #{tpu_custom_call.1} parent=11 // pred_check_branch
          %535 = sbr.rel (%p533) target = $region40
        $region39: #{tpu_custom_call.1} parent=11 // pred_region
          _
        $region40: #{tpu_custom_call.1} parent=11 // pred_fallthru
          _
        // Predicated region
        $region41: #{tpu_custom_call.1} parent=11 // pred_check
          %p536 = pneg %p229
        $region42: #{tpu_custom_call.1} parent=11 // pred_check_branch
          %538 = sbr.rel (%p536) target = $region44
        $region43: #{tpu_custom_call.1} parent=11 // pred_region
          %s540 = ssub.s32 4096, 4096
          %541 = vsyncadd [#allocation15], %s540
          %s542 = sshll.u32 [#allocation14], 4
          %s543 = int_to_ptr.vmem [resolvable:$true] %s542
          %548 = dma.hbm_to_vmem [thread:$0]  %s8, 4096, %s543, [#allocation15], 256, 256, 16
        $region44: #{tpu_custom_call.1} parent=11 // pred_fallthru
          _
        // Predicated region
        $region45: #{tpu_custom_call.1} parent=11 // pred_check
          %p549 = pneg %p250
        $region46: #{tpu_custom_call.1} parent=11 // pred_check_branch
          %551 = sbr.rel (%p549) target = $region48
        $region47: #{tpu_custom_call.1} parent=11 // pred_region
          _
        $region48: #{tpu_custom_call.1} parent=11 // pred_fallthru
          _
        // Predicated region
        $region49: #{tpu_custom_call.1} parent=11 // pred_check
          %p552 = pneg %p271
        $region50: #{tpu_custom_call.1} parent=11 // pred_check_branch
          %554 = sbr.rel (%p552) target = $region52
        $region51: #{tpu_custom_call.1} parent=11 // pred_region
          %s556 = ssub.s32 4096, 4096
          %557 = vsyncadd [#allocation15], %s556
          %s558 = sshll.u32 [#allocation16], 4
          %s559 = int_to_ptr.vmem [resolvable:$true] %s558
          %564 = dma.hbm_to_vmem [thread:$0]  %s10, 4096, %s559, [#allocation15], 256, 256, 16
        $region52: #{tpu_custom_call.1} parent=11 // pred_fallthru
          _
        // Predicated region
        $region53: #{tpu_custom_call.1} parent=11 // pred_check
          %p565 = pneg %p292
        $region54: #{tpu_custom_call.1} parent=11 // pred_check_branch
          %567 = sbr.rel (%p565) target = $region56
        $region55: #{tpu_custom_call.1} parent=11 // pred_region
          _
        $region56: #{tpu_custom_call.1} parent=11 // pred_fallthru
          _
        // Predicated region
        $region57: #{tpu_custom_call.1} parent=11 // pred_check
          %p568 = pneg %p313
        $region58: #{tpu_custom_call.1} parent=11 // pred_check_branch
          %570 = sbr.rel (%p568) target = $region60
        $region59: #{tpu_custom_call.1} parent=11 // pred_region
          _
        $region60: #{tpu_custom_call.1} parent=11 // pred_fallthru
          _
        // Predicated region
        $region61: #{tpu_custom_call.1} parent=11 // pred_check
          %p571 = pneg %p334
        $region62: #{tpu_custom_call.1} parent=11 // pred_check_branch
          %573 = sbr.rel (%p571) target = $region64
        $region63: #{tpu_custom_call.1} parent=11 // pred_region
          _
        $region64: #{tpu_custom_call.1} parent=11 // pred_fallthru
          _
        // Predicated region
        $region65: #{tpu_custom_call.1} parent=11 // pred_check
          %p574 = pneg %p355
        $region66: #{tpu_custom_call.1} parent=11 // pred_check_branch
          %576 = sbr.rel (%p574) target = $region68
        $region67: #{tpu_custom_call.1} parent=11 // pred_region
          %s578 = ssub.s32 4096, 4096
          %579 = vsyncadd [#allocation18], %s578
          %s580 = sshll.u32 [#allocation17], 4
          %s581 = int_to_ptr.vmem [resolvable:$true] %s580
          %586 = dma.hbm_to_vmem [thread:$0]  %s14, 4096, %s581, [#allocation18], 128, 128, 8
        $region68: #{tpu_custom_call.1} parent=11 // pred_fallthru
          _
        // Predicated region
        $region69: #{tpu_custom_call.1} parent=11 // pred_check
          %p587 = pneg %p376
        $region70: #{tpu_custom_call.1} parent=11 // pred_check_branch
          %589 = sbr.rel (%p587) target = $region72
        $region71: #{tpu_custom_call.1} parent=11 // pred_region
          _
        $region72: #{tpu_custom_call.1} parent=11 // pred_fallthru
          _
        // Predicated region
        $region73: #{tpu_custom_call.1} parent=11 // pred_check
          %p590 = pneg %p397
        $region74: #{tpu_custom_call.1} parent=11 // pred_check_branch
          %592 = sbr.rel (%p590) target = $region76
        $region75: #{tpu_custom_call.1} parent=11 // pred_region
          _
        $region76: #{tpu_custom_call.1} parent=11 // pred_fallthru
          _
        // Predicated region
        $region77: #{tpu_custom_call.1} parent=11 // pred_check
          %p593 = pneg %p418
        $region78: #{tpu_custom_call.1} parent=11 // pred_check_branch
          %595 = sbr.rel (%p593) target = $region80
        $region79: #{tpu_custom_call.1} parent=11 // pred_region
          _
        $region80: #{tpu_custom_call.1} parent=11 // pred_fallthru
          _
      $region12: #{tpu_custom_call.1} parent=5 // pred_fallthru
        _
      %p596 = scmp.lt.s32.totalorder %s35, 2
      // Predicated region
      $region81: #{tpu_custom_call.1} parent=5 // pred_check
        %p597 = pneg %p596
      $region82: #{tpu_custom_call.1} parent=5 // pred_check_branch
        %599 = sbr.rel (%p597) target = $region84
      $region83: #{tpu_custom_call.1} parent=5 // pred_region
        // Predicated region
        $region85: #{tpu_custom_call.1} parent=83 // pred_check
          %p600 = pneg %p55
        $region86: #{tpu_custom_call.1} parent=83 // pred_check_branch
          %602 = sbr.rel (%p600) target = $region88
        $region87: #{tpu_custom_call.1} parent=83 // pred_region
          %s603 = sand.u32 %s45, 1
          %s604 = scalar_lea.sflag [#allocation3], %s603
          %s605 = sand.u32 %s45, 1
          %s606 = smul.addr %s605, 16
          %s607 = scalar_lea.vmem [#allocation2], %s606
          %s609 = ssub.s32 256, 256
          %610 = vsyncadd %s604, %s609
          %s611 = smul.addr %s35, 2
          %s612 = smul.addr %s611, 128
          %s613 = scalar_lea.hbm %s0, %s612
          %s614 = sshll.u32 %s607, 4
          %s615 = int_to_ptr.vmem [resolvable:$true] %s614
          %620 = dma.hbm_to_vmem [thread:$0]  %s613, 256, %s615, %s604, 128, 128, 8
        $region88: #{tpu_custom_call.1} parent=83 // pred_fallthru
          _
      $region84: #{tpu_custom_call.1} parent=5 // pred_fallthru
        _
      %p621 = scmp.le.s32.totalorder 1, %s35
      %p622 = scmp.lt.s32.totalorder %s35, 3
      %p623 = pnand %p621, %p622
      %p624 = pneg %p623
      // Predicated region
      $region89: #{tpu_custom_call.1} parent=5 // pred_check
        _
      $region90: #{tpu_custom_call.1} parent=5 // pred_check_branch
        %626 = sbr.rel (%p623) target = $region92
      $region91: #{tpu_custom_call.1} parent=5 // pred_region
        %s627 = ssub.s32 %s35, 1
        %s628 = sand.u32 %s48, 1
        %s629 = scalar_lea.sflag [#allocation3], %s628
        %s630 = sand.u32 %s48, 1
        %s631 = smul.addr %s630, 16
        %s632 = scalar_lea.vmem [#allocation2], %s631
        // Predicated region
        $region93: #{tpu_custom_call.1} parent=91 // pred_check
          %p633 = pneg %p61
        $region94: #{tpu_custom_call.1} parent=91 // pred_check_branch
          %635 = sbr.rel (%p633) target = $region96
        $region95: #{tpu_custom_call.1} parent=91 // pred_region
          %636 = dma.done %s629, 256
        $region96: #{tpu_custom_call.1} parent=91 // pred_fallthru
          _
        // Predicated region
        $region97: #{tpu_custom_call.1} parent=91 // pred_check
          %p637 = pneg %p82
        $region98: #{tpu_custom_call.1} parent=91 // pred_check_branch
          %639 = sbr.rel (%p637) target = $region100
        $region99: #{tpu_custom_call.1} parent=91 // pred_region
          %640 = dma.done [#allocation6], 16
        $region100: #{tpu_custom_call.1} parent=91 // pred_fallthru
          _
        // Predicated region
        $region101: #{tpu_custom_call.1} parent=91 // pred_check
          %p641 = pneg %p103
        $region102: #{tpu_custom_call.1} parent=91 // pred_check_branch
          %643 = sbr.rel (%p641) target = $region104
        $region103: #{tpu_custom_call.1} parent=91 // pred_region
          %644 = dma.done [#allocation6], 16
        $region104: #{tpu_custom_call.1} parent=91 // pred_fallthru
          _
        // Predicated region
        $region105: #{tpu_custom_call.1} parent=91 // pred_check
          %p645 = pneg %p124
        $region106: #{tpu_custom_call.1} parent=91 // pred_check_branch
          %647 = sbr.rel (%p645) target = $region108
        $region107: #{tpu_custom_call.1} parent=91 // pred_region
          %648 = dma.done [#allocation9], 2048
        $region108: #{tpu_custom_call.1} parent=91 // pred_fallthru
          _
        // Predicated region
        $region109: #{tpu_custom_call.1} parent=91 // pred_check
          %p649 = pneg %p145
        $region110: #{tpu_custom_call.1} parent=91 // pred_check_branch
          %651 = sbr.rel (%p649) target = $region112
        $region111: #{tpu_custom_call.1} parent=91 // pred_region
          %652 = dma.done [#allocation9], 2048
        $region112: #{tpu_custom_call.1} parent=91 // pred_fallthru
          _
        // Predicated region
        $region113: #{tpu_custom_call.1} parent=91 // pred_check
          %p653 = pneg %p166
        $region114: #{tpu_custom_call.1} parent=91 // pred_check_branch
          %655 = sbr.rel (%p653) target = $region116
        $region115: #{tpu_custom_call.1} parent=91 // pred_region
          %656 = dma.done [#allocation12], 2048
        $region116: #{tpu_custom_call.1} parent=91 // pred_fallthru
          _
        // Predicated region
        $region117: #{tpu_custom_call.1} parent=91 // pred_check
          %p657 = pneg %p187
        $region118: #{tpu_custom_call.1} parent=91 // pred_check_branch
          %659 = sbr.rel (%p657) target = $region120
        $region119: #{tpu_custom_call.1} parent=91 // pred_region
          %660 = dma.done [#allocation12], 4096
        $region120: #{tpu_custom_call.1} parent=91 // pred_fallthru
          _
        // Predicated region
        $region121: #{tpu_custom_call.1} parent=91 // pred_check
          %p661 = pneg %p229
        $region122: #{tpu_custom_call.1} parent=91 // pred_check_branch
          %663 = sbr.rel (%p661) target = $region124
        $region123: #{tpu_custom_call.1} parent=91 // pred_region
          %664 = dma.done [#allocation15], 4096
        $region124: #{tpu_custom_call.1} parent=91 // pred_fallthru
          _
        // Predicated region
        $region125: #{tpu_custom_call.1} parent=91 // pred_check
          %p665 = pneg %p271
        $region126: #{tpu_custom_call.1} parent=91 // pred_check_branch
          %667 = sbr.rel (%p665) target = $region128
        $region127: #{tpu_custom_call.1} parent=91 // pred_region
          %668 = dma.done [#allocation15], 4096
        $region128: #{tpu_custom_call.1} parent=91 // pred_fallthru
          _
        // Predicated region
        $region129: #{tpu_custom_call.1} parent=91 // pred_check
          %p669 = pneg %p355
        $region130: #{tpu_custom_call.1} parent=91 // pred_check_branch
          %671 = sbr.rel (%p669) target = $region132
        $region131: #{tpu_custom_call.1} parent=91 // pred_region
          %672 = dma.done [#allocation18], 4096
        $region132: #{tpu_custom_call.1} parent=91 // pred_fallthru
          _
        %s673 = sand.u32 %s48, 1
        %s674 = scalar_lea.sflag [#allocation3], %s673
        %s675 = sand.u32 %s48, 1
        %s676 = smul.addr %s675, 16
        %s677 = scalar_lea.vmem [#allocation2], %s676
        %p678 = pneg %p61
        %p679 = pneg %p58
        %p680 = pneg %p82
        %p681 = pneg %p79
        %p682 = pneg %p103
        %p683 = pneg %p100
        %p684 = pneg %p124
        %p685 = pneg %p121
        %p686 = pneg %p145
        %p687 = pneg %p142
        %p688 = pneg %p166
        %p689 = pneg %p163
        %p690 = pneg %p187
        %p691 = pneg %p184
        %p692 = pneg %p208
        %p693 = pneg %p205
        %p694 = pneg %p229
        %p695 = pneg %p226
        %p696 = pneg %p250
        %p697 = pneg %p247
        %p698 = pneg %p271
        %p699 = pneg %p268
        %p700 = pneg %p292
        %p701 = pneg %p289
        %p702 = pneg %p313
        %p703 = pneg %p310
        %p704 = pneg %p334
        %p705 = pneg %p331
        %p706 = pneg %p355
        %p707 = pneg %p352
        %p708 = pneg %p376
        %p709 = pneg %p373
        %p710 = pneg %p397
        %p711 = pneg %p394
        %p712 = pneg %p418
        %p713 = pneg %p415
        %p714 = pneg %p444
        %p715 = pneg %p441
        %s716 = sand.u32 %s431, 1
        %s717 = scalar_lea.sflag [#allocation4], %s716
        %s718 = sand.u32 %s431, 1
        %s719 = smul.addr %s718, 16
        %s720 = scalar_lea.vmem [#allocation19], %s719
        %v721 = vld [vmem:[%s632] sm:$0xff]
        %v722 = vld [vmem:[%s632 + $0x8] sm:$0xff]
        %v723 = vld [vmem:[#allocation5] sm:$0x1]
        %v724 = vld [vmem:[#allocation7] sm:$0x1]
        %725 = vadd.xlane.f32.xlu0 %v721
        %v726 = vpop.xlane.xlu0 %725
        %727 = vadd.xlane.f32.xlu0 %v722
        %v728 = vpop.xlane.xlu0 %727
        %v729 = vrcp.pop 128.0
        %v730 = vmul.f32 %v726, %v729
        %v731 = vmul.f32 %v728, %v729
        %v732 = vsub.f32 %v721, %v730
        %v733 = vsub.f32 %v722, %v731
        %v734 = vmul.f32 %v732, %v732
        %v735 = vmul.f32 %v733, %v733
        %736 = vadd.xlane.f32.xlu0 %v734
        %v737 = vpop.xlane.xlu0 %736
        %738 = vadd.xlane.f32.xlu0 %v735
        %v739 = vpop.xlane.xlu0 %738
        %v740 = vmul.f32 %v737, %v729
        %v741 = vmul.f32 %v739, %v729
        %v742 = vadd.f32 %v740, 1e-05
        %v743 = vadd.f32 %v741, 1e-05
        %v744 = vrsqrt.pop %v742
        %v745 = vrsqrt.pop %v743
        %v746 = vmul.f32 %v732, %v744
        %v747 = vmul.f32 %v733, %v745
        %v749 = vlaneseq
        %v750 = vshrl.u32 %v749, 7
        %v751 = vsub.s32 0, %v750
        %v752 = vrot.slane %v723, %v751
        %v754 = vmul.f32 %v746, %v752
        %v755 = vmul.f32 %v747, %v752
        %v757 = vlaneseq
        %v758 = vshrl.u32 %v757, 7
        %v759 = vsub.s32 0, %v758
        %v760 = vrot.slane %v724, %v759
        %v762 = vadd.f32 %v754, %v760
        %v763 = vadd.f32 %v755, %v760
        %v764 = vld [vmem:[#allocation8] sm:$0xff]
        %v765 = vld [vmem:[#allocation8 + $0x8] sm:$0xff]
        %v766 = vld [vmem:[#allocation8 + $0x10] sm:$0xff]
        %v767 = vld [vmem:[#allocation8 + $0x18] sm:$0xff]
        %v768 = vld [vmem:[#allocation8 + $0x20] sm:$0xff]
        %v769 = vld [vmem:[#allocation8 + $0x28] sm:$0xff]
        %v770 = vld [vmem:[#allocation8 + $0x30] sm:$0xff]
        %v771 = vld [vmem:[#allocation8 + $0x38] sm:$0xff]
        %v772 = vld [vmem:[#allocation8 + $0x40] sm:$0xff]
        %v773 = vld [vmem:[#allocation8 + $0x48] sm:$0xff]
        %v774 = vld [vmem:[#allocation8 + $0x50] sm:$0xff]
        %v775 = vld [vmem:[#allocation8 + $0x58] sm:$0xff]
        %v776 = vld [vmem:[#allocation8 + $0x60] sm:$0xff]
        %v777 = vld [vmem:[#allocation8 + $0x68] sm:$0xff]
        %v778 = vld [vmem:[#allocation8 + $0x70] sm:$0xff]
        %v779 = vld [vmem:[#allocation8 + $0x78] sm:$0xff]
        %780 = vmatprep.subr.mxu0 0.0
        %781 = vmatpush1.msra.mxu0 %v779
        %782 = vmatprep.subr.mxu0 0.0
        %783 = vmatpush1.msra.mxu0 %v778
        %784 = vmatprep.subr.mxu0 0.0
        %785 = vmatpush1.msra.mxu0 %v777
        %786 = vmatprep.subr.mxu0 0.0
        %787 = vmatpush1.msra.mxu0 %v776
        %788 = vmatprep.subr.mxu0 0.0
        %789 = vmatpush1.msra.mxu0 %v775
        %790 = vmatprep.subr.mxu0 0.0
        %791 = vmatpush1.msra.mxu0 %v774
        %792 = vmatprep.subr.mxu0 0.0
        %793 = vmatpush1.msra.mxu0 %v773
        %794 = vmatprep.subr.mxu0 0.0
        %795 = vmatpush1.msra.mxu0 %v772
        %796 = vmatprep.subr.mxu0 0.0
        %797 = vmatpush1.msra.mxu0 %v771
        %798 = vmatprep.subr.mxu0 0.0
        %799 = vmatpush1.msra.mxu0 %v770
        %800 = vmatprep.subr.mxu0 0.0
        %801 = vmatpush1.msra.mxu0 %v769
        %802 = vmatprep.subr.mxu0 0.0
        %803 = vmatpush1.msra.mxu0 %v768
        %804 = vmatprep.subr.mxu0 0.0
        %805 = vmatpush1.msra.mxu0 %v767
        %806 = vmatprep.subr.mxu0 0.0
        %807 = vmatpush1.msra.mxu0 %v766
        %808 = vmatprep.subr.mxu0 0.0
        %809 = vmatpush1.msra.mxu0 %v765
        %810 = vmatprep.subr.mxu0 0.0
        %811 = vmatpush1.msra.mxu0 %v764
        %812 = vmatprep.subr.mxu0 0.0
        %813 = vmatpush2.msra.mxu0 0.0
        %814 = vmatprep.subr.mxu0 0.0
        %815 = vmatpush2.msra.mxu0 0.0
        %816 = vmatprep.subr.mxu0 0.0
        %817 = vmatpush2.msra.mxu0 0.0
        %818 = vmatprep.subr.mxu0 0.0
        %819 = vmatpush2.msra.mxu0 0.0
        %820 = vmatprep.subr.mxu0 0.0
        %821 = vmatpush2.msra.mxu0 0.0
        %822 = vmatprep.subr.mxu0 0.0
        %823 = vmatpush2.msra.mxu0 0.0
        %824 = vmatprep.subr.mxu0 0.0
        %825 = vmatpush2.msra.mxu0 0.0
        %826 = vmatprep.subr.mxu0 0.0
        %827 = vmatpush2.msra.mxu0 0.0
        %828 = vmatprep.subr.mxu0 0.0
        %829 = vmatpush2.msra.mxu0 0.0
        %830 = vmatprep.subr.mxu0 0.0
        %831 = vmatpush2.msra.mxu0 0.0
        %832 = vmatprep.subr.mxu0 0.0
        %833 = vmatpush2.msra.mxu0 0.0
        %834 = vmatprep.subr.mxu0 0.0
        %835 = vmatpush2.msra.mxu0 0.0
        %836 = vmatprep.subr.mxu0 0.0
        %837 = vmatpush2.msra.mxu0 0.0
        %838 = vmatprep.subr.mxu0 0.0
        %839 = vmatpush2.msra.mxu0 0.0
        %840 = vmatprep.subr.mxu0 0.0
        %841 = vmatpush2.msra.mxu0 0.0
        %842 = vmatprep.subr.mxu0 0.0
        %843 = vmatpush2.msra.mxu0 0.0
        %844 = vmatprep.mubr.f32.mxu0 0.0
        %845 = vmatmul.mubr.f32.gmra.mxu0 %v762
        %v846 = vpop.f32.mrf.mxu0
        %v847 = vadd.f32 0.0, %v846
        %v848 = vpop.f32.mrf.mxu0
        %849 = vmatprep.mubr.f32.mxu0 0.0
        %850 = vmatmul.mubr.f32.gmra.mxu0 %v763
        %v851 = vpop.f32.mrf.mxu0
        %v852 = vadd.f32 0.0, %v851
        %v853 = vpop.f32.mrf.mxu0
        %854 = vdwg.mxu0
        %v855 = vld [vmem:[#allocation10] sm:$0xff]
        %v856 = vld [vmem:[#allocation10 + $0x8] sm:$0xff]
        %v857 = vld [vmem:[#allocation10 + $0x10] sm:$0xff]
        %v858 = vld [vmem:[#allocation10 + $0x18] sm:$0xff]
        %v859 = vld [vmem:[#allocation10 + $0x20] sm:$0xff]
        %v860 = vld [vmem:[#allocation10 + $0x28] sm:$0xff]
        %v861 = vld [vmem:[#allocation10 + $0x30] sm:$0xff]
        %v862 = vld [vmem:[#allocation10 + $0x38] sm:$0xff]
        %v863 = vld [vmem:[#allocation10 + $0x40] sm:$0xff]
        %v864 = vld [vmem:[#allocation10 + $0x48] sm:$0xff]
        %v865 = vld [vmem:[#allocation10 + $0x50] sm:$0xff]
        %v866 = vld [vmem:[#allocation10 + $0x58] sm:$0xff]
        %v867 = vld [vmem:[#allocation10 + $0x60] sm:$0xff]
        %v868 = vld [vmem:[#allocation10 + $0x68] sm:$0xff]
        %v869 = vld [vmem:[#allocation10 + $0x70] sm:$0xff]
        %v870 = vld [vmem:[#allocation10 + $0x78] sm:$0xff]
        %871 = vmatprep.subr.mxu0 0.0
        %872 = vmatpush1.msra.mxu0 %v870
        %873 = vmatprep.subr.mxu0 0.0
        %874 = vmatpush1.msra.mxu0 %v869
        %875 = vmatprep.subr.mxu0 0.0
        %876 = vmatpush1.msra.mxu0 %v868
        %877 = vmatprep.subr.mxu0 0.0
        %878 = vmatpush1.msra.mxu0 %v867
        %879 = vmatprep.subr.mxu0 0.0
        %880 = vmatpush1.msra.mxu0 %v866
        %881 = vmatprep.subr.mxu0 0.0
        %882 = vmatpush1.msra.mxu0 %v865
        %883 = vmatprep.subr.mxu0 0.0
        %884 = vmatpush1.msra.mxu0 %v864
        %885 = vmatprep.subr.mxu0 0.0
        %886 = vmatpush1.msra.mxu0 %v863
        %887 = vmatprep.subr.mxu0 0.0
        %888 = vmatpush1.msra.mxu0 %v862
        %889 = vmatprep.subr.mxu0 0.0
        %890 = vmatpush1.msra.mxu0 %v861
        %891 = vmatprep.subr.mxu0 0.0
        %892 = vmatpush1.msra.mxu0 %v860
        %893 = vmatprep.subr.mxu0 0.0
        %894 = vmatpush1.msra.mxu0 %v859
        %895 = vmatprep.subr.mxu0 0.0
        %896 = vmatpush1.msra.mxu0 %v858
        %897 = vmatprep.subr.mxu0 0.0
        %898 = vmatpush1.msra.mxu0 %v857
        %899 = vmatprep.subr.mxu0 0.0
        %900 = vmatpush1.msra.mxu0 %v856
        %901 = vmatprep.subr.mxu0 0.0
        %902 = vmatpush1.msra.mxu0 %v855
        %903 = vmatprep.subr.mxu0 0.0
        %904 = vmatpush2.msra.mxu0 0.0
        %905 = vmatprep.subr.mxu0 0.0
        %906 = vmatpush2.msra.mxu0 0.0
        %907 = vmatprep.subr.mxu0 0.0
        %908 = vmatpush2.msra.mxu0 0.0
        %909 = vmatprep.subr.mxu0 0.0
        %910 = vmatpush2.msra.mxu0 0.0
        %911 = vmatprep.subr.mxu0 0.0
        %912 = vmatpush2.msra.mxu0 0.0
        %913 = vmatprep.subr.mxu0 0.0
        %914 = vmatpush2.msra.mxu0 0.0
        %915 = vmatprep.subr.mxu0 0.0
        %916 = vmatpush2.msra.mxu0 0.0
        %917 = vmatprep.subr.mxu0 0.0
        %918 = vmatpush2.msra.mxu0 0.0
        %919 = vmatprep.subr.mxu0 0.0
        %920 = vmatpush2.msra.mxu0 0.0
        %921 = vmatprep.subr.mxu0 0.0
        %922 = vmatpush2.msra.mxu0 0.0
        %923 = vmatprep.subr.mxu0 0.0
        %924 = vmatpush2.msra.mxu0 0.0
        %925 = vmatprep.subr.mxu0 0.0
        %926 = vmatpush2.msra.mxu0 0.0
        %927 = vmatprep.subr.mxu0 0.0
        %928 = vmatpush2.msra.mxu0 0.0
        %929 = vmatprep.subr.mxu0 0.0
        %930 = vmatpush2.msra.mxu0 0.0
        %931 = vmatprep.subr.mxu0 0.0
        %932 = vmatpush2.msra.mxu0 0.0
        %933 = vmatprep.subr.mxu0 0.0
        %934 = vmatpush2.msra.mxu0 0.0
        %935 = vmatprep.mubr.f32.mxu0 0.0
        %936 = vmatmul.mubr.f32.gmra.mxu0 %v762
        %v937 = vpop.f32.mrf.mxu0
        %v938 = vadd.f32 0.0, %v937
        %v939 = vpop.f32.mrf.mxu0
        %940 = vmatprep.mubr.f32.mxu0 0.0
        %941 = vmatmul.mubr.f32.gmra.mxu0 %v763
        %v942 = vpop.f32.mrf.mxu0
        %v943 = vadd.f32 0.0, %v942
        %v944 = vpop.f32.mrf.mxu0
        %945 = vdwg.mxu0
        %v946 = vld [vmem:[#allocation11] sm:$0xff]
        %v947 = vld [vmem:[#allocation11 + $0x8] sm:$0xff]
        %v948 = vld [vmem:[#allocation11 + $0x10] sm:$0xff]
        %v949 = vld [vmem:[#allocation11 + $0x18] sm:$0xff]
        %v950 = vld [vmem:[#allocation11 + $0x20] sm:$0xff]
        %v951 = vld [vmem:[#allocation11 + $0x28] sm:$0xff]
        %v952 = vld [vmem:[#allocation11 + $0x30] sm:$0xff]
        %v953 = vld [vmem:[#allocation11 + $0x38] sm:$0xff]
        %v954 = vld [vmem:[#allocation11 + $0x40] sm:$0xff]
        %v955 = vld [vmem:[#allocation11 + $0x48] sm:$0xff]
        %v956 = vld [vmem:[#allocation11 + $0x50] sm:$0xff]
        %v957 = vld [vmem:[#allocation11 + $0x58] sm:$0xff]
        %v958 = vld [vmem:[#allocation11 + $0x60] sm:$0xff]
        %v959 = vld [vmem:[#allocation11 + $0x68] sm:$0xff]
        %v960 = vld [vmem:[#allocation11 + $0x70] sm:$0xff]
        %v961 = vld [vmem:[#allocation11 + $0x78] sm:$0xff]
        %962 = vmatprep.subr.mxu0 0.0
        %963 = vmatpush1.msra.mxu0 %v961
        %964 = vmatprep.subr.mxu0 0.0
        %965 = vmatpush1.msra.mxu0 %v960
        %966 = vmatprep.subr.mxu0 0.0
        %967 = vmatpush1.msra.mxu0 %v959
        %968 = vmatprep.subr.mxu0 0.0
        %969 = vmatpush1.msra.mxu0 %v958
        %970 = vmatprep.subr.mxu0 0.0
        %971 = vmatpush1.msra.mxu0 %v957
        %972 = vmatprep.subr.mxu0 0.0
        %973 = vmatpush1.msra.mxu0 %v956
        %974 = vmatprep.subr.mxu0 0.0
        %975 = vmatpush1.msra.mxu0 %v955
        %976 = vmatprep.subr.mxu0 0.0
        %977 = vmatpush1.msra.mxu0 %v954
        %978 = vmatprep.subr.mxu0 0.0
        %979 = vmatpush1.msra.mxu0 %v953
        %980 = vmatprep.subr.mxu0 0.0
        %981 = vmatpush1.msra.mxu0 %v952
        %982 = vmatprep.subr.mxu0 0.0
        %983 = vmatpush1.msra.mxu0 %v951
        %984 = vmatprep.subr.mxu0 0.0
        %985 = vmatpush1.msra.mxu0 %v950
        %986 = vmatprep.subr.mxu0 0.0
        %987 = vmatpush1.msra.mxu0 %v949
        %988 = vmatprep.subr.mxu0 0.0
        %989 = vmatpush1.msra.mxu0 %v948
        %990 = vmatprep.subr.mxu0 0.0
        %991 = vmatpush1.msra.mxu0 %v947
        %992 = vmatprep.subr.mxu0 0.0
        %993 = vmatpush1.msra.mxu0 %v946
        %994 = vmatprep.subr.mxu0 0.0
        %995 = vmatpush2.msra.mxu0 0.0
        %996 = vmatprep.subr.mxu0 0.0
        %997 = vmatpush2.msra.mxu0 0.0
        %998 = vmatprep.subr.mxu0 0.0
        %999 = vmatpush2.msra.mxu0 0.0
        %1000 = vmatprep.subr.mxu0 0.0
        %1001 = vmatpush2.msra.mxu0 0.0
        %1002 = vmatprep.subr.mxu0 0.0
        %1003 = vmatpush2.msra.mxu0 0.0
        %1004 = vmatprep.subr.mxu0 0.0
        %1005 = vmatpush2.msra.mxu0 0.0
        %1006 = vmatprep.subr.mxu0 0.0
        %1007 = vmatpush2.msra.mxu0 0.0
        %1008 = vmatprep.subr.mxu0 0.0
        %1009 = vmatpush2.msra.mxu0 0.0
        %1010 = vmatprep.subr.mxu0 0.0
        %1011 = vmatpush2.msra.mxu0 0.0
        %1012 = vmatprep.subr.mxu0 0.0
        %1013 = vmatpush2.msra.mxu0 0.0
        %1014 = vmatprep.subr.mxu0 0.0
        %1015 = vmatpush2.msra.mxu0 0.0
        %1016 = vmatprep.subr.mxu0 0.0
        %1017 = vmatpush2.msra.mxu0 0.0
        %1018 = vmatprep.subr.mxu0 0.0
        %1019 = vmatpush2.msra.mxu0 0.0
        %1020 = vmatprep.subr.mxu0 0.0
        %1021 = vmatpush2.msra.mxu0 0.0
        %1022 = vmatprep.subr.mxu0 0.0
        %1023 = vmatpush2.msra.mxu0 0.0
        %1024 = vmatprep.subr.mxu0 0.0
        %1025 = vmatpush2.msra.mxu0 0.0
        %1026 = vmatprep.mubr.f32.mxu0 0.0
        %1027 = vmatmul.mubr.f32.gmra.mxu0 %v762
        %v1028 = vpop.f32.mrf.mxu0
        %v1029 = vadd.f32 0.0, %v1028
        %v1030 = vpop.f32.mrf.mxu0
        %1031 = vmatprep.mubr.f32.mxu0 0.0
        %1032 = vmatmul.mubr.f32.gmra.mxu0 %v763
        %v1033 = vpop.f32.mrf.mxu0
        %v1034 = vadd.f32 0.0, %v1033
        %v1035 = vpop.f32.mrf.mxu0
        %1036 = vdwg.mxu0
        %1037 = vmatprep.subr.mxu0 0.0
        %1038 = vmatpush1.xpose.msra.mxu0 0.0
        %1039 = vmatprep.subr.mxu0 0.0
        %1040 = vmatpush1.xpose.msra.mxu0 0.0
        %1041 = vmatprep.subr.mxu0 0.0
        %1042 = vmatpush1.xpose.msra.mxu0 0.0
        %1043 = vmatprep.subr.mxu0 0.0
        %1044 = vmatpush1.xpose.msra.mxu0 0.0
        %1045 = vmatprep.subr.mxu0 0.0
        %1046 = vmatpush1.xpose.msra.mxu0 0.0
        %1047 = vmatprep.subr.mxu0 0.0
        %1048 = vmatpush1.xpose.msra.mxu0 0.0
        %1049 = vmatprep.subr.mxu0 0.0
        %1050 = vmatpush1.xpose.msra.mxu0 0.0
        %1051 = vmatprep.subr.mxu0 0.0
        %1052 = vmatpush1.xpose.msra.mxu0 0.0
        %1053 = vmatprep.subr.mxu0 0.0
        %1054 = vmatpush1.xpose.msra.mxu0 0.0
        %1055 = vmatprep.subr.mxu0 0.0
        %1056 = vmatpush1.xpose.msra.mxu0 0.0
        %1057 = vmatprep.subr.mxu0 0.0
        %1058 = vmatpush1.xpose.msra.mxu0 0.0
        %1059 = vmatprep.subr.mxu0 0.0
        %1060 = vmatpush1.xpose.msra.mxu0 0.0
        %1061 = vmatprep.subr.mxu0 0.0
        %1062 = vmatpush1.xpose.msra.mxu0 0.0
        %1063 = vmatprep.subr.mxu0 0.0
        %1064 = vmatpush1.xpose.msra.mxu0 0.0
        %1065 = vmatprep.subr.mxu0 0.0
        %1066 = vmatpush1.xpose.msra.mxu0 %v943
        %1067 = vmatprep.subr.mxu0 0.0
        %1068 = vmatpush1.xpose.msra.mxu0 %v938
        %1069 = vmatprep.subr.mxu0 0.0
        %1070 = vmatpush2.xpose.msra.mxu0 0.0
        %1071 = vmatprep.subr.mxu0 0.0
        %1072 = vmatpush2.xpose.msra.mxu0 0.0
        %1073 = vmatprep.subr.mxu0 0.0
        %1074 = vmatpush2.xpose.msra.mxu0 0.0
        %1075 = vmatprep.subr.mxu0 0.0
        %1076 = vmatpush2.xpose.msra.mxu0 0.0
        %1077 = vmatprep.subr.mxu0 0.0
        %1078 = vmatpush2.xpose.msra.mxu0 0.0
        %1079 = vmatprep.subr.mxu0 0.0
        %1080 = vmatpush2.xpose.msra.mxu0 0.0
        %1081 = vmatprep.subr.mxu0 0.0
        %1082 = vmatpush2.xpose.msra.mxu0 0.0
        %1083 = vmatprep.subr.mxu0 0.0
        %1084 = vmatpush2.xpose.msra.mxu0 0.0
        %1085 = vmatprep.subr.mxu0 0.0
        %1086 = vmatpush2.xpose.msra.mxu0 0.0
        %1087 = vmatprep.subr.mxu0 0.0
        %1088 = vmatpush2.xpose.msra.mxu0 0.0
        %1089 = vmatprep.subr.mxu0 0.0
        %1090 = vmatpush2.xpose.msra.mxu0 0.0
        %1091 = vmatprep.subr.mxu0 0.0
        %1092 = vmatpush2.xpose.msra.mxu0 0.0
        %1093 = vmatprep.subr.mxu0 0.0
        %1094 = vmatpush2.xpose.msra.mxu0 0.0
        %1095 = vmatprep.subr.mxu0 0.0
        %1096 = vmatpush2.xpose.msra.mxu0 0.0
        %1097 = vmatprep.subr.mxu0 0.0
        %1098 = vmatpush2.xpose.msra.mxu0 0.0
        %1099 = vmatprep.subr.mxu0 0.0
        %1100 = vmatpush2.xpose.msra.mxu0 0.0
        %1101 = vmatprep.mubr.f32.mxu0 0.0
        %1102 = vmatmul.mubr.f32.gmra.mxu0 %v847
        %v1103 = vpop.f32.mrf.mxu0
        %v1104 = vadd.f32 0.0, %v1103
        %v1105 = vpop.f32.mrf.mxu0
        %1106 = vmatprep.mubr.f32.mxu0 0.0
        %1107 = vmatmul.mubr.f32.gmra.mxu0 %v852
        %v1108 = vpop.f32.mrf.mxu0
        %v1109 = vadd.f32 0.0, %v1108
        %v1110 = vpop.f32.mrf.mxu0
        %1111 = vdwg.mxu0
        %v1112 = vmul.f32 %v1104, 0.088388346
        %v1113 = vmul.f32 %v1109, 0.088388346
        %v1114 = vlaneseq
        %v1115 = vshrl.u32 %v1114, 7
        %v1116 = vadd.s32 %v1115, 8
        %v1117 = vlaneseq
        %v1118 = vand.u32 %v1117, 127
        %vm1119 = vcmp.gt.s32.totalorder %v1118, %v1115
        %vm1120 = vcmp.gt.s32.totalorder %v1118, %v1116
        %v1121 = vsel %vm1119, -3.4028235e+38, %v1112
        %v1122 = vsel %vm1120, -3.4028235e+38, %v1113
        %vm1123 = vcmask 130048
        %v1124 = vsel %vm1123, %v1121, -inf
        %1125 = vmax.xlane.f32.xlu0 %v1124
        %v1126 = vpop.xlane.xlu0 %1125
        %v1127 = vsel %vm1123, %v1122, -inf
        %1128 = vmax.xlane.f32.xlu0 %v1127
        %v1129 = vpop.xlane.xlu0 %1128
        %v1130 = vsub.f32 %v1121, %v1126
        %v1131 = vsub.f32 %v1122, %v1129
        %v1132 = vmul.f32 %v1130, 1.442695
        %v1133 = vpow.pop %v1132
        %v1134 = vmul.f32 %v1131, 1.442695
        %v1135 = vpow.pop %v1134
        %v1136 = vsel %vm1123, %v1133, 0.0
        %1137 = vadd.xlane.f32.xlu0 %v1136
        %v1138 = vpop.xlane.xlu0 %1137
        %v1139 = vsel %vm1123, %v1135, 0.0
        %1140 = vadd.xlane.f32.xlu0 %v1139
        %v1141 = vpop.xlane.xlu0 %1140
        %v1142 = vrcp.pop %v1138
        %v1143 = vrcp.pop %v1141
        %v1144 = vmul.f32 %v1133, %v1142
        %v1145 = vmul.f32 %v1135, %v1143
        %v1147 = vsel %vm1123, %v1144, 0
        %v1150 = vsel %vm1123, %v1145, 0
        %1152 = vmatprep.subr.mxu0 0.0
        %1153 = vmatpush1.msra.mxu0 0.0
        %1154 = vmatprep.subr.mxu0 0.0
        %1155 = vmatpush1.msra.mxu0 0.0
        %1156 = vmatprep.subr.mxu0 0.0
        %1157 = vmatpush1.msra.mxu0 0.0
        %1158 = vmatprep.subr.mxu0 0.0
        %1159 = vmatpush1.msra.mxu0 0.0
        %1160 = vmatprep.subr.mxu0 0.0
        %1161 = vmatpush1.msra.mxu0 0.0
        %1162 = vmatprep.subr.mxu0 0.0
        %1163 = vmatpush1.msra.mxu0 0.0
        %1164 = vmatprep.subr.mxu0 0.0
        %1165 = vmatpush1.msra.mxu0 0.0
        %1166 = vmatprep.subr.mxu0 0.0
        %1167 = vmatpush1.msra.mxu0 0.0
        %1168 = vmatprep.subr.mxu0 0.0
        %1169 = vmatpush1.msra.mxu0 0.0
        %1170 = vmatprep.subr.mxu0 0.0
        %1171 = vmatpush1.msra.mxu0 0.0
        %1172 = vmatprep.subr.mxu0 0.0
        %1173 = vmatpush1.msra.mxu0 0.0
        %1174 = vmatprep.subr.mxu0 0.0
        %1175 = vmatpush1.msra.mxu0 0.0
        %1176 = vmatprep.subr.mxu0 0.0
        %1177 = vmatpush1.msra.mxu0 0.0
        %1178 = vmatprep.subr.mxu0 0.0
        %1179 = vmatpush1.msra.mxu0 0.0
        %1180 = vmatprep.subr.mxu0 0.0
        %1181 = vmatpush1.msra.mxu0 %v1034
        %1182 = vmatprep.subr.mxu0 0.0
        %1183 = vmatpush1.msra.mxu0 %v1029
        %1184 = vmatprep.subr.mxu0 0.0
        %1185 = vmatpush2.msra.mxu0 0.0
        %1186 = vmatprep.subr.mxu0 0.0
        %1187 = vmatpush2.msra.mxu0 0.0
        %1188 = vmatprep.subr.mxu0 0.0
        %1189 = vmatpush2.msra.mxu0 0.0
        %1190 = vmatprep.subr.mxu0 0.0
        %1191 = vmatpush2.msra.mxu0 0.0
        %1192 = vmatprep.subr.mxu0 0.0
        %1193 = vmatpush2.msra.mxu0 0.0
        %1194 = vmatprep.subr.mxu0 0.0
        %1195 = vmatpush2.msra.mxu0 0.0
        %1196 = vmatprep.subr.mxu0 0.0
        %1197 = vmatpush2.msra.mxu0 0.0
        %1198 = vmatprep.subr.mxu0 0.0
        %1199 = vmatpush2.msra.mxu0 0.0
        %1200 = vmatprep.subr.mxu0 0.0
        %1201 = vmatpush2.msra.mxu0 0.0
        %1202 = vmatprep.subr.mxu0 0.0
        %1203 = vmatpush2.msra.mxu0 0.0
        %1204 = vmatprep.subr.mxu0 0.0
        %1205 = vmatpush2.msra.mxu0 0.0
        %1206 = vmatprep.subr.mxu0 0.0
        %1207 = vmatpush2.msra.mxu0 0.0
        %1208 = vmatprep.subr.mxu0 0.0
        %1209 = vmatpush2.msra.mxu0 0.0
        %1210 = vmatprep.subr.mxu0 0.0
        %1211 = vmatpush2.msra.mxu0 0.0
        %1212 = vmatprep.subr.mxu0 0.0
        %1213 = vmatpush2.msra.mxu0 0.0
        %1214 = vmatprep.subr.mxu0 0.0
        %1215 = vmatpush2.msra.mxu0 0.0
        %1216 = vmatprep.mubr.f32.mxu0 0.0
        %1217 = vmatmul.mubr.f32.gmra.mxu0 %v1147
        %v1218 = vpop.f32.mrf.mxu0
        %v1219 = vadd.f32 0.0, %v1218
        %v1220 = vpop.f32.mrf.mxu0
        %1221 = vmatprep.mubr.f32.mxu0 0.0
        %1222 = vmatmul.mubr.f32.gmra.mxu0 %v1150
        %v1223 = vpop.f32.mrf.mxu0
        %v1224 = vadd.f32 0.0, %v1223
        %v1225 = vpop.f32.mrf.mxu0
        %1226 = vdwg.mxu0
        %v1227 = vld [vmem:[#allocation13] sm:$0xff]
        %v1228 = vld [vmem:[#allocation13 + $0x8] sm:$0xff]
        %v1229 = vld [vmem:[#allocation13 + $0x10] sm:$0xff]
        %v1230 = vld [vmem:[#allocation13 + $0x18] sm:$0xff]
        %v1231 = vld [vmem:[#allocation13 + $0x20] sm:$0xff]
        %v1232 = vld [vmem:[#allocation13 + $0x28] sm:$0xff]
        %v1233 = vld [vmem:[#allocation13 + $0x30] sm:$0xff]
        %v1234 = vld [vmem:[#allocation13 + $0x38] sm:$0xff]
        %v1235 = vld [vmem:[#allocation13 + $0x40] sm:$0xff]
        %v1236 = vld [vmem:[#allocation13 + $0x48] sm:$0xff]
        %v1237 = vld [vmem:[#allocation13 + $0x50] sm:$0xff]
        %v1238 = vld [vmem:[#allocation13 + $0x58] sm:$0xff]
        %v1239 = vld [vmem:[#allocation13 + $0x60] sm:$0xff]
        %v1240 = vld [vmem:[#allocation13 + $0x68] sm:$0xff]
        %v1241 = vld [vmem:[#allocation13 + $0x70] sm:$0xff]
        %v1242 = vld [vmem:[#allocation13 + $0x78] sm:$0xff]
        %v1243 = vld [vmem:[#allocation13 + $0x80] sm:$0xff]
        %v1244 = vld [vmem:[#allocation13 + $0x88] sm:$0xff]
        %v1245 = vld [vmem:[#allocation13 + $0x90] sm:$0xff]
        %v1246 = vld [vmem:[#allocation13 + $0x98] sm:$0xff]
        %v1247 = vld [vmem:[#allocation13 + $0xa0] sm:$0xff]
        %v1248 = vld [vmem:[#allocation13 + $0xa8] sm:$0xff]
        %v1249 = vld [vmem:[#allocation13 + $0xb0] sm:$0xff]
        %v1250 = vld [vmem:[#allocation13 + $0xb8] sm:$0xff]
        %v1251 = vld [vmem:[#allocation13 + $0xc0] sm:$0xff]
        %v1252 = vld [vmem:[#allocation13 + $0xc8] sm:$0xff]
        %v1253 = vld [vmem:[#allocation13 + $0xd0] sm:$0xff]
        %v1254 = vld [vmem:[#allocation13 + $0xd8] sm:$0xff]
        %v1255 = vld [vmem:[#allocation13 + $0xe0] sm:$0xff]
        %v1256 = vld [vmem:[#allocation13 + $0xe8] sm:$0xff]
        %v1257 = vld [vmem:[#allocation13 + $0xf0] sm:$0xff]
        %v1258 = vld [vmem:[#allocation13 + $0xf8] sm:$0xff]
        %v1259 = vld [vmem:[%s7] sm:$0x3]
        %v1261 = vlaneseq
        %v1262 = vshrl.u32 %v1261, 7
        %v1263 = vsub.s32 0, %v1262
        %v1264 = vrot.slane %v1259, %v1263
        %v1265 = vlaneseq
        %v1266 = vshrl.u32 %v1265, 7
        %v1267 = vsub.s32 1, %v1266
        %v1268 = vrot.slane %v1259, %v1267
        %1271 = vmatprep.subr.mxu0 %v1258
        %1272 = vmatpush1.msra.mxu0 %v1257
        %1273 = vmatprep.subr.mxu0 %v1256
        %1274 = vmatpush1.msra.mxu0 %v1255
        %1275 = vmatprep.subr.mxu0 %v1254
        %1276 = vmatpush1.msra.mxu0 %v1253
        %1277 = vmatprep.subr.mxu0 %v1252
        %1278 = vmatpush1.msra.mxu0 %v1251
        %1279 = vmatprep.subr.mxu0 %v1250
        %1280 = vmatpush1.msra.mxu0 %v1249
        %1281 = vmatprep.subr.mxu0 %v1248
        %1282 = vmatpush1.msra.mxu0 %v1247
        %1283 = vmatprep.subr.mxu0 %v1246
        %1284 = vmatpush1.msra.mxu0 %v1245
        %1285 = vmatprep.subr.mxu0 %v1244
        %1286 = vmatpush1.msra.mxu0 %v1243
        %1287 = vmatprep.subr.mxu0 %v1242
        %1288 = vmatpush1.msra.mxu0 %v1241
        %1289 = vmatprep.subr.mxu0 %v1240
        %1290 = vmatpush1.msra.mxu0 %v1239
        %1291 = vmatprep.subr.mxu0 %v1238
        %1292 = vmatpush1.msra.mxu0 %v1237
        %1293 = vmatprep.subr.mxu0 %v1236
        %1294 = vmatpush1.msra.mxu0 %v1235
        %1295 = vmatprep.subr.mxu0 %v1234
        %1296 = vmatpush1.msra.mxu0 %v1233
        %1297 = vmatprep.subr.mxu0 %v1232
        %1298 = vmatpush1.msra.mxu0 %v1231
        %1299 = vmatprep.subr.mxu0 %v1230
        %1300 = vmatpush1.msra.mxu0 %v1229
        %1301 = vmatprep.subr.mxu0 %v1228
        %1302 = vmatpush1.msra.mxu0 %v1227
        %1303 = vmatprep.subr.mxu0 0.0
        %1304 = vmatpush2.msra.mxu0 0.0
        %1305 = vmatprep.subr.mxu0 0.0
        %1306 = vmatpush2.msra.mxu0 0.0
        %1307 = vmatprep.subr.mxu0 0.0
        %1308 = vmatpush2.msra.mxu0 0.0
        %1309 = vmatprep.subr.mxu0 0.0
        %1310 = vmatpush2.msra.mxu0 0.0
        %1311 = vmatprep.subr.mxu0 0.0
        %1312 = vmatpush2.msra.mxu0 0.0
        %1313 = vmatprep.subr.mxu0 0.0
        %1314 = vmatpush2.msra.mxu0 0.0
        %1315 = vmatprep.subr.mxu0 0.0
        %1316 = vmatpush2.msra.mxu0 0.0
        %1317 = vmatprep.subr.mxu0 0.0
        %1318 = vmatpush2.msra.mxu0 0.0
        %1319 = vmatprep.subr.mxu0 0.0
        %1320 = vmatpush2.msra.mxu0 0.0
        %1321 = vmatprep.subr.mxu0 0.0
        %1322 = vmatpush2.msra.mxu0 0.0
        %1323 = vmatprep.subr.mxu0 0.0
        %1324 = vmatpush2.msra.mxu0 0.0
        %1325 = vmatprep.subr.mxu0 0.0
        %1326 = vmatpush2.msra.mxu0 0.0
        %1327 = vmatprep.subr.mxu0 0.0
        %1328 = vmatpush2.msra.mxu0 0.0
        %1329 = vmatprep.subr.mxu0 0.0
        %1330 = vmatpush2.msra.mxu0 0.0
        %1331 = vmatprep.subr.mxu0 0.0
        %1332 = vmatpush2.msra.mxu0 0.0
        %1333 = vmatprep.subr.mxu0 0.0
        %1334 = vmatpush2.msra.mxu0 0.0
        %1335 = vmatprep.mubr.f32.mxu0 0.0
        %1336 = vmatmul.mubr.f32.gmra.mxu0 %v1219
        %v1337 = vpop.f32.mrf.mxu0
        %v1338 = vadd.f32 %v1264, %v1337
        %v1339 = vpop.f32.mrf.mxu0
        %v1340 = vadd.f32 %v1268, %v1339
        %1341 = vmatprep.mubr.f32.mxu0 0.0
        %1342 = vmatmul.mubr.f32.gmra.mxu0 %v1224
        %v1343 = vpop.f32.mrf.mxu0
        %v1344 = vadd.f32 %v1264, %v1343
        %v1345 = vpop.f32.mrf.mxu0
        %v1346 = vadd.f32 %v1268, %v1345
        %1347 = vdwg.mxu0
        %v1348 = vld [vmem:[#allocation14] sm:$0xff]
        %v1349 = vld [vmem:[#allocation14 + $0x8] sm:$0xff]
        %v1350 = vld [vmem:[#allocation14 + $0x10] sm:$0xff]
        %v1351 = vld [vmem:[#allocation14 + $0x18] sm:$0xff]
        %v1352 = vld [vmem:[#allocation14 + $0x20] sm:$0xff]
        %v1353 = vld [vmem:[#allocation14 + $0x28] sm:$0xff]
        %v1354 = vld [vmem:[#allocation14 + $0x30] sm:$0xff]
        %v1355 = vld [vmem:[#allocation14 + $0x38] sm:$0xff]
        %v1356 = vld [vmem:[#allocation14 + $0x40] sm:$0xff]
        %v1357 = vld [vmem:[#allocation14 + $0x48] sm:$0xff]
        %v1358 = vld [vmem:[#allocation14 + $0x50] sm:$0xff]
        %v1359 = vld [vmem:[#allocation14 + $0x58] sm:$0xff]
        %v1360 = vld [vmem:[#allocation14 + $0x60] sm:$0xff]
        %v1361 = vld [vmem:[#allocation14 + $0x68] sm:$0xff]
        %v1362 = vld [vmem:[#allocation14 + $0x70] sm:$0xff]
        %v1363 = vld [vmem:[#allocation14 + $0x78] sm:$0xff]
        %v1364 = vld [vmem:[#allocation14 + $0x80] sm:$0xff]
        %v1365 = vld [vmem:[#allocation14 + $0x88] sm:$0xff]
        %v1366 = vld [vmem:[#allocation14 + $0x90] sm:$0xff]
        %v1367 = vld [vmem:[#allocation14 + $0x98] sm:$0xff]
        %v1368 = vld [vmem:[#allocation14 + $0xa0] sm:$0xff]
        %v1369 = vld [vmem:[#allocation14 + $0xa8] sm:$0xff]
        %v1370 = vld [vmem:[#allocation14 + $0xb0] sm:$0xff]
        %v1371 = vld [vmem:[#allocation14 + $0xb8] sm:$0xff]
        %v1372 = vld [vmem:[#allocation14 + $0xc0] sm:$0xff]
        %v1373 = vld [vmem:[#allocation14 + $0xc8] sm:$0xff]
        %v1374 = vld [vmem:[#allocation14 + $0xd0] sm:$0xff]
        %v1375 = vld [vmem:[#allocation14 + $0xd8] sm:$0xff]
        %v1376 = vld [vmem:[#allocation14 + $0xe0] sm:$0xff]
        %v1377 = vld [vmem:[#allocation14 + $0xe8] sm:$0xff]
        %v1378 = vld [vmem:[#allocation14 + $0xf0] sm:$0xff]
        %v1379 = vld [vmem:[#allocation14 + $0xf8] sm:$0xff]
        %v1380 = vld [vmem:[%s9] sm:$0x3]
        %v1382 = vlaneseq
        %v1383 = vshrl.u32 %v1382, 7
        %v1384 = vsub.s32 0, %v1383
        %v1385 = vrot.slane %v1380, %v1384
        %v1386 = vlaneseq
        %v1387 = vshrl.u32 %v1386, 7
        %v1388 = vsub.s32 1, %v1387
        %v1389 = vrot.slane %v1380, %v1388
        %1392 = vmatprep.subr.mxu0 %v1379
        %1393 = vmatpush1.msra.mxu0 %v1378
        %1394 = vmatprep.subr.mxu0 %v1377
        %1395 = vmatpush1.msra.mxu0 %v1376
        %1396 = vmatprep.subr.mxu0 %v1375
        %1397 = vmatpush1.msra.mxu0 %v1374
        %1398 = vmatprep.subr.mxu0 %v1373
        %1399 = vmatpush1.msra.mxu0 %v1372
        %1400 = vmatprep.subr.mxu0 %v1371
        %1401 = vmatpush1.msra.mxu0 %v1370
        %1402 = vmatprep.subr.mxu0 %v1369
        %1403 = vmatpush1.msra.mxu0 %v1368
        %1404 = vmatprep.subr.mxu0 %v1367
        %1405 = vmatpush1.msra.mxu0 %v1366
        %1406 = vmatprep.subr.mxu0 %v1365
        %1407 = vmatpush1.msra.mxu0 %v1364
        %1408 = vmatprep.subr.mxu0 %v1363
        %1409 = vmatpush1.msra.mxu0 %v1362
        %1410 = vmatprep.subr.mxu0 %v1361
        %1411 = vmatpush1.msra.mxu0 %v1360
        %1412 = vmatprep.subr.mxu0 %v1359
        %1413 = vmatpush1.msra.mxu0 %v1358
        %1414 = vmatprep.subr.mxu0 %v1357
        %1415 = vmatpush1.msra.mxu0 %v1356
        %1416 = vmatprep.subr.mxu0 %v1355
        %1417 = vmatpush1.msra.mxu0 %v1354
        %1418 = vmatprep.subr.mxu0 %v1353
        %1419 = vmatpush1.msra.mxu0 %v1352
        %1420 = vmatprep.subr.mxu0 %v1351
        %1421 = vmatpush1.msra.mxu0 %v1350
        %1422 = vmatprep.subr.mxu0 %v1349
        %1423 = vmatpush1.msra.mxu0 %v1348
        %1424 = vmatprep.subr.mxu0 0.0
        %1425 = vmatpush2.msra.mxu0 0.0
        %1426 = vmatprep.subr.mxu0 0.0
        %1427 = vmatpush2.msra.mxu0 0.0
        %1428 = vmatprep.subr.mxu0 0.0
        %1429 = vmatpush2.msra.mxu0 0.0
        %1430 = vmatprep.subr.mxu0 0.0
        %1431 = vmatpush2.msra.mxu0 0.0
        %1432 = vmatprep.subr.mxu0 0.0
        %1433 = vmatpush2.msra.mxu0 0.0
        %1434 = vmatprep.subr.mxu0 0.0
        %1435 = vmatpush2.msra.mxu0 0.0
        %1436 = vmatprep.subr.mxu0 0.0
        %1437 = vmatpush2.msra.mxu0 0.0
        %1438 = vmatprep.subr.mxu0 0.0
        %1439 = vmatpush2.msra.mxu0 0.0
        %1440 = vmatprep.subr.mxu0 0.0
        %1441 = vmatpush2.msra.mxu0 0.0
        %1442 = vmatprep.subr.mxu0 0.0
        %1443 = vmatpush2.msra.mxu0 0.0
        %1444 = vmatprep.subr.mxu0 0.0
        %1445 = vmatpush2.msra.mxu0 0.0
        %1446 = vmatprep.subr.mxu0 0.0
        %1447 = vmatpush2.msra.mxu0 0.0
        %1448 = vmatprep.subr.mxu0 0.0
        %1449 = vmatpush2.msra.mxu0 0.0
        %1450 = vmatprep.subr.mxu0 0.0
        %1451 = vmatpush2.msra.mxu0 0.0
        %1452 = vmatprep.subr.mxu0 0.0
        %1453 = vmatpush2.msra.mxu0 0.0
        %1454 = vmatprep.subr.mxu0 0.0
        %1455 = vmatpush2.msra.mxu0 0.0
        %1456 = vmatprep.mubr.f32.mxu0 0.0
        %1457 = vmatmul.mubr.f32.gmra.mxu0 %v762
        %v1458 = vpop.f32.mrf.mxu0
        %v1459 = vadd.f32 %v1385, %v1458
        %v1460 = vpop.f32.mrf.mxu0
        %v1461 = vadd.f32 %v1389, %v1460
        %1462 = vmatprep.mubr.f32.mxu0 0.0
        %1463 = vmatmul.mubr.f32.gmra.mxu0 %v763
        %v1464 = vpop.f32.mrf.mxu0
        %v1465 = vadd.f32 %v1385, %v1464
        %v1466 = vpop.f32.mrf.mxu0
        %v1467 = vadd.f32 %v1389, %v1466
        %1468 = vdwg.mxu0
        %v1469 = vmul.f32 %v1459, 0.5
        %v1470 = vmul.f32 %v1461, 0.5
        %v1471 = vmul.f32 %v1465, 0.5
        %v1472 = vmul.f32 %v1467, 0.5
        %v1473 = vmul.f32 %v1459, 0.044715
        %v1474 = vmul.f32 %v1461, 0.044715
        %v1475 = vmul.f32 %v1465, 0.044715
        %v1476 = vmul.f32 %v1467, 0.044715
        %v1477 = vmul.f32 %v1473, %v1459
        %v1478 = vmul.f32 %v1474, %v1461
        %v1479 = vmul.f32 %v1475, %v1465
        %v1480 = vmul.f32 %v1476, %v1467
        %v1481 = vmul.f32 %v1477, %v1459
        %v1482 = vmul.f32 %v1478, %v1461
        %v1483 = vmul.f32 %v1479, %v1465
        %v1484 = vmul.f32 %v1480, %v1467
        %v1485 = vadd.f32 %v1459, %v1481
        %v1486 = vadd.f32 %v1461, %v1482
        %v1487 = vadd.f32 %v1465, %v1483
        %v1488 = vadd.f32 %v1467, %v1484
        %v1489 = vmul.f32 %v1485, 0.7978846
        %v1490 = vmul.f32 %v1486, 0.7978846
        %v1491 = vmul.f32 %v1487, 0.7978846
        %v1492 = vmul.f32 %v1488, 0.7978846
        %v1493 = vtanh.pop %v1489
        %v1494 = vtanh.pop %v1490
        %v1495 = vtanh.pop %v1491
        %v1496 = vtanh.pop %v1492
        %v1497 = vadd.f32 %v1493, 1.0
        %v1498 = vadd.f32 %v1494, 1.0
        %v1499 = vadd.f32 %v1495, 1.0
        %v1500 = vadd.f32 %v1496, 1.0
        %v1501 = vmul.f32 %v1469, %v1497
        %v1502 = vmul.f32 %v1470, %v1498
        %v1503 = vmul.f32 %v1471, %v1499
        %v1504 = vmul.f32 %v1472, %v1500
        %v1505 = vld [vmem:[#allocation16] sm:$0xff]
        %v1506 = vld [vmem:[#allocation16 + $0x8] sm:$0xff]
        %v1507 = vld [vmem:[#allocation16 + $0x10] sm:$0xff]
        %v1508 = vld [vmem:[#allocation16 + $0x18] sm:$0xff]
        %v1509 = vld [vmem:[#allocation16 + $0x20] sm:$0xff]
        %v1510 = vld [vmem:[#allocation16 + $0x28] sm:$0xff]
        %v1511 = vld [vmem:[#allocation16 + $0x30] sm:$0xff]
        %v1512 = vld [vmem:[#allocation16 + $0x38] sm:$0xff]
        %v1513 = vld [vmem:[#allocation16 + $0x40] sm:$0xff]
        %v1514 = vld [vmem:[#allocation16 + $0x48] sm:$0xff]
        %v1515 = vld [vmem:[#allocation16 + $0x50] sm:$0xff]
        %v1516 = vld [vmem:[#allocation16 + $0x58] sm:$0xff]
        %v1517 = vld [vmem:[#allocation16 + $0x60] sm:$0xff]
        %v1518 = vld [vmem:[#allocation16 + $0x68] sm:$0xff]
        %v1519 = vld [vmem:[#allocation16 + $0x70] sm:$0xff]
        %v1520 = vld [vmem:[#allocation16 + $0x78] sm:$0xff]
        %v1521 = vld [vmem:[#allocation16 + $0x80] sm:$0xff]
        %v1522 = vld [vmem:[#allocation16 + $0x88] sm:$0xff]
        %v1523 = vld [vmem:[#allocation16 + $0x90] sm:$0xff]
        %v1524 = vld [vmem:[#allocation16 + $0x98] sm:$0xff]
        %v1525 = vld [vmem:[#allocation16 + $0xa0] sm:$0xff]
        %v1526 = vld [vmem:[#allocation16 + $0xa8] sm:$0xff]
        %v1527 = vld [vmem:[#allocation16 + $0xb0] sm:$0xff]
        %v1528 = vld [vmem:[#allocation16 + $0xb8] sm:$0xff]
        %v1529 = vld [vmem:[#allocation16 + $0xc0] sm:$0xff]
        %v1530 = vld [vmem:[#allocation16 + $0xc8] sm:$0xff]
        %v1531 = vld [vmem:[#allocation16 + $0xd0] sm:$0xff]
        %v1532 = vld [vmem:[#allocation16 + $0xd8] sm:$0xff]
        %v1533 = vld [vmem:[#allocation16 + $0xe0] sm:$0xff]
        %v1534 = vld [vmem:[#allocation16 + $0xe8] sm:$0xff]
        %v1535 = vld [vmem:[#allocation16 + $0xf0] sm:$0xff]
        %v1536 = vld [vmem:[#allocation16 + $0xf8] sm:$0xff]
        %v1537 = vld [vmem:[%s11] sm:$0x3]
        %v1539 = vlaneseq
        %v1540 = vshrl.u32 %v1539, 7
        %v1541 = vsub.s32 0, %v1540
        %v1542 = vrot.slane %v1537, %v1541
        %v1543 = vlaneseq
        %v1544 = vshrl.u32 %v1543, 7
        %v1545 = vsub.s32 1, %v1544
        %v1546 = vrot.slane %v1537, %v1545
        %1549 = vmatprep.subr.mxu0 %v1536
        %1550 = vmatpush1.msra.mxu0 %v1535
        %1551 = vmatprep.subr.mxu0 %v1534
        %1552 = vmatpush1.msra.mxu0 %v1533
        %1553 = vmatprep.subr.mxu0 %v1532
        %1554 = vmatpush1.msra.mxu0 %v1531
        %1555 = vmatprep.subr.mxu0 %v1530
        %1556 = vmatpush1.msra.mxu0 %v1529
        %1557 = vmatprep.subr.mxu0 %v1528
        %1558 = vmatpush1.msra.mxu0 %v1527
        %1559 = vmatprep.subr.mxu0 %v1526
        %1560 = vmatpush1.msra.mxu0 %v1525
        %1561 = vmatprep.subr.mxu0 %v1524
        %1562 = vmatpush1.msra.mxu0 %v1523
        %1563 = vmatprep.subr.mxu0 %v1522
        %1564 = vmatpush1.msra.mxu0 %v1521
        %1565 = vmatprep.subr.mxu0 %v1520
        %1566 = vmatpush1.msra.mxu0 %v1519
        %1567 = vmatprep.subr.mxu0 %v1518
        %1568 = vmatpush1.msra.mxu0 %v1517
        %1569 = vmatprep.subr.mxu0 %v1516
        %1570 = vmatpush1.msra.mxu0 %v1515
        %1571 = vmatprep.subr.mxu0 %v1514
        %1572 = vmatpush1.msra.mxu0 %v1513
        %1573 = vmatprep.subr.mxu0 %v1512
        %1574 = vmatpush1.msra.mxu0 %v1511
        %1575 = vmatprep.subr.mxu0 %v1510
        %1576 = vmatpush1.msra.mxu0 %v1509
        %1577 = vmatprep.subr.mxu0 %v1508
        %1578 = vmatpush1.msra.mxu0 %v1507
        %1579 = vmatprep.subr.mxu0 %v1506
        %1580 = vmatpush1.msra.mxu0 %v1505
        %1581 = vmatprep.subr.mxu0 0.0
        %1582 = vmatpush2.msra.mxu0 0.0
        %1583 = vmatprep.subr.mxu0 0.0
        %1584 = vmatpush2.msra.mxu0 0.0
        %1585 = vmatprep.subr.mxu0 0.0
        %1586 = vmatpush2.msra.mxu0 0.0
        %1587 = vmatprep.subr.mxu0 0.0
        %1588 = vmatpush2.msra.mxu0 0.0
        %1589 = vmatprep.subr.mxu0 0.0
        %1590 = vmatpush2.msra.mxu0 0.0
        %1591 = vmatprep.subr.mxu0 0.0
        %1592 = vmatpush2.msra.mxu0 0.0
        %1593 = vmatprep.subr.mxu0 0.0
        %1594 = vmatpush2.msra.mxu0 0.0
        %1595 = vmatprep.subr.mxu0 0.0
        %1596 = vmatpush2.msra.mxu0 0.0
        %1597 = vmatprep.subr.mxu0 0.0
        %1598 = vmatpush2.msra.mxu0 0.0
        %1599 = vmatprep.subr.mxu0 0.0
        %1600 = vmatpush2.msra.mxu0 0.0
        %1601 = vmatprep.subr.mxu0 0.0
        %1602 = vmatpush2.msra.mxu0 0.0
        %1603 = vmatprep.subr.mxu0 0.0
        %1604 = vmatpush2.msra.mxu0 0.0
        %1605 = vmatprep.subr.mxu0 0.0
        %1606 = vmatpush2.msra.mxu0 0.0
        %1607 = vmatprep.subr.mxu0 0.0
        %1608 = vmatpush2.msra.mxu0 0.0
        %1609 = vmatprep.subr.mxu0 0.0
        %1610 = vmatpush2.msra.mxu0 0.0
        %1611 = vmatprep.subr.mxu0 0.0
        %1612 = vmatpush2.msra.mxu0 0.0
        %1613 = vmatprep.mubr.f32.mxu0 0.0
        %1614 = vmatmul.mubr.f32.gmra.mxu0 %v762
        %v1615 = vpop.f32.mrf.mxu0
        %v1616 = vadd.f32 %v1542, %v1615
        %v1617 = vpop.f32.mrf.mxu0
        %v1618 = vadd.f32 %v1546, %v1617
        %1619 = vmatprep.mubr.f32.mxu0 0.0
        %1620 = vmatmul.mubr.f32.gmra.mxu0 %v763
        %v1621 = vpop.f32.mrf.mxu0
        %v1622 = vadd.f32 %v1542, %v1621
        %v1623 = vpop.f32.mrf.mxu0
        %v1624 = vadd.f32 %v1546, %v1623
        %1625 = vdwg.mxu0
        %v1626 = vmul.f32 %v1616, 0.5
        %v1627 = vmul.f32 %v1618, 0.5
        %v1628 = vmul.f32 %v1622, 0.5
        %v1629 = vmul.f32 %v1624, 0.5
        %v1630 = vmul.f32 %v1616, 0.044715
        %v1631 = vmul.f32 %v1618, 0.044715
        %v1632 = vmul.f32 %v1622, 0.044715
        %v1633 = vmul.f32 %v1624, 0.044715
        %v1634 = vmul.f32 %v1630, %v1616
        %v1635 = vmul.f32 %v1631, %v1618
        %v1636 = vmul.f32 %v1632, %v1622
        %v1637 = vmul.f32 %v1633, %v1624
        %v1638 = vmul.f32 %v1634, %v1616
        %v1639 = vmul.f32 %v1635, %v1618
        %v1640 = vmul.f32 %v1636, %v1622
        %v1641 = vmul.f32 %v1637, %v1624
        %v1642 = vadd.f32 %v1616, %v1638
        %v1643 = vadd.f32 %v1618, %v1639
        %v1644 = vadd.f32 %v1622, %v1640
        %v1645 = vadd.f32 %v1624, %v1641
        %v1646 = vmul.f32 %v1642, 0.7978846
        %v1647 = vmul.f32 %v1643, 0.7978846
        %v1648 = vmul.f32 %v1644, 0.7978846
        %v1649 = vmul.f32 %v1645, 0.7978846
        %v1650 = vtanh.pop %v1646
        %v1651 = vtanh.pop %v1647
        %v1652 = vtanh.pop %v1648
        %v1653 = vtanh.pop %v1649
        %v1654 = vadd.f32 %v1650, 1.0
        %v1655 = vadd.f32 %v1651, 1.0
        %v1656 = vadd.f32 %v1652, 1.0
        %v1657 = vadd.f32 %v1653, 1.0
        %v1658 = vmul.f32 %v1626, %v1654
        %v1659 = vmul.f32 %v1627, %v1655
        %v1660 = vmul.f32 %v1628, %v1656
        %v1661 = vmul.f32 %v1629, %v1657
        %v1662 = vld [vmem:[%s12] sm:$0x3]
        %v1663 = vld [vmem:[%s13] sm:$0x3]
        %v1664 = vadd.f32 %v1658, %v1659
        %1665 = vadd.xlane.f32.xlu0 %v1664
        %v1666 = vpop.xlane.xlu0 %1665
        %v1667 = vadd.f32 %v1660, %v1661
        %1668 = vadd.xlane.f32.xlu0 %v1667
        %v1669 = vpop.xlane.xlu0 %1668
        %v1670 = vrcp.pop 256.0
        %v1671 = vmul.f32 %v1666, %v1670
        %v1672 = vmul.f32 %v1669, %v1670
        %v1673 = vsub.f32 %v1658, %v1671
        %v1674 = vsub.f32 %v1659, %v1671
        %v1675 = vsub.f32 %v1660, %v1672
        %v1676 = vsub.f32 %v1661, %v1672
        %v1677 = vmul.f32 %v1673, %v1673
        %v1678 = vmul.f32 %v1674, %v1674
        %v1679 = vmul.f32 %v1675, %v1675
        %v1680 = vmul.f32 %v1676, %v1676
        %v1681 = vadd.f32 %v1677, %v1678
        %1682 = vadd.xlane.f32.xlu0 %v1681
        %v1683 = vpop.xlane.xlu0 %1682
        %v1684 = vadd.f32 %v1679, %v1680
        %1685 = vadd.xlane.f32.xlu0 %v1684
        %v1686 = vpop.xlane.xlu0 %1685
        %v1687 = vmul.f32 %v1683, %v1670
        %v1688 = vmul.f32 %v1686, %v1670
        %v1689 = vadd.f32 %v1687, 1e-05
        %v1690 = vadd.f32 %v1688, 1e-05
        %v1691 = vrsqrt.pop %v1689
        %v1692 = vrsqrt.pop %v1690
        %v1693 = vmul.f32 %v1673, %v1691
        %v1694 = vmul.f32 %v1674, %v1691
        %v1695 = vmul.f32 %v1675, %v1692
        %v1696 = vmul.f32 %v1676, %v1692
        %v1698 = vlaneseq
        %v1699 = vshrl.u32 %v1698, 7
        %v1700 = vsub.s32 0, %v1699
        %v1701 = vrot.slane %v1662, %v1700
        %v1702 = vlaneseq
        %v1703 = vshrl.u32 %v1702, 7
        %v1704 = vsub.s32 1, %v1703
        %v1705 = vrot.slane %v1662, %v1704
        %v1708 = vmul.f32 %v1693, %v1701
        %v1709 = vmul.f32 %v1694, %v1705
        %v1710 = vmul.f32 %v1695, %v1701
        %v1711 = vmul.f32 %v1696, %v1705
        %v1713 = vlaneseq
        %v1714 = vshrl.u32 %v1713, 7
        %v1715 = vsub.s32 0, %v1714
        %v1716 = vrot.slane %v1663, %v1715
        %v1717 = vlaneseq
        %v1718 = vshrl.u32 %v1717, 7
        %v1719 = vsub.s32 1, %v1718
        %v1720 = vrot.slane %v1663, %v1719
        %v1723 = vadd.f32 %v1708, %v1716
        %v1724 = vadd.f32 %v1709, %v1720
        %v1725 = vadd.f32 %v1710, %v1716
        %v1726 = vadd.f32 %v1711, %v1720
        %vm1729 = vcmask 1040384
        %v1730 = vrot.slane %v1723, 7
        %v1731 = vrot.slane %v1725, 7
        %v1732 = vsel %vm1729, %v1730, %v1731
        %v1735 = vsel %vm1729, 0.0, %v1730
        %vm1738 = vcmask 1046528
        %v1739 = vrot.slane %v1724, 1
        %v1740 = vrot.slane %v1726, 1
        %v1741 = vsel %vm1738, %v1739, %v1740
        %v1744 = vsel %vm1738, %v1740, 0.0
        %v1745 = vadd.f32 %v1735, %v1338
        %v1746 = vadd.f32 %v1741, %v1340
        %v1747 = vadd.f32 %v1732, %v1344
        %v1748 = vadd.f32 %v1744, %v1346
        %v1749 = vmul.f32 %v1745, 0.5
        %v1750 = vmul.f32 %v1746, 0.5
        %v1751 = vmul.f32 %v1747, 0.5
        %v1752 = vmul.f32 %v1748, 0.5
        %v1753 = vmul.f32 %v1745, 0.044715
        %v1754 = vmul.f32 %v1746, 0.044715
        %v1755 = vmul.f32 %v1747, 0.044715
        %v1756 = vmul.f32 %v1748, 0.044715
        %v1757 = vmul.f32 %v1753, %v1745
        %v1758 = vmul.f32 %v1754, %v1746
        %v1759 = vmul.f32 %v1755, %v1747
        %v1760 = vmul.f32 %v1756, %v1748
        %v1761 = vmul.f32 %v1757, %v1745
        %v1762 = vmul.f32 %v1758, %v1746
        %v1763 = vmul.f32 %v1759, %v1747
        %v1764 = vmul.f32 %v1760, %v1748
        %v1765 = vadd.f32 %v1745, %v1761
        %v1766 = vadd.f32 %v1746, %v1762
        %v1767 = vadd.f32 %v1747, %v1763
        %v1768 = vadd.f32 %v1748, %v1764
        %v1769 = vmul.f32 %v1765, 0.7978846
        %v1770 = vmul.f32 %v1766, 0.7978846
        %v1771 = vmul.f32 %v1767, 0.7978846
        %v1772 = vmul.f32 %v1768, 0.7978846
        %v1773 = vtanh.pop %v1769
        %v1774 = vtanh.pop %v1770
        %v1775 = vtanh.pop %v1771
        %v1776 = vtanh.pop %v1772
        %v1777 = vadd.f32 %v1773, 1.0
        %v1778 = vadd.f32 %v1774, 1.0
        %v1779 = vadd.f32 %v1775, 1.0
        %v1780 = vadd.f32 %v1776, 1.0
        %v1781 = vmul.f32 %v1749, %v1777
        %v1782 = vmul.f32 %v1750, %v1778
        %v1783 = vmul.f32 %v1751, %v1779
        %v1784 = vmul.f32 %v1752, %v1780
        %v1785 = vmul.f32 %v1781, %v1501
        %v1786 = vmul.f32 %v1782, %v1502
        %v1787 = vmul.f32 %v1783, %v1503
        %v1788 = vmul.f32 %v1784, %v1504
        %v1789 = vld [vmem:[#allocation17] sm:$0xff]
        %v1790 = vld [vmem:[#allocation17 + $0x8] sm:$0xff]
        %v1791 = vld [vmem:[#allocation17 + $0x10] sm:$0xff]
        %v1792 = vld [vmem:[#allocation17 + $0x18] sm:$0xff]
        %v1793 = vld [vmem:[#allocation17 + $0x20] sm:$0xff]
        %v1794 = vld [vmem:[#allocation17 + $0x28] sm:$0xff]
        %v1795 = vld [vmem:[#allocation17 + $0x30] sm:$0xff]
        %v1796 = vld [vmem:[#allocation17 + $0x38] sm:$0xff]
        %v1797 = vld [vmem:[#allocation17 + $0x40] sm:$0xff]
        %v1798 = vld [vmem:[#allocation17 + $0x48] sm:$0xff]
        %v1799 = vld [vmem:[#allocation17 + $0x50] sm:$0xff]
        %v1800 = vld [vmem:[#allocation17 + $0x58] sm:$0xff]
        %v1801 = vld [vmem:[#allocation17 + $0x60] sm:$0xff]
        %v1802 = vld [vmem:[#allocation17 + $0x68] sm:$0xff]
        %v1803 = vld [vmem:[#allocation17 + $0x70] sm:$0xff]
        %v1804 = vld [vmem:[#allocation17 + $0x78] sm:$0xff]
        %v1805 = vld [vmem:[#allocation17 + $0x80] sm:$0xff]
        %v1806 = vld [vmem:[#allocation17 + $0x88] sm:$0xff]
        %v1807 = vld [vmem:[#allocation17 + $0x90] sm:$0xff]
        %v1808 = vld [vmem:[#allocation17 + $0x98] sm:$0xff]
        %v1809 = vld [vmem:[#allocation17 + $0xa0] sm:$0xff]
        %v1810 = vld [vmem:[#allocation17 + $0xa8] sm:$0xff]
        %v1811 = vld [vmem:[#allocation17 + $0xb0] sm:$0xff]
        %v1812 = vld [vmem:[#allocation17 + $0xb8] sm:$0xff]
        %v1813 = vld [vmem:[#allocation17 + $0xc0] sm:$0xff]
        %v1814 = vld [vmem:[#allocation17 + $0xc8] sm:$0xff]
        %v1815 = vld [vmem:[#allocation17 + $0xd0] sm:$0xff]
        %v1816 = vld [vmem:[#allocation17 + $0xd8] sm:$0xff]
        %v1817 = vld [vmem:[#allocation17 + $0xe0] sm:$0xff]
        %v1818 = vld [vmem:[#allocation17 + $0xe8] sm:$0xff]
        %v1819 = vld [vmem:[#allocation17 + $0xf0] sm:$0xff]
        %v1820 = vld [vmem:[#allocation17 + $0xf8] sm:$0xff]
        %v1821 = vld [vmem:[%s15] sm:$0x1]
        %v1823 = vlaneseq
        %v1824 = vshrl.u32 %v1823, 7
        %v1825 = vsub.s32 0, %v1824
        %v1826 = vrot.slane %v1821, %v1825
        %1828 = vmatprep.subr.mxu0 0.0
        %1829 = vmatpush1.msra.mxu0 %v1804
        %1830 = vmatprep.subr.mxu0 0.0
        %1831 = vmatpush1.msra.mxu0 %v1803
        %1832 = vmatprep.subr.mxu0 0.0
        %1833 = vmatpush1.msra.mxu0 %v1802
        %1834 = vmatprep.subr.mxu0 0.0
        %1835 = vmatpush1.msra.mxu0 %v1801
        %1836 = vmatprep.subr.mxu0 0.0
        %1837 = vmatpush1.msra.mxu0 %v1800
        %1838 = vmatprep.subr.mxu0 0.0
        %1839 = vmatpush1.msra.mxu0 %v1799
        %1840 = vmatprep.subr.mxu0 0.0
        %1841 = vmatpush1.msra.mxu0 %v1798
        %1842 = vmatprep.subr.mxu0 0.0
        %1843 = vmatpush1.msra.mxu0 %v1797
        %1844 = vmatprep.subr.mxu0 0.0
        %1845 = vmatpush1.msra.mxu0 %v1796
        %1846 = vmatprep.subr.mxu0 0.0
        %1847 = vmatpush1.msra.mxu0 %v1795
        %1848 = vmatprep.subr.mxu0 0.0
        %1849 = vmatpush1.msra.mxu0 %v1794
        %1850 = vmatprep.subr.mxu0 0.0
        %1851 = vmatpush1.msra.mxu0 %v1793
        %1852 = vmatprep.subr.mxu0 0.0
        %1853 = vmatpush1.msra.mxu0 %v1792
        %1854 = vmatprep.subr.mxu0 0.0
        %1855 = vmatpush1.msra.mxu0 %v1791
        %1856 = vmatprep.subr.mxu0 0.0
        %1857 = vmatpush1.msra.mxu0 %v1790
        %1858 = vmatprep.subr.mxu0 0.0
        %1859 = vmatpush1.msra.mxu0 %v1789
        %1860 = vmatprep.subr.mxu0 0.0
        %1861 = vmatpush2.msra.mxu0 %v1820
        %1862 = vmatprep.subr.mxu0 0.0
        %1863 = vmatpush2.msra.mxu0 %v1819
        %1864 = vmatprep.subr.mxu0 0.0
        %1865 = vmatpush2.msra.mxu0 %v1818
        %1866 = vmatprep.subr.mxu0 0.0
        %1867 = vmatpush2.msra.mxu0 %v1817
        %1868 = vmatprep.subr.mxu0 0.0
        %1869 = vmatpush2.msra.mxu0 %v1816
        %1870 = vmatprep.subr.mxu0 0.0
        %1871 = vmatpush2.msra.mxu0 %v1815
        %1872 = vmatprep.subr.mxu0 0.0
        %1873 = vmatpush2.msra.mxu0 %v1814
        %1874 = vmatprep.subr.mxu0 0.0
        %1875 = vmatpush2.msra.mxu0 %v1813
        %1876 = vmatprep.subr.mxu0 0.0
        %1877 = vmatpush2.msra.mxu0 %v1812
        %1878 = vmatprep.subr.mxu0 0.0
        %1879 = vmatpush2.msra.mxu0 %v1811
        %1880 = vmatprep.subr.mxu0 0.0
        %1881 = vmatpush2.msra.mxu0 %v1810
        %1882 = vmatprep.subr.mxu0 0.0
        %1883 = vmatpush2.msra.mxu0 %v1809
        %1884 = vmatprep.subr.mxu0 0.0
        %1885 = vmatpush2.msra.mxu0 %v1808
        %1886 = vmatprep.subr.mxu0 0.0
        %1887 = vmatpush2.msra.mxu0 %v1807
        %1888 = vmatprep.subr.mxu0 0.0
        %1889 = vmatpush2.msra.mxu0 %v1806
        %1890 = vmatprep.subr.mxu0 0.0
        %1891 = vmatpush2.msra.mxu0 %v1805
        %1892 = vmatprep.mubr.f32.mxu0 %v1786
        %1893 = vmatmul.mubr.f32.gmra.mxu0 %v1785
        %v1894 = vpop.f32.mrf.mxu0
        %v1895 = vadd.f32 %v1826, %v1894
        %v1896 = vpop.f32.mrf.mxu0
        %1897 = vmatprep.mubr.f32.mxu0 %v1788
        %1898 = vmatmul.mubr.f32.gmra.mxu0 %v1787
        %v1899 = vpop.f32.mrf.mxu0
        %v1900 = vadd.f32 %v1826, %v1899
        %v1901 = vpop.f32.mrf.mxu0
        %1902 = vdwg.mxu0
        %v1903 = vadd.f32 %v721, %v1895
        %v1904 = vadd.f32 %v722, %v1900
        %v1905 = vld [vmem:[%s16] sm:$0x1]
        %v1906 = vld [vmem:[%s17] sm:$0x1]
        %1907 = vadd.xlane.f32.xlu0 %v1903
        %v1908 = vpop.xlane.xlu0 %1907
        %1909 = vadd.xlane.f32.xlu0 %v1904
        %v1910 = vpop.xlane.xlu0 %1909
        %v1911 = vmul.f32 %v1908, %v729
        %v1912 = vmul.f32 %v1910, %v729
        %v1913 = vsub.f32 %v1903, %v1911
        %v1914 = vsub.f32 %v1904, %v1912
        %v1915 = vmul.f32 %v1913, %v1913
        %v1916 = vmul.f32 %v1914, %v1914
        %1917 = vadd.xlane.f32.xlu0 %v1915
        %v1918 = vpop.xlane.xlu0 %1917
        %1919 = vadd.xlane.f32.xlu0 %v1916
        %v1920 = vpop.xlane.xlu0 %1919
        %v1921 = vmul.f32 %v1918, %v729
        %v1922 = vmul.f32 %v1920, %v729
        %v1923 = vadd.f32 %v1921, 1e-05
        %v1924 = vadd.f32 %v1922, 1e-05
        %v1925 = vrsqrt.pop %v1923
        %v1926 = vrsqrt.pop %v1924
        %v1927 = vmul.f32 %v1913, %v1925
        %v1928 = vmul.f32 %v1914, %v1926
        %v1930 = vlaneseq
        %v1931 = vshrl.u32 %v1930, 7
        %v1932 = vsub.s32 0, %v1931
        %v1933 = vrot.slane %v1905, %v1932
        %v1935 = vmul.f32 %v1927, %v1933
        %v1936 = vmul.f32 %v1928, %v1933
        %v1938 = vlaneseq
        %v1939 = vshrl.u32 %v1938, 7
        %v1940 = vsub.s32 0, %v1939
        %v1941 = vrot.slane %v1906, %v1940
        %v1943 = vadd.f32 %v1935, %v1941
        %v1944 = vadd.f32 %v1936, %v1941
        %1945 = vst [vmem:[%s720] sm:$0xff] %v1943
        %1946 = vst [vmem:[%s720 + $0x8] sm:$0xff] %v1944
        %s1947 = sand.u32 %s431, 1
        %s1948 = scalar_lea.sflag [#allocation4], %s1947
        %s1949 = sand.u32 %s431, 1
        %s1950 = smul.addr %s1949, 16
        %s1951 = scalar_lea.vmem [#allocation19], %s1950
        // Predicated region
        $region133: #{tpu_custom_call.1} parent=91 // pred_check
          %p1952 = pneg %p441
        $region134: #{tpu_custom_call.1} parent=91 // pred_check_branch
          %1954 = sbr.rel (%p1952) target = $region136
        $region135: #{tpu_custom_call.1} parent=91 // pred_region
          %s1956 = ssub.s32 256, 256
          %1957 = vsyncadd %s1948, %s1956
          %s1958 = smul.addr %s40, 2
          %s1959 = smul.addr %s1958, 128
          %s1960 = scalar_lea.hbm %s18, %s1959
          %s1961 = sshll.u32 %s1951, 4
          %s1962 = int_to_ptr.vmem [resolvable:$true] %s1961
          %1967 = dma.vmem_to_hbm [thread:$0]  %s1962, 256, %s1960, %s1948, 128, 128, 8
        $region136: #{tpu_custom_call.1} parent=91 // pred_fallthru
          _
      $region92: #{tpu_custom_call.1} parent=5 // pred_fallthru
        _
      %p1968 = scmp.le.s32.totalorder 2, %s35
      // Predicated region
      $region137: #{tpu_custom_call.1} parent=5 // pred_check
        %p1969 = pneg %p1968
      $region138: #{tpu_custom_call.1} parent=5 // pred_check_branch
        %1971 = sbr.rel (%p1969) target = $region140
      $region139: #{tpu_custom_call.1} parent=5 // pred_region
        %s1972 = ssub.s32 %s35, 2
        // Predicated region
        $region141: #{tpu_custom_call.1} parent=139 // pred_check
          %p1973 = pneg %p447
        $region142: #{tpu_custom_call.1} parent=139 // pred_check_branch
          %1975 = sbr.rel (%p1973) target = $region144
        $region143: #{tpu_custom_call.1} parent=139 // pred_region
          %s1976 = sand.u32 %s432, 1
          %s1977 = scalar_lea.sflag [#allocation4], %s1976
          %s1978 = sand.u32 %s432, 1
          %s1979 = smul.addr %s1978, 16
          %s1980 = scalar_lea.vmem [#allocation19], %s1979
          %1981 = dma.done %s1977, 256
        $region144: #{tpu_custom_call.1} parent=139 // pred_fallthru
          _
      $region140: #{tpu_custom_call.1} parent=5 // pred_fallthru
        _
    $region6: #{tpu_custom_call.1} parent=1 // loop_footer
      %s39 = sadd.s32 1, %s35
    $region7: #{tpu_custom_call.1} parent=1 // loop_footer_branch
      %34 = sbr.rel target = $region3
    $region8: #{tpu_custom_call.1} parent=1 // loop_exit
      _
    %1982 = vsyncpa [#allocation3], 1
    %s1983 = scalar_lea.sflag [#allocation3], 1
    %1984 = vsyncpa %s1983, 1
    %1985 = vsyncpa [#allocation6], 1
    %1986 = vsyncpa [#allocation9], 1
    %1987 = vsyncpa [#allocation12], 1
    %1988 = vsyncpa [#allocation15], 1
    %1989 = vsyncpa [#allocation18], 1
    %1990 = vsyncpa [#allocation4], 1
    %s1991 = scalar_lea.sflag [#allocation4], 1
    %1992 = vsyncpa %s1991, 1

// kernel: tpu_custom_call.1
$region0: #{tpu_custom_call.1}
  #allocation0 [shape = 'u32[]', space=smem, size = 0x4, offset = 0x4, fixed_abs, tag = 'smem constant byte address 0x4 - core index']
  #allocation1 [shape = 'u32[144,128]{1,0:T(1,128)}', space=vmem, size = 0x12000, scoped, tag = 'internal scratch']
  %s0 = inlined_call_operand.hbm [shape: f32[2,16,128], index: 0, kind: input, shape index: {}]
  %s1 = inlined_call_operand.hbm [shape: f32[1,128], index: 1, kind: input, shape index: {}]
  %s2 = inlined_call_operand.hbm [shape: f32[1,128], index: 2, kind: input, shape index: {}]
  %s3 = inlined_call_operand.hbm [shape: f32[128,128], index: 3, kind: input, shape index: {}]
  %s4 = inlined_call_operand.hbm [shape: f32[128,128], index: 4, kind: input, shape index: {}]
  %s5 = inlined_call_operand.hbm [shape: f32[128,128], index: 5, kind: input, shape index: {}]
  %s6 = inlined_call_operand.hbm [shape: f32[128,256], index: 6, kind: input, shape index: {}]
  %s7 = inlined_call_operand.vmem [shape: f32[1,256], index: 7, kind: input, shape index: {}]
  %s8 = inlined_call_operand.hbm [shape: f32[128,256], index: 8, kind: input, shape index: {}]
  %s9 = inlined_call_operand.vmem [shape: f32[1,256], index: 9, kind: input, shape index: {}]
  %s10 = inlined_call_operand.hbm [shape: f32[128,256], index: 10, kind: input, shape index: {}]
  %s11 = inlined_call_operand.vmem [shape: f32[1,256], index: 11, kind: input, shape index: {}]
  %s12 = inlined_call_operand.vmem [shape: f32[1,256], index: 12, kind: input, shape index: {}]
  %s13 = inlined_call_operand.vmem [shape: f32[1,256], index: 13, kind: input, shape index: {}]
  %s14 = inlined_call_operand.hbm [shape: f32[256,128], index: 14, kind: input, shape index: {}]
  %s15 = inlined_call_operand.vmem [shape: f32[1,128], index: 15, kind: input, shape index: {}]
  %s16 = inlined_call_operand.vmem [shape: f32[1,128], index: 16, kind: input, shape index: {}]
  %s17 = inlined_call_operand.vmem [shape: f32[1,128], index: 17, kind: input, shape index: {}]
  %s18 = inlined_call_operand.hbm [shape: f32[2,16,128], index: 18, kind: output, shape index: {}]
  %s19 = sld [smem:[#allocation0]]
  $region145: #{tpu_custom_call.1} parent=0
    _
  %s21 = ssub.s32 1, %s19
  %s22 = scalar_select 0, %s21, %s19
  $region1: #{tpu_custom_call.1} parent=0
    #allocation2 [shape = 'u8[16384]{0}', space=vmem, size = 0x4000, scoped, tag = 'input window, operand 0']
    #allocation3 [shape = 's32[2]{0}', space=sflag, size = 0x8, scoped, tag = 'scoped memory for tpu_custom_call.1']
    #allocation4 [shape = 's32[2]{0}', space=sflag, size = 0x8, scoped, tag = 'scoped memory for tpu_custom_call.1']
    #allocation5 [shape = 'u8[512]{0}', space=vmem, size = 0x400, scoped, tag = 'input window, operand 1, single buffered']
    #allocation6 [shape = 's32[1]{0}', space=sflag, size = 0x4, scoped, tag = 'scoped memory for tpu_custom_call.1']
    #allocation7 [shape = 'u8[512]{0}', space=vmem, size = 0x400, scoped, tag = 'input window, operand 2, single buffered']
    #allocation8 [shape = 'u8[65536]{0}', space=vmem, size = 0x10000, scoped, tag = 'input window, operand 3, single buffered']
    #allocation9 [shape = 's32[1]{0}', space=sflag, size = 0x4, scoped, tag = 'scoped memory for tpu_custom_call.1']
    #allocation10 [shape = 'u8[65536]{0}', space=vmem, size = 0x10000, scoped, tag = 'input window, operand 4, single buffered']
    #allocation11 [shape = 'u8[65536]{0}', space=vmem, size = 0x10000, scoped, tag = 'input window, operand 5, single buffered']
    #allocation12 [shape = 's32[1]{0}', space=sflag, size = 0x4, scoped, tag = 'scoped memory for tpu_custom_call.1']
    #allocation13 [shape = 'u8[131072]{0}', space=vmem, size = 0x20000, scoped, tag = 'input window, operand 6, single buffered']
    #allocation14 [shape = 'u8[131072]{0}', space=vmem, size = 0x20000, scoped, tag = 'input window, operand 8, single buffered']
    #allocation15 [shape = 's32[1]{0}', space=sflag, size = 0x4, scoped, tag = 'scoped memory for tpu_custom_call.1']
    #allocation16 [shape = 'u8[131072]{0}', space=vmem, size = 0x20000, scoped, tag = 'input window, operand 10, single buffered']
    #allocation17 [shape = 'u8[131072]{0}', space=vmem, size = 0x20000, scoped, tag = 'input window, operand 14, single buffered']
    #allocation18 [shape = 's32[1]{0}', space=sflag, size = 0x4, scoped, tag = 'scoped memory for tpu_custom_call.1']
    #allocation19 [shape = 'u8[16384]{0}', space=vmem, size = 0x4000, scoped, tag = 'output window, operand 0']
    %23 = vsyncpa [#allocation3], 0
    %s24 = scalar_lea.sflag [#allocation3], 1
    %25 = vsyncpa %s24, 0
    %26 = vsyncpa [#allocation6], 0
    %27 = vsyncpa [#allocation9], 0
    %28 = vsyncpa [#allocation12], 0
    %29 = vsyncpa [#allocation15], 0
    %30 = vsyncpa [#allocation18], 0
    %31 = vsyncpa [#allocation4], 0
    %s32 = scalar_lea.sflag [#allocation4], 1
    %33 = vsyncpa %s32, 0
    loop: start=0, step=1, limit=4
    $region2: #{tpu_custom_call.1} parent=1 // loop_pre_header
      _
    $region3: #{tpu_custom_call.1} parent=1 // loop_header
      %s35 = sphi 0, %s39
      %p36 = scmp.ge.s32.totalorder %s35, 4
      %s45 = sphi 0, %s47
      %s48 = sphi 0, %s45
      %s49 = sphi 0, %s48
      %s65 = sphi 0, %s49
      %s69 = sphi 0, %s69
      %s71 = sphi 0, %s69
      %s72 = sphi 0, %s71
      %s86 = sphi 0, %s72
      %s90 = sphi 0, %s90
      %s92 = sphi 0, %s90
      %s93 = sphi 0, %s92
      %s107 = sphi 0, %s93
      %s111 = sphi 0, %s111
      %s113 = sphi 0, %s111
      %s114 = sphi 0, %s113
      %s128 = sphi 0, %s114
      %s132 = sphi 0, %s132
      %s134 = sphi 0, %s132
      %s135 = sphi 0, %s134
      %s149 = sphi 0, %s135
      %s153 = sphi 0, %s153
      %s155 = sphi 0, %s153
      %s156 = sphi 0, %s155
      %s170 = sphi 0, %s156
      %s174 = sphi 0, %s174
      %s176 = sphi 0, %s174
      %s177 = sphi 0, %s176
      %s191 = sphi 0, %s177
      %s195 = sphi 0, %s195
      %s197 = sphi 0, %s195
      %s198 = sphi 0, %s197
      %s212 = sphi 0, %s198
      %s216 = sphi 0, %s216
      %s218 = sphi 0, %s216
      %s219 = sphi 0, %s218
      %s233 = sphi 0, %s219
      %s237 = sphi 0, %s237
      %s239 = sphi 0, %s237
      %s240 = sphi 0, %s239
      %s254 = sphi 0, %s240
      %s258 = sphi 0, %s258
      %s260 = sphi 0, %s258
      %s261 = sphi 0, %s260
      %s275 = sphi 0, %s261
      %s279 = sphi 0, %s279
      %s281 = sphi 0, %s279
      %s282 = sphi 0, %s281
      %s296 = sphi 0, %s282
      %s300 = sphi 0, %s300
      %s302 = sphi 0, %s300
      %s303 = sphi 0, %s302
      %s317 = sphi 0, %s303
      %s321 = sphi 0, %s321
      %s323 = sphi 0, %s321
      %s324 = sphi 0, %s323
      %s338 = sphi 0, %s324
      %s342 = sphi 0, %s342
      %s344 = sphi 0, %s342
      %s345 = sphi 0, %s344
      %s359 = sphi 0, %s345
      %s363 = sphi 0, %s363
      %s365 = sphi 0, %s363
      %s366 = sphi 0, %s365
      %s380 = sphi 0, %s366
      %s384 = sphi 0, %s384
      %s386 = sphi 0, %s384
      %s387 = sphi 0, %s386
      %s401 = sphi 0, %s387
      %s405 = sphi 0, %s405
      %s407 = sphi 0, %s405
      %s408 = sphi 0, %s407
      %s422 = sphi 0, %s408
      %s428 = sphi 0, %s430
      %s431 = sphi 0, %s428
      %s432 = sphi 0, %s431
      %s448 = sphi 0, %s432
    $region4: #{tpu_custom_call.1} parent=1 // loop_header_branch
      %38 = sbr.rel (%p36) target = $region8
    $region5: #{tpu_custom_call.1} parent=1 // loop_body
      %s40 = ssub.s32 %s35, 1
      %s41 = ssub.s32 %s35, 2
      %s42 = sadd.s32 %s35, 1
      %s43 = ssub.s32 %s35, %s42
      %p44 = scmp.eq.s32.totalorder %s43, 0
      %s46 = sadd.s32 %s45, 1
      %s47 = scalar_select %p44, %s45, %s46
      %p50 = pneg %p44
      %p51 = scmp.eq.s32.totalorder %s35, 1
      %p52 = por %p50, %p51
      %p53 = scmp.ne.s32.totalorder %s45, %s48
      %p54 = scmp.eq.s32.totalorder %s35, 0
      %p55 = por %p53, %p54
      %p56 = scmp.ne.s32.totalorder %s45, %s48
      %p57 = scmp.eq.s32.totalorder %s40, 1
      %p58 = por %p56, %p57
      %p59 = scmp.ne.s32.totalorder %s48, %s49
      %p60 = scmp.eq.s32.totalorder %s40, 0
      %p61 = por %p59, %p60
      %p62 = scmp.ne.s32.totalorder %s48, %s49
      %p63 = scmp.eq.s32.totalorder %s41, 1
      %p64 = por %p62, %p63
      %p66 = scmp.ne.s32.totalorder %s49, %s65
      %p67 = scmp.eq.s32.totalorder %s41, 0
      %p68 = por %p66, %p67
      %s70 = sadd.s32 %s69, 1
      %p73 = scmp.eq.s32.totalorder %s35, 1
      %p74 = scmp.ne.s32.totalorder %s69, %s71
      %p75 = scmp.eq.s32.totalorder %s35, 0
      %p76 = por %p74, %p75
      %p77 = scmp.ne.s32.totalorder %s69, %s71
      %p78 = scmp.eq.s32.totalorder %s40, 1
      %p79 = por %p77, %p78
      %p80 = scmp.ne.s32.totalorder %s71, %s72
      %p81 = scmp.eq.s32.totalorder %s40, 0
      %p82 = por %p80, %p81
      %p83 = scmp.ne.s32.totalorder %s71, %s72
      %p84 = scmp.eq.s32.totalorder %s41, 1
      %p85 = por %p83, %p84
      %p87 = scmp.ne.s32.totalorder %s72, %s86
      %p88 = scmp.eq.s32.totalorder %s41, 0
      %p89 = por %p87, %p88
      %s91 = sadd.s32 %s90, 1
      %p94 = scmp.eq.s32.totalorder %s35, 1
      %p95 = scmp.ne.s32.totalorder %s90, %s92
      %p96 = scmp.eq.s32.totalorder %s35, 0
      %p97 = por %p95, %p96
      %p98 = scmp.ne.s32.totalorder %s90, %s92
      %p99 = scmp.eq.s32.totalorder %s40, 1
      %p100 = por %p98, %p99
      %p101 = scmp.ne.s32.totalorder %s92, %s93
      %p102 = scmp.eq.s32.totalorder %s40, 0
      %p103 = por %p101, %p102
      %p104 = scmp.ne.s32.totalorder %s92, %s93
      %p105 = scmp.eq.s32.totalorder %s41, 1
      %p106 = por %p104, %p105
      %p108 = scmp.ne.s32.totalorder %s93, %s107
      %p109 = scmp.eq.s32.totalorder %s41, 0
      %p110 = por %p108, %p109
      %s112 = sadd.s32 %s111, 1
      %p115 = scmp.eq.s32.totalorder %s35, 1
      %p116 = scmp.ne.s32.totalorder %s111, %s113
      %p117 = scmp.eq.s32.totalorder %s35, 0
      %p118 = por %p116, %p117
      %p119 = scmp.ne.s32.totalorder %s111, %s113
      %p120 = scmp.eq.s32.totalorder %s40, 1
      %p121 = por %p119, %p120
      %p122 = scmp.ne.s32.totalorder %s113, %s114
      %p123 = scmp.eq.s32.totalorder %s40, 0
      %p124 = por %p122, %p123
      %p125 = scmp.ne.s32.totalorder %s113, %s114
      %p126 = scmp.eq.s32.totalorder %s41, 1
      %p127 = por %p125, %p126
      %p129 = scmp.ne.s32.totalorder %s114, %s128
      %p130 = scmp.eq.s32.totalorder %s41, 0
      %p131 = por %p129, %p130
      %s133 = sadd.s32 %s132, 1
      %p136 = scmp.eq.s32.totalorder %s35, 1
      %p137 = scmp.ne.s32.totalorder %s132, %s134
      %p138 = scmp.eq.s32.totalorder %s35, 0
      %p139 = por %p137, %p138
      %p140 = scmp.ne.s32.totalorder %s132, %s134
      %p141 = scmp.eq.s32.totalorder %s40, 1
      %p142 = por %p140, %p141
      %p143 = scmp.ne.s32.totalorder %s134, %s135
      %p144 = scmp.eq.s32.totalorder %s40, 0
      %p145 = por %p143, %p144
      %p146 = scmp.ne.s32.totalorder %s134, %s135
      %p147 = scmp.eq.s32.totalorder %s41, 1
      %p148 = por %p146, %p147
      %p150 = scmp.ne.s32.totalorder %s135, %s149
      %p151 = scmp.eq.s32.totalorder %s41, 0
      %p152 = por %p150, %p151
      %s154 = sadd.s32 %s153, 1
      %p157 = scmp.eq.s32.totalorder %s35, 1
      %p158 = scmp.ne.s32.totalorder %s153, %s155
      %p159 = scmp.eq.s32.totalorder %s35, 0
      %p160 = por %p158, %p159
      %p161 = scmp.ne.s32.totalorder %s153, %s155
      %p162 = scmp.eq.s32.totalorder %s40, 1
      %p163 = por %p161, %p162
      %p164 = scmp.ne.s32.totalorder %s155, %s156
      %p165 = scmp.eq.s32.totalorder %s40, 0
      %p166 = por %p164, %p165
      %p167 = scmp.ne.s32.totalorder %s155, %s156
      %p168 = scmp.eq.s32.totalorder %s41, 1
      %p169 = por %p167, %p168
      %p171 = scmp.ne.s32.totalorder %s156, %s170
      %p172 = scmp.eq.s32.totalorder %s41, 0
      %p173 = por %p171, %p172
      %s175 = sadd.s32 %s174, 1
      %p178 = scmp.eq.s32.totalorder %s35, 1
      %p179 = scmp.ne.s32.totalorder %s174, %s176
      %p180 = scmp.eq.s32.totalorder %s35, 0
      %p181 = por %p179, %p180
      %p182 = scmp.ne.s32.totalorder %s174, %s176
      %p183 = scmp.eq.s32.totalorder %s40, 1
      %p184 = por %p182, %p183
      %p185 = scmp.ne.s32.totalorder %s176, %s177
      %p186 = scmp.eq.s32.totalorder %s40, 0
      %p187 = por %p185, %p186
      %p188 = scmp.ne.s32.totalorder %s176, %s177
      %p189 = scmp.eq.s32.totalorder %s41, 1
      %p190 = por %p188, %p189
      %p192 = scmp.ne.s32.totalorder %s177, %s191
      %p193 = scmp.eq.s32.totalorder %s41, 0
      %p194 = por %p192, %p193
      %s196 = sadd.s32 %s195, 1
      %p199 = scmp.eq.s32.totalorder %s35, 1
      %p200 = scmp.ne.s32.totalorder %s195, %s197
      %p201 = scmp.eq.s32.totalorder %s35, 0
      %p202 = por %p200, %p201
      %p203 = scmp.ne.s32.totalorder %s195, %s197
      %p204 = scmp.eq.s32.totalorder %s40, 1
      %p205 = por %p203, %p204
      %p206 = scmp.ne.s32.totalorder %s197, %s198
      %p207 = scmp.eq.s32.totalorder %s40, 0
      %p208 = por %p206, %p207
      %p209 = scmp.ne.s32.totalorder %s197, %s198
      %p210 = scmp.eq.s32.totalorder %s41, 1
      %p211 = por %p209, %p210
      %p213 = scmp.ne.s32.totalorder %s198, %s212
      %p214 = scmp.eq.s32.totalorder %s41, 0
      %p215 = por %p213, %p214
      %s217 = sadd.s32 %s216, 1
      %p220 = scmp.eq.s32.totalorder %s35, 1
      %p221 = scmp.ne.s32.totalorder %s216, %s218
      %p222 = scmp.eq.s32.totalorder %s35, 0
      %p223 = por %p221, %p222
      %p224 = scmp.ne.s32.totalorder %s216, %s218
      %p225 = scmp.eq.s32.totalorder %s40, 1
      %p226 = por %p224, %p225
      %p227 = scmp.ne.s32.totalorder %s218, %s219
      %p228 = scmp.eq.s32.totalorder %s40, 0
      %p229 = por %p227, %p228
      %p230 = scmp.ne.s32.totalorder %s218, %s219
      %p231 = scmp.eq.s32.totalorder %s41, 1
      %p232 = por %p230, %p231
      %p234 = scmp.ne.s32.totalorder %s219, %s233
      %p235 = scmp.eq.s32.totalorder %s41, 0
      %p236 = por %p234, %p235
      %s238 = sadd.s32 %s237, 1
      %p241 = scmp.eq.s32.totalorder %s35, 1
      %p242 = scmp.ne.s32.totalorder %s237, %s239
      %p243 = scmp.eq.s32.totalorder %s35, 0
      %p244 = por %p242, %p243
      %p245 = scmp.ne.s32.totalorder %s237, %s239
      %p246 = scmp.eq.s32.totalorder %s40, 1
      %p247 = por %p245, %p246
      %p248 = scmp.ne.s32.totalorder %s239, %s240
      %p249 = scmp.eq.s32.totalorder %s40, 0
      %p250 = por %p248, %p249
      %p251 = scmp.ne.s32.totalorder %s239, %s240
      %p252 = scmp.eq.s32.totalorder %s41, 1
      %p253 = por %p251, %p252
      %p255 = scmp.ne.s32.totalorder %s240, %s254
      %p256 = scmp.eq.s32.totalorder %s41, 0
      %p257 = por %p255, %p256
      %s259 = sadd.s32 %s258, 1
      %p262 = scmp.eq.s32.totalorder %s35, 1
      %p263 = scmp.ne.s32.totalorder %s258, %s260
      %p264 = scmp.eq.s32.totalorder %s35, 0
      %p265 = por %p263, %p264
      %p266 = scmp.ne.s32.totalorder %s258, %s260
      %p267 = scmp.eq.s32.totalorder %s40, 1
      %p268 = por %p266, %p267
      %p269 = scmp.ne.s32.totalorder %s260, %s261
      %p270 = scmp.eq.s32.totalorder %s40, 0
      %p271 = por %p269, %p270
      %p272 = scmp.ne.s32.totalorder %s260, %s261
      %p273 = scmp.eq.s32.totalorder %s41, 1
      %p274 = por %p272, %p273
      %p276 = scmp.ne.s32.totalorder %s261, %s275
      %p277 = scmp.eq.s32.totalorder %s41, 0
      %p278 = por %p276, %p277
      %s280 = sadd.s32 %s279, 1
      %p283 = scmp.eq.s32.totalorder %s35, 1
      %p284 = scmp.ne.s32.totalorder %s279, %s281
      %p285 = scmp.eq.s32.totalorder %s35, 0
      %p286 = por %p284, %p285
      %p287 = scmp.ne.s32.totalorder %s279, %s281
      %p288 = scmp.eq.s32.totalorder %s40, 1
      %p289 = por %p287, %p288
      %p290 = scmp.ne.s32.totalorder %s281, %s282
      %p291 = scmp.eq.s32.totalorder %s40, 0
      %p292 = por %p290, %p291
      %p293 = scmp.ne.s32.totalorder %s281, %s282
      %p294 = scmp.eq.s32.totalorder %s41, 1
      %p295 = por %p293, %p294
      %p297 = scmp.ne.s32.totalorder %s282, %s296
      %p298 = scmp.eq.s32.totalorder %s41, 0
      %p299 = por %p297, %p298
      %s301 = sadd.s32 %s300, 1
      %p304 = scmp.eq.s32.totalorder %s35, 1
      %p305 = scmp.ne.s32.totalorder %s300, %s302
      %p306 = scmp.eq.s32.totalorder %s35, 0
      %p307 = por %p305, %p306
      %p308 = scmp.ne.s32.totalorder %s300, %s302
      %p309 = scmp.eq.s32.totalorder %s40, 1
      %p310 = por %p308, %p309
      %p311 = scmp.ne.s32.totalorder %s302, %s303
      %p312 = scmp.eq.s32.totalorder %s40, 0
      %p313 = por %p311, %p312
      %p314 = scmp.ne.s32.totalorder %s302, %s303
      %p315 = scmp.eq.s32.totalorder %s41, 1
      %p316 = por %p314, %p315
      %p318 = scmp.ne.s32.totalorder %s303, %s317
      %p319 = scmp.eq.s32.totalorder %s41, 0
      %p320 = por %p318, %p319
      %s322 = sadd.s32 %s321, 1
      %p325 = scmp.eq.s32.totalorder %s35, 1
      %p326 = scmp.ne.s32.totalorder %s321, %s323
      %p327 = scmp.eq.s32.totalorder %s35, 0
      %p328 = por %p326, %p327
      %p329 = scmp.ne.s32.totalorder %s321, %s323
      %p330 = scmp.eq.s32.totalorder %s40, 1
      %p331 = por %p329, %p330
      %p332 = scmp.ne.s32.totalorder %s323, %s324
      %p333 = scmp.eq.s32.totalorder %s40, 0
      %p334 = por %p332, %p333
      %p335 = scmp.ne.s32.totalorder %s323, %s324
      %p336 = scmp.eq.s32.totalorder %s41, 1
      %p337 = por %p335, %p336
      %p339 = scmp.ne.s32.totalorder %s324, %s338
      %p340 = scmp.eq.s32.totalorder %s41, 0
      %p341 = por %p339, %p340
      %s343 = sadd.s32 %s342, 1
      %p346 = scmp.eq.s32.totalorder %s35, 1
      %p347 = scmp.ne.s32.totalorder %s342, %s344
      %p348 = scmp.eq.s32.totalorder %s35, 0
      %p349 = por %p347, %p348
      %p350 = scmp.ne.s32.totalorder %s342, %s344
      %p351 = scmp.eq.s32.totalorder %s40, 1
      %p352 = por %p350, %p351
      %p353 = scmp.ne.s32.totalorder %s344, %s345
      %p354 = scmp.eq.s32.totalorder %s40, 0
      %p355 = por %p353, %p354
      %p356 = scmp.ne.s32.totalorder %s344, %s345
      %p357 = scmp.eq.s32.totalorder %s41, 1
      %p358 = por %p356, %p357
      %p360 = scmp.ne.s32.totalorder %s345, %s359
      %p361 = scmp.eq.s32.totalorder %s41, 0
      %p362 = por %p360, %p361
      %s364 = sadd.s32 %s363, 1
      %p367 = scmp.eq.s32.totalorder %s35, 1
      %p368 = scmp.ne.s32.totalorder %s363, %s365
      %p369 = scmp.eq.s32.totalorder %s35, 0
      %p370 = por %p368, %p369
      %p371 = scmp.ne.s32.totalorder %s363, %s365
      %p372 = scmp.eq.s32.totalorder %s40, 1
      %p373 = por %p371, %p372
      %p374 = scmp.ne.s32.totalorder %s365, %s366
      %p375 = scmp.eq.s32.totalorder %s40, 0
      %p376 = por %p374, %p375
      %p377 = scmp.ne.s32.totalorder %s365, %s366
      %p378 = scmp.eq.s32.totalorder %s41, 1
      %p379 = por %p377, %p378
      %p381 = scmp.ne.s32.totalorder %s366, %s380
      %p382 = scmp.eq.s32.totalorder %s41, 0
      %p383 = por %p381, %p382
      %s385 = sadd.s32 %s384, 1
      %p388 = scmp.eq.s32.totalorder %s35, 1
      %p389 = scmp.ne.s32.totalorder %s384, %s386
      %p390 = scmp.eq.s32.totalorder %s35, 0
      %p391 = por %p389, %p390
      %p392 = scmp.ne.s32.totalorder %s384, %s386
      %p393 = scmp.eq.s32.totalorder %s40, 1
      %p394 = por %p392, %p393
      %p395 = scmp.ne.s32.totalorder %s386, %s387
      %p396 = scmp.eq.s32.totalorder %s40, 0
      %p397 = por %p395, %p396
      %p398 = scmp.ne.s32.totalorder %s386, %s387
      %p399 = scmp.eq.s32.totalorder %s41, 1
      %p400 = por %p398, %p399
      %p402 = scmp.ne.s32.totalorder %s387, %s401
      %p403 = scmp.eq.s32.totalorder %s41, 0
      %p404 = por %p402, %p403
      %s406 = sadd.s32 %s405, 1
      %p409 = scmp.eq.s32.totalorder %s35, 1
      %p410 = scmp.ne.s32.totalorder %s405, %s407
      %p411 = scmp.eq.s32.totalorder %s35, 0
      %p412 = por %p410, %p411
      %p413 = scmp.ne.s32.totalorder %s405, %s407
      %p414 = scmp.eq.s32.totalorder %s40, 1
      %p415 = por %p413, %p414
      %p416 = scmp.ne.s32.totalorder %s407, %s408
      %p417 = scmp.eq.s32.totalorder %s40, 0
      %p418 = por %p416, %p417
      %p419 = scmp.ne.s32.totalorder %s407, %s408
      %p420 = scmp.eq.s32.totalorder %s41, 1
      %p421 = por %p419, %p420
      %p423 = scmp.ne.s32.totalorder %s408, %s422
      %p424 = scmp.eq.s32.totalorder %s41, 0
      %p425 = por %p423, %p424
      %s426 = ssub.s32 %s35, %s42
      %p427 = scmp.eq.s32.totalorder %s426, 0
      %s429 = sadd.s32 %s428, 1
      %s430 = scalar_select %p427, %s428, %s429
      %p433 = pneg %p427
      %p434 = scmp.eq.s32.totalorder %s35, 1
      %p435 = por %p433, %p434
      %p436 = scmp.ne.s32.totalorder %s428, %s431
      %p437 = scmp.eq.s32.totalorder %s35, 0
      %p438 = por %p436, %p437
      %p439 = scmp.ne.s32.totalorder %s428, %s431
      %p440 = scmp.eq.s32.totalorder %s40, 1
      %p441 = por %p439, %p440
      %p442 = scmp.ne.s32.totalorder %s431, %s432
      %p443 = scmp.eq.s32.totalorder %s40, 0
      %p444 = por %p442, %p443
      %p445 = scmp.ne.s32.totalorder %s431, %s432
      %p446 = scmp.eq.s32.totalorder %s41, 1
      %p447 = por %p445, %p446
      %p449 = scmp.ne.s32.totalorder %s432, %s448
      %p450 = scmp.eq.s32.totalorder %s41, 0
      %p451 = por %p449, %p450
      %p452 = scmp.le.s32.totalorder 1, %s35
      %p453 = scmp.lt.s32.totalorder %s35, 3
      %p454 = pnand %p452, %p453
      %p455 = pneg %p454
      // Predicated region
      $region9: #{tpu_custom_call.1} parent=5 // pred_check
        _
      $region10: #{tpu_custom_call.1} parent=5 // pred_check_branch
        %457 = sbr.rel (%p454) target = $region12
      $region11: #{tpu_custom_call.1} parent=5 // pred_region
        %s458 = ssub.s32 %s35, 1
        // Predicated region
        $region13: #{tpu_custom_call.1} parent=11 // pred_check
          %p459 = pneg %p82
        $region14: #{tpu_custom_call.1} parent=11 // pred_check_branch
          %461 = sbr.rel (%p459) target = $region16
        $region15: #{tpu_custom_call.1} parent=11 // pred_region
          %s463 = ssub.s32 16, 16
          %464 = vsyncadd [#allocation6], %s463
          %s466 = sshll.u32 [#allocation5], 4
          %s467 = int_to_ptr.vmem [resolvable:$true] %s466
          %469 = dma.hbm_to_vmem [thread:$0]  %s1, 16, %s467, [#allocation6]
        $region16: #{tpu_custom_call.1} parent=11 // pred_fallthru
          _
        // Predicated region
        $region17: #{tpu_custom_call.1} parent=11 // pred_check
          %p470 = pneg %p103
        $region18: #{tpu_custom_call.1} parent=11 // pred_check_branch
          %472 = sbr.rel (%p470) target = $region20
        $region19: #{tpu_custom_call.1} parent=11 // pred_region
          %s474 = ssub.s32 16, 16
          %475 = vsyncadd [#allocation6], %s474
          %s477 = sshll.u32 [#allocation7], 4
          %s478 = int_to_ptr.vmem [resolvable:$true] %s477
          %480 = dma.hbm_to_vmem [thread:$0]  %s2, 16, %s478, [#allocation6]
        $region20: #{tpu_custom_call.1} parent=11 // pred_fallthru
          _
        // Predicated region
        $region21: #{tpu_custom_call.1} parent=11 // pred_check
          %p481 = pneg %p124
        $region22: #{tpu_custom_call.1} parent=11 // pred_check_branch
          %483 = sbr.rel (%p481) target = $region24
        $region23: #{tpu_custom_call.1} parent=11 // pred_region
          %s485 = ssub.s32 2048, 2048
          %486 = vsyncadd [#allocation9], %s485
          %s487 = sshll.u32 [#allocation8], 4
          %s488 = int_to_ptr.vmem [resolvable:$true] %s487
          %493 = dma.hbm_to_vmem [thread:$0]  %s3, 2048, %s488, [#allocation9], 128, 128, 8
        $region24: #{tpu_custom_call.1} parent=11 // pred_fallthru
          _
        // Predicated region
        $region25: #{tpu_custom_call.1} parent=11 // pred_check
          %p494 = pneg %p145
        $region26: #{tpu_custom_call.1} parent=11 // pred_check_branch
          %496 = sbr.rel (%p494) target = $region28
        $region27: #{tpu_custom_call.1} parent=11 // pred_region
          %s498 = ssub.s32 2048, 2048
          %499 = vsyncadd [#allocation9], %s498
          %s500 = sshll.u32 [#allocation10], 4
          %s501 = int_to_ptr.vmem [resolvable:$true] %s500
          %506 = dma.hbm_to_vmem [thread:$0]  %s4, 2048, %s501, [#allocation9], 128, 128, 8
        $region28: #{tpu_custom_call.1} parent=11 // pred_fallthru
          _
        // Predicated region
        $region29: #{tpu_custom_call.1} parent=11 // pred_check
          %p507 = pneg %p166
        $region30: #{tpu_custom_call.1} parent=11 // pred_check_branch
          %509 = sbr.rel (%p507) target = $region32
        $region31: #{tpu_custom_call.1} parent=11 // pred_region
          %s511 = ssub.s32 2048, 2048
          %512 = vsyncadd [#allocation12], %s511
          %s513 = sshll.u32 [#allocation11], 4
          %s514 = int_to_ptr.vmem [resolvable:$true] %s513
          %519 = dma.hbm_to_vmem [thread:$0]  %s5, 2048, %s514, [#allocation12], 128, 128, 8
        $region32: #{tpu_custom_call.1} parent=11 // pred_fallthru
          _
        // Predicated region
        $region33: #{tpu_custom_call.1} parent=11 // pred_check
          %p520 = pneg %p187
        $region34: #{tpu_custom_call.1} parent=11 // pred_check_branch
          %522 = sbr.rel (%p520) target = $region36
        $region35: #{tpu_custom_call.1} parent=11 // pred_region
          %s524 = ssub.s32 4096, 4096
          %525 = vsyncadd [#allocation12], %s524
          %s526 = sshll.u32 [#allocation13], 4
          %s527 = int_to_ptr.vmem [resolvable:$true] %s526
          %532 = dma.hbm_to_vmem [thread:$0]  %s6, 4096, %s527, [#allocation12], 256, 256, 16
        $region36: #{tpu_custom_call.1} parent=11 // pred_fallthru
          _
        // Predicated region
        $region37: #{tpu_custom_call.1} parent=11 // pred_check
          %p533 = pneg %p208
        $region38: #{tpu_custom_call.1} parent=11 // pred_check_branch
          %535 = sbr.rel (%p533) target = $region40
        $region39: #{tpu_custom_call.1} parent=11 // pred_region
          _
        $region40: #{tpu_custom_call.1} parent=11 // pred_fallthru
          _
        // Predicated region
        $region41: #{tpu_custom_call.1} parent=11 // pred_check
          %p536 = pneg %p229
        $region42: #{tpu_custom_call.1} parent=11 // pred_check_branch
          %538 = sbr.rel (%p536) target = $region44
        $region43: #{tpu_custom_call.1} parent=11 // pred_region
          %s540 = ssub.s32 4096, 4096
          %541 = vsyncadd [#allocation15], %s540
          %s542 = sshll.u32 [#allocation14], 4
          %s543 = int_to_ptr.vmem [resolvable:$true] %s542
          %548 = dma.hbm_to_vmem [thread:$0]  %s8, 4096, %s543, [#allocation15], 256, 256, 16
        $region44: #{tpu_custom_call.1} parent=11 // pred_fallthru
          _
        // Predicated region
        $region45: #{tpu_custom_call.1} parent=11 // pred_check
          %p549 = pneg %p250
        $region46: #{tpu_custom_call.1} parent=11 // pred_check_branch
          %551 = sbr.rel (%p549) target = $region48
        $region47: #{tpu_custom_call.1} parent=11 // pred_region
          _
        $region48: #{tpu_custom_call.1} parent=11 // pred_fallthru
          _
        // Predicated region
        $region49: #{tpu_custom_call.1} parent=11 // pred_check
          %p552 = pneg %p271
        $region50: #{tpu_custom_call.1} parent=11 // pred_check_branch
          %554 = sbr.rel (%p552) target = $region52
        $region51: #{tpu_custom_call.1} parent=11 // pred_region
          %s556 = ssub.s32 4096, 4096
          %557 = vsyncadd [#allocation15], %s556
          %s558 = sshll.u32 [#allocation16], 4
          %s559 = int_to_ptr.vmem [resolvable:$true] %s558
          %564 = dma.hbm_to_vmem [thread:$0]  %s10, 4096, %s559, [#allocation15], 256, 256, 16
        $region52: #{tpu_custom_call.1} parent=11 // pred_fallthru
          _
        // Predicated region
        $region53: #{tpu_custom_call.1} parent=11 // pred_check
          %p565 = pneg %p292
        $region54: #{tpu_custom_call.1} parent=11 // pred_check_branch
          %567 = sbr.rel (%p565) target = $region56
        $region55: #{tpu_custom_call.1} parent=11 // pred_region
          _
        $region56: #{tpu_custom_call.1} parent=11 // pred_fallthru
          _
        // Predicated region
        $region57: #{tpu_custom_call.1} parent=11 // pred_check
          %p568 = pneg %p313
        $region58: #{tpu_custom_call.1} parent=11 // pred_check_branch
          %570 = sbr.rel (%p568) target = $region60
        $region59: #{tpu_custom_call.1} parent=11 // pred_region
          _
        $region60: #{tpu_custom_call.1} parent=11 // pred_fallthru
          _
        // Predicated region
        $region61: #{tpu_custom_call.1} parent=11 // pred_check
          %p571 = pneg %p334
        $region62: #{tpu_custom_call.1} parent=11 // pred_check_branch
          %573 = sbr.rel (%p571) target = $region64
        $region63: #{tpu_custom_call.1} parent=11 // pred_region
          _
        $region64: #{tpu_custom_call.1} parent=11 // pred_fallthru
          _
        // Predicated region
        $region65: #{tpu_custom_call.1} parent=11 // pred_check
          %p574 = pneg %p355
        $region66: #{tpu_custom_call.1} parent=11 // pred_check_branch
          %576 = sbr.rel (%p574) target = $region68
        $region67: #{tpu_custom_call.1} parent=11 // pred_region
          %s578 = ssub.s32 4096, 4096
          %579 = vsyncadd [#allocation18], %s578
          %s580 = sshll.u32 [#allocation17], 4
          %s581 = int_to_ptr.vmem [resolvable:$true] %s580
          %586 = dma.hbm_to_vmem [thread:$0]  %s14, 4096, %s581, [#allocation18], 128, 128, 8
        $region68: #{tpu_custom_call.1} parent=11 // pred_fallthru
          _
        // Predicated region
        $region69: #{tpu_custom_call.1} parent=11 // pred_check
          %p587 = pneg %p376
        $region70: #{tpu_custom_call.1} parent=11 // pred_check_branch
          %589 = sbr.rel (%p587) target = $region72
        $region71: #{tpu_custom_call.1} parent=11 // pred_region
          _
        $region72: #{tpu_custom_call.1} parent=11 // pred_fallthru
          _
        // Predicated region
        $region73: #{tpu_custom_call.1} parent=11 // pred_check
          %p590 = pneg %p397
        $region74: #{tpu_custom_call.1} parent=11 // pred_check_branch
          %592 = sbr.rel (%p590) target = $region76
        $region75: #{tpu_custom_call.1} parent=11 // pred_region
          _
        $region76: #{tpu_custom_call.1} parent=11 // pred_fallthru
          _
        // Predicated region
        $region77: #{tpu_custom_call.1} parent=11 // pred_check
          %p593 = pneg %p418
        $region78: #{tpu_custom_call.1} parent=11 // pred_check_branch
          %595 = sbr.rel (%p593) target = $region80
        $region79: #{tpu_custom_call.1} parent=11 // pred_region
          _
        $region80: #{tpu_custom_call.1} parent=11 // pred_fallthru
          _
      $region12: #{tpu_custom_call.1} parent=5 // pred_fallthru
        _
      %p596 = scmp.lt.s32.totalorder %s35, 2
      // Predicated region
      $region81: #{tpu_custom_call.1} parent=5 // pred_check
        %p597 = pneg %p596
      $region82: #{tpu_custom_call.1} parent=5 // pred_check_branch
        %599 = sbr.rel (%p597) target = $region84
      $region83: #{tpu_custom_call.1} parent=5 // pred_region
        // Predicated region
        $region85: #{tpu_custom_call.1} parent=83 // pred_check
          %p600 = pneg %p55
        $region86: #{tpu_custom_call.1} parent=83 // pred_check_branch
          %602 = sbr.rel (%p600) target = $region88
        $region87: #{tpu_custom_call.1} parent=83 // pred_region
          %s603 = sand.u32 %s45, 1
          %s604 = scalar_lea.sflag [#allocation3], %s603
          %s605 = sand.u32 %s45, 1
          %s606 = smul.addr %s605, 16
          %s607 = scalar_lea.vmem [#allocation2], %s606
          %s609 = ssub.s32 256, 256
          %610 = vsyncadd %s604, %s609
          %s611 = smul.addr %s35, 2
          %s612 = smul.addr %s611, 128
          %s613 = scalar_lea.hbm %s0, %s612
          %s614 = sshll.u32 %s607, 4
          %s615 = int_to_ptr.vmem [resolvable:$true] %s614
          %620 = dma.hbm_to_vmem [thread:$0]  %s613, 256, %s615, %s604, 128, 128, 8
        $region88: #{tpu_custom_call.1} parent=83 // pred_fallthru
          _
      $region84: #{tpu_custom_call.1} parent=5 // pred_fallthru
        _
      %p621 = scmp.le.s32.totalorder 1, %s35
      %p622 = scmp.lt.s32.totalorder %s35, 3
      %p623 = pnand %p621, %p622
      %p624 = pneg %p623
      // Predicated region
      $region89: #{tpu_custom_call.1} parent=5 // pred_check
        _
      $region90: #{tpu_custom_call.1} parent=5 // pred_check_branch
        %626 = sbr.rel (%p623) target = $region92
      $region91: #{tpu_custom_call.1} parent=5 // pred_region
        %s627 = ssub.s32 %s35, 1
        %s628 = sand.u32 %s48, 1
        %s629 = scalar_lea.sflag [#allocation3], %s628
        %s630 = sand.u32 %s48, 1
        %s631 = smul.addr %s630, 16
        %s632 = scalar_lea.vmem [#allocation2], %s631
        // Predicated region
        $region93: #{tpu_custom_call.1} parent=91 // pred_check
          %p633 = pneg %p61
        $region94: #{tpu_custom_call.1} parent=91 // pred_check_branch
          %635 = sbr.rel (%p633) target = $region96
        $region95: #{tpu_custom_call.1} parent=91 // pred_region
          %636 = dma.done %s629, 256
        $region96: #{tpu_custom_call.1} parent=91 // pred_fallthru
          _
        // Predicated region
        $region97: #{tpu_custom_call.1} parent=91 // pred_check
          %p637 = pneg %p82
        $region98: #{tpu_custom_call.1} parent=91 // pred_check_branch
          %639 = sbr.rel (%p637) target = $region100
        $region99: #{tpu_custom_call.1} parent=91 // pred_region
          %640 = dma.done [#allocation6], 16
        $region100: #{tpu_custom_call.1} parent=91 // pred_fallthru
          _
        // Predicated region
        $region101: #{tpu_custom_call.1} parent=91 // pred_check
          %p641 = pneg %p103
        $region102: #{tpu_custom_call.1} parent=91 // pred_check_branch
          %643 = sbr.rel (%p641) target = $region104
        $region103: #{tpu_custom_call.1} parent=91 // pred_region
          %644 = dma.done [#allocation6], 16
        $region104: #{tpu_custom_call.1} parent=91 // pred_fallthru
          _
        // Predicated region
        $region105: #{tpu_custom_call.1} parent=91 // pred_check
          %p645 = pneg %p124
        $region106: #{tpu_custom_call.1} parent=91 // pred_check_branch
          %647 = sbr.rel (%p645) target = $region108
        $region107: #{tpu_custom_call.1} parent=91 // pred_region
          %648 = dma.done [#allocation9], 2048
        $region108: #{tpu_custom_call.1} parent=91 // pred_fallthru
          _
        // Predicated region
        $region109: #{tpu_custom_call.1} parent=91 // pred_check
          %p649 = pneg %p145
        $region110: #{tpu_custom_call.1} parent=91 // pred_check_branch
          %651 = sbr.rel (%p649) target = $region112
        $region111: #{tpu_custom_call.1} parent=91 // pred_region
          %652 = dma.done [#allocation9], 2048
        $region112: #{tpu_custom_call.1} parent=91 // pred_fallthru
          _
        // Predicated region
        $region113: #{tpu_custom_call.1} parent=91 // pred_check
          %p653 = pneg %p166
        $region114: #{tpu_custom_call.1} parent=91 // pred_check_branch
          %655 = sbr.rel (%p653) target = $region116
        $region115: #{tpu_custom_call.1} parent=91 // pred_region
          %656 = dma.done [#allocation12], 2048
        $region116: #{tpu_custom_call.1} parent=91 // pred_fallthru
          _
        // Predicated region
        $region117: #{tpu_custom_call.1} parent=91 // pred_check
          %p657 = pneg %p187
        $region118: #{tpu_custom_call.1} parent=91 // pred_check_branch
          %659 = sbr.rel (%p657) target = $region120
        $region119: #{tpu_custom_call.1} parent=91 // pred_region
          %660 = dma.done [#allocation12], 4096
        $region120: #{tpu_custom_call.1} parent=91 // pred_fallthru
          _
        // Predicated region
        $region121: #{tpu_custom_call.1} parent=91 // pred_check
          %p661 = pneg %p229
        $region122: #{tpu_custom_call.1} parent=91 // pred_check_branch
          %663 = sbr.rel (%p661) target = $region124
        $region123: #{tpu_custom_call.1} parent=91 // pred_region
          %664 = dma.done [#allocation15], 4096
        $region124: #{tpu_custom_call.1} parent=91 // pred_fallthru
          _
        // Predicated region
        $region125: #{tpu_custom_call.1} parent=91 // pred_check
          %p665 = pneg %p271
        $region126: #{tpu_custom_call.1} parent=91 // pred_check_branch
          %667 = sbr.rel (%p665) target = $region128
        $region127: #{tpu_custom_call.1} parent=91 // pred_region
          %668 = dma.done [#allocation15], 4096
        $region128: #{tpu_custom_call.1} parent=91 // pred_fallthru
          _
        // Predicated region
        $region129: #{tpu_custom_call.1} parent=91 // pred_check
          %p669 = pneg %p355
        $region130: #{tpu_custom_call.1} parent=91 // pred_check_branch
          %671 = sbr.rel (%p669) target = $region132
        $region131: #{tpu_custom_call.1} parent=91 // pred_region
          %672 = dma.done [#allocation18], 4096
        $region132: #{tpu_custom_call.1} parent=91 // pred_fallthru
          _
        %s673 = sand.u32 %s48, 1
        %s674 = scalar_lea.sflag [#allocation3], %s673
        %s675 = sand.u32 %s48, 1
        %s676 = smul.addr %s675, 16
        %s677 = scalar_lea.vmem [#allocation2], %s676
        %p678 = pneg %p61
        %p679 = pneg %p58
        %p680 = pneg %p82
        %p681 = pneg %p79
        %p682 = pneg %p103
        %p683 = pneg %p100
        %p684 = pneg %p124
        %p685 = pneg %p121
        %p686 = pneg %p145
        %p687 = pneg %p142
        %p688 = pneg %p166
        %p689 = pneg %p163
        %p690 = pneg %p187
        %p691 = pneg %p184
        %p692 = pneg %p208
        %p693 = pneg %p205
        %p694 = pneg %p229
        %p695 = pneg %p226
        %p696 = pneg %p250
        %p697 = pneg %p247
        %p698 = pneg %p271
        %p699 = pneg %p268
        %p700 = pneg %p292
        %p701 = pneg %p289
        %p702 = pneg %p313
        %p703 = pneg %p310
        %p704 = pneg %p334
        %p705 = pneg %p331
        %p706 = pneg %p355
        %p707 = pneg %p352
        %p708 = pneg %p376
        %p709 = pneg %p373
        %p710 = pneg %p397
        %p711 = pneg %p394
        %p712 = pneg %p418
        %p713 = pneg %p415
        %p714 = pneg %p444
        %p715 = pneg %p441
        %s716 = sand.u32 %s431, 1
        %s717 = scalar_lea.sflag [#allocation4], %s716
        %s718 = sand.u32 %s431, 1
        %s719 = smul.addr %s718, 16
        %s720 = scalar_lea.vmem [#allocation19], %s719
        %v721 = vld [vmem:[%s632] sm:$0xff]
        %v722 = vld [vmem:[%s632 + $0x8] sm:$0xff]
        %v723 = vld [vmem:[#allocation5] sm:$0x1]
        %v724 = vld [vmem:[#allocation7] sm:$0x1]
        %725 = vadd.xlane.f32.xlu0 %v721
        %v726 = vpop.xlane.xlu0 %725
        %727 = vadd.xlane.f32.xlu0 %v722
        %v728 = vpop.xlane.xlu0 %727
        %v729 = vrcp.pop 128.0
        %v730 = vmul.f32 %v726, %v729
        %v731 = vmul.f32 %v728, %v729
        %v732 = vsub.f32 %v721, %v730
        %v733 = vsub.f32 %v722, %v731
        %v734 = vmul.f32 %v732, %v732
        %v735 = vmul.f32 %v733, %v733
        %736 = vadd.xlane.f32.xlu0 %v734
        %v737 = vpop.xlane.xlu0 %736
        %738 = vadd.xlane.f32.xlu0 %v735
        %v739 = vpop.xlane.xlu0 %738
        %v740 = vmul.f32 %v737, %v729
        %v741 = vmul.f32 %v739, %v729
        %v742 = vadd.f32 %v740, 1e-05
        %v743 = vadd.f32 %v741, 1e-05
        %v744 = vrsqrt.pop %v742
        %v745 = vrsqrt.pop %v743
        %v746 = vmul.f32 %v732, %v744
        %v747 = vmul.f32 %v733, %v745
        %v749 = vlaneseq
        %v750 = vshrl.u32 %v749, 7
        %v751 = vsub.s32 0, %v750
        %v752 = vrot.slane %v723, %v751
        %v754 = vmul.f32 %v746, %v752
        %v755 = vmul.f32 %v747, %v752
        %v757 = vlaneseq
        %v758 = vshrl.u32 %v757, 7
        %v759 = vsub.s32 0, %v758
        %v760 = vrot.slane %v724, %v759
        %v762 = vadd.f32 %v754, %v760
        %v763 = vadd.f32 %v755, %v760
        %v764 = vld [vmem:[#allocation8] sm:$0xff]
        %v765 = vld [vmem:[#allocation8 + $0x8] sm:$0xff]
        %v766 = vld [vmem:[#allocation8 + $0x10] sm:$0xff]
        %v767 = vld [vmem:[#allocation8 + $0x18] sm:$0xff]
        %v768 = vld [vmem:[#allocation8 + $0x20] sm:$0xff]
        %v769 = vld [vmem:[#allocation8 + $0x28] sm:$0xff]
        %v770 = vld [vmem:[#allocation8 + $0x30] sm:$0xff]
        %v771 = vld [vmem:[#allocation8 + $0x38] sm:$0xff]
        %v772 = vld [vmem:[#allocation8 + $0x40] sm:$0xff]
        %v773 = vld [vmem:[#allocation8 + $0x48] sm:$0xff]
        %v774 = vld [vmem:[#allocation8 + $0x50] sm:$0xff]
        %v775 = vld [vmem:[#allocation8 + $0x58] sm:$0xff]
        %v776 = vld [vmem:[#allocation8 + $0x60] sm:$0xff]
        %v777 = vld [vmem:[#allocation8 + $0x68] sm:$0xff]
        %v778 = vld [vmem:[#allocation8 + $0x70] sm:$0xff]
        %v779 = vld [vmem:[#allocation8 + $0x78] sm:$0xff]
        %780 = vmatprep.subr.mxu0 0.0
        %781 = vmatpush1.msra.mxu0 %v779
        %782 = vmatprep.subr.mxu0 0.0
        %783 = vmatpush1.msra.mxu0 %v778
        %784 = vmatprep.subr.mxu0 0.0
        %785 = vmatpush1.msra.mxu0 %v777
        %786 = vmatprep.subr.mxu0 0.0
        %787 = vmatpush1.msra.mxu0 %v776
        %788 = vmatprep.subr.mxu0 0.0
        %789 = vmatpush1.msra.mxu0 %v775
        %790 = vmatprep.subr.mxu0 0.0
        %791 = vmatpush1.msra.mxu0 %v774
        %792 = vmatprep.subr.mxu0 0.0
        %793 = vmatpush1.msra.mxu0 %v773
        %794 = vmatprep.subr.mxu0 0.0
        %795 = vmatpush1.msra.mxu0 %v772
        %796 = vmatprep.subr.mxu0 0.0
        %797 = vmatpush1.msra.mxu0 %v771
        %798 = vmatprep.subr.mxu0 0.0
        %799 = vmatpush1.msra.mxu0 %v770
        %800 = vmatprep.subr.mxu0 0.0
        %801 = vmatpush1.msra.mxu0 %v769
        %802 = vmatprep.subr.mxu0 0.0
        %803 = vmatpush1.msra.mxu0 %v768
        %804 = vmatprep.subr.mxu0 0.0
        %805 = vmatpush1.msra.mxu0 %v767
        %806 = vmatprep.subr.mxu0 0.0
        %807 = vmatpush1.msra.mxu0 %v766
        %808 = vmatprep.subr.mxu0 0.0
        %809 = vmatpush1.msra.mxu0 %v765
        %810 = vmatprep.subr.mxu0 0.0
        %811 = vmatpush1.msra.mxu0 %v764
        %812 = vmatprep.subr.mxu0 0.0
        %813 = vmatpush2.msra.mxu0 0.0
        %814 = vmatprep.subr.mxu0 0.0
        %815 = vmatpush2.msra.mxu0 0.0
        %816 = vmatprep.subr.mxu0 0.0
        %817 = vmatpush2.msra.mxu0 0.0
        %818 = vmatprep.subr.mxu0 0.0
        %819 = vmatpush2.msra.mxu0 0.0
        %820 = vmatprep.subr.mxu0 0.0
        %821 = vmatpush2.msra.mxu0 0.0
        %822 = vmatprep.subr.mxu0 0.0
        %823 = vmatpush2.msra.mxu0 0.0
        %824 = vmatprep.subr.mxu0 0.0
        %825 = vmatpush2.msra.mxu0 0.0
        %826 = vmatprep.subr.mxu0 0.0
        %827 = vmatpush2.msra.mxu0 0.0
        %828 = vmatprep.subr.mxu0 0.0
        %829 = vmatpush2.msra.mxu0 0.0
        %830 = vmatprep.subr.mxu0 0.0
        %831 = vmatpush2.msra.mxu0 0.0
        %832 = vmatprep.subr.mxu0 0.0
        %833 = vmatpush2.msra.mxu0 0.0
        %834 = vmatprep.subr.mxu0 0.0
        %835 = vmatpush2.msra.mxu0 0.0
        %836 = vmatprep.subr.mxu0 0.0
        %837 = vmatpush2.msra.mxu0 0.0
        %838 = vmatprep.subr.mxu0 0.0
        %839 = vmatpush2.msra.mxu0 0.0
        %840 = vmatprep.subr.mxu0 0.0
        %841 = vmatpush2.msra.mxu0 0.0
        %842 = vmatprep.subr.mxu0 0.0
        %843 = vmatpush2.msra.mxu0 0.0
        %844 = vmatprep.mubr.f32.mxu0 0.0
        %845 = vmatmul.mubr.f32.gmra.mxu0 %v762
        %v846 = vpop.f32.mrf.mxu0
        %v847 = vadd.f32 0.0, %v846
        %v848 = vpop.f32.mrf.mxu0
        %849 = vmatprep.mubr.f32.mxu0 0.0
        %850 = vmatmul.mubr.f32.gmra.mxu0 %v763
        %v851 = vpop.f32.mrf.mxu0
        %v852 = vadd.f32 0.0, %v851
        %v853 = vpop.f32.mrf.mxu0
        %854 = vdwg.mxu0
        %v855 = vld [vmem:[#allocation10] sm:$0xff]
        %v856 = vld [vmem:[#allocation10 + $0x8] sm:$0xff]
        %v857 = vld [vmem:[#allocation10 + $0x10] sm:$0xff]
        %v858 = vld [vmem:[#allocation10 + $0x18] sm:$0xff]
        %v859 = vld [vmem:[#allocation10 + $0x20] sm:$0xff]
        %v860 = vld [vmem:[#allocation10 + $0x28] sm:$0xff]
        %v861 = vld [vmem:[#allocation10 + $0x30] sm:$0xff]
        %v862 = vld [vmem:[#allocation10 + $0x38] sm:$0xff]
        %v863 = vld [vmem:[#allocation10 + $0x40] sm:$0xff]
        %v864 = vld [vmem:[#allocation10 + $0x48] sm:$0xff]
        %v865 = vld [vmem:[#allocation10 + $0x50] sm:$0xff]
        %v866 = vld [vmem:[#allocation10 + $0x58] sm:$0xff]
        %v867 = vld [vmem:[#allocation10 + $0x60] sm:$0xff]
        %v868 = vld [vmem:[#allocation10 + $0x68] sm:$0xff]
        %v869 = vld [vmem:[#allocation10 + $0x70] sm:$0xff]
        %v870 = vld [vmem:[#allocation10 + $0x78] sm:$0xff]
        %871 = vmatprep.subr.mxu0 0.0
        %872 = vmatpush1.msra.mxu0 %v870
        %873 = vmatprep.subr.mxu0 0.0
        %874 = vmatpush1.msra.mxu0 %v869
        %875 = vmatprep.subr.mxu0 0.0
        %876 = vmatpush1.msra.mxu0 %v868
        %877 = vmatprep.subr.mxu0 0.0
        %878 = vmatpush1.msra.mxu0 %v867
        %879 = vmatprep.subr.mxu0 0.0
        %880 = vmatpush1.msra.mxu0 %v866
        %881 = vmatprep.subr.mxu0 0.0
        %882 = vmatpush1.msra.mxu0 %v865
        %883 = vmatprep.subr.mxu0 0.0
        %884 = vmatpush1.msra.mxu0 %v864
        %885 = vmatprep.subr.mxu0 0.0
        %886 = vmatpush1.msra.mxu0 %v863
        %887 = vmatprep.subr.mxu0 0.0
        %888 = vmatpush1.msra.mxu0 %v862
        %889 = vmatprep.subr.mxu0 0.0
        %890 = vmatpush1.msra.mxu0 %v861
        %891 = vmatprep.subr.mxu0 0.0
        %892 = vmatpush1.msra.mxu0 %v860
        %893 = vmatprep.subr.mxu0 0.0
        %894 = vmatpush1.msra.mxu0 %v859
        %895 = vmatprep.subr.mxu0 0.0
        %896 = vmatpush1.msra.mxu0 %v858
        %897 = vmatprep.subr.mxu0 0.0
        %898 = vmatpush1.msra.mxu0 %v857
        %899 = vmatprep.subr.mxu0 0.0
        %900 = vmatpush1.msra.mxu0 %v856
        %901 = vmatprep.subr.mxu0 0.0
        %902 = vmatpush1.msra.mxu0 %v855
        %903 = vmatprep.subr.mxu0 0.0
        %904 = vmatpush2.msra.mxu0 0.0
        %905 = vmatprep.subr.mxu0 0.0
        %906 = vmatpush2.msra.mxu0 0.0
        %907 = vmatprep.subr.mxu0 0.0
        %908 = vmatpush2.msra.mxu0 0.0
        %909 = vmatprep.subr.mxu0 0.0
        %910 = vmatpush2.msra.mxu0 0.0
        %911 = vmatprep.subr.mxu0 0.0
        %912 = vmatpush2.msra.mxu0 0.0
        %913 = vmatprep.subr.mxu0 0.0
        %914 = vmatpush2.msra.mxu0 0.0
        %915 = vmatprep.subr.mxu0 0.0
        %916 = vmatpush2.msra.mxu0 0.0
        %917 = vmatprep.subr.mxu0 0.0
        %918 = vmatpush2.msra.mxu0 0.0
        %919 = vmatprep.subr.mxu0 0.0
        %920 = vmatpush2.msra.mxu0 0.0
        %921 = vmatprep.subr.mxu0 0.0
        %922 = vmatpush2.msra.mxu0 0.0
        %923 = vmatprep.subr.mxu0 0.0
        %924 = vmatpush2.msra.mxu0 0.0
        %925 = vmatprep.subr.mxu0 0.0
        %926 = vmatpush2.msra.mxu0 0.0
        %927 = vmatprep.subr.mxu0 0.0
        %928 = vmatpush2.msra.mxu0 0.0
        %929 = vmatprep.subr.mxu0 0.0
        %930 = vmatpush2.msra.mxu0 0.0
        %931 = vmatprep.subr.mxu0 0.0
        %932 = vmatpush2.msra.mxu0 0.0
        %933 = vmatprep.subr.mxu0 0.0
        %934 = vmatpush2.msra.mxu0 0.0
        %935 = vmatprep.mubr.f32.mxu0 0.0
        %936 = vmatmul.mubr.f32.gmra.mxu0 %v762
        %v937 = vpop.f32.mrf.mxu0
        %v938 = vadd.f32 0.0, %v937
        %v939 = vpop.f32.mrf.mxu0
        %940 = vmatprep.mubr.f32.mxu0 0.0
        %941 = vmatmul.mubr.f32.gmra.mxu0 %v763
        %v942 = vpop.f32.mrf.mxu0
        %v943 = vadd.f32 0.0, %v942
        %v944 = vpop.f32.mrf.mxu0
        %945 = vdwg.mxu0
        %v946 = vld [vmem:[#allocation11] sm:$0xff]
        %v947 = vld [vmem:[#allocation11 + $0x8] sm:$0xff]
        %v948 = vld [vmem:[#allocation11 + $0x10] sm:$0xff]
        %v949 = vld [vmem:[#allocation11 + $0x18] sm:$0xff]
        %v950 = vld [vmem:[#allocation11 + $0x20] sm:$0xff]
        %v951 = vld [vmem:[#allocation11 + $0x28] sm:$0xff]
        %v952 = vld [vmem:[#allocation11 + $0x30] sm:$0xff]
        %v953 = vld [vmem:[#allocation11 + $0x38] sm:$0xff]
        %v954 = vld [vmem:[#allocation11 + $0x40] sm:$0xff]
        %v955 = vld [vmem:[#allocation11 + $0x48] sm:$0xff]
        %v956 = vld [vmem:[#allocation11 + $0x50] sm:$0xff]
        %v957 = vld [vmem:[#allocation11 + $0x58] sm:$0xff]
        %v958 = vld [vmem:[#allocation11 + $0x60] sm:$0xff]
        %v959 = vld [vmem:[#allocation11 + $0x68] sm:$0xff]
        %v960 = vld [vmem:[#allocation11 + $0x70] sm:$0xff]
        %v961 = vld [vmem:[#allocation11 + $0x78] sm:$0xff]
        %962 = vmatprep.subr.mxu0 0.0
        %963 = vmatpush1.msra.mxu0 %v961
        %964 = vmatprep.subr.mxu0 0.0
        %965 = vmatpush1.msra.mxu0 %v960
        %966 = vmatprep.subr.mxu0 0.0
        %967 = vmatpush1.msra.mxu0 %v959
        %968 = vmatprep.subr.mxu0 0.0
        %969 = vmatpush1.msra.mxu0 %v958
        %970 = vmatprep.subr.mxu0 0.0
        %971 = vmatpush1.msra.mxu0 %v957
        %972 = vmatprep.subr.mxu0 0.0
        %973 = vmatpush1.msra.mxu0 %v956
        %974 = vmatprep.subr.mxu0 0.0
        %975 = vmatpush1.msra.mxu0 %v955
        %976 = vmatprep.subr.mxu0 0.0
        %977 = vmatpush1.msra.mxu0 %v954
        %978 = vmatprep.subr.mxu0 0.0
        %979 = vmatpush1.msra.mxu0 %v953
        %980 = vmatprep.subr.mxu0 0.0
        %981 = vmatpush1.msra.mxu0 %v952
        %982 = vmatprep.subr.mxu0 0.0
        %983 = vmatpush1.msra.mxu0 %v951
        %984 = vmatprep.subr.mxu0 0.0
        %985 = vmatpush1.msra.mxu0 %v950
        %986 = vmatprep.subr.mxu0 0.0
        %987 = vmatpush1.msra.mxu0 %v949
        %988 = vmatprep.subr.mxu0 0.0
        %989 = vmatpush1.msra.mxu0 %v948
        %990 = vmatprep.subr.mxu0 0.0
        %991 = vmatpush1.msra.mxu0 %v947
        %992 = vmatprep.subr.mxu0 0.0
        %993 = vmatpush1.msra.mxu0 %v946
        %994 = vmatprep.subr.mxu0 0.0
        %995 = vmatpush2.msra.mxu0 0.0
        %996 = vmatprep.subr.mxu0 0.0
        %997 = vmatpush2.msra.mxu0 0.0
        %998 = vmatprep.subr.mxu0 0.0
        %999 = vmatpush2.msra.mxu0 0.0
        %1000 = vmatprep.subr.mxu0 0.0
        %1001 = vmatpush2.msra.mxu0 0.0
        %1002 = vmatprep.subr.mxu0 0.0
        %1003 = vmatpush2.msra.mxu0 0.0
        %1004 = vmatprep.subr.mxu0 0.0
        %1005 = vmatpush2.msra.mxu0 0.0
        %1006 = vmatprep.subr.mxu0 0.0
        %1007 = vmatpush2.msra.mxu0 0.0
        %1008 = vmatprep.subr.mxu0 0.0
        %1009 = vmatpush2.msra.mxu0 0.0
        %1010 = vmatprep.subr.mxu0 0.0
        %1011 = vmatpush2.msra.mxu0 0.0
        %1012 = vmatprep.subr.mxu0 0.0
        %1013 = vmatpush2.msra.mxu0 0.0
        %1014 = vmatprep.subr.mxu0 0.0
        %1015 = vmatpush2.msra.mxu0 0.0
        %1016 = vmatprep.subr.mxu0 0.0
        %1017 = vmatpush2.msra.mxu0 0.0
        %1018 = vmatprep.subr.mxu0 0.0
        %1019 = vmatpush2.msra.mxu0 0.0
        %1020 = vmatprep.subr.mxu0 0.0
        %1021 = vmatpush2.msra.mxu0 0.0
        %1022 = vmatprep.subr.mxu0 0.0
        %1023 = vmatpush2.msra.mxu0 0.0
        %1024 = vmatprep.subr.mxu0 0.0
        %1025 = vmatpush2.msra.mxu0 0.0
        %1026 = vmatprep.mubr.f32.mxu0 0.0
        %1027 = vmatmul.mubr.f32.gmra.mxu0 %v762
        %v1028 = vpop.f32.mrf.mxu0
        %v1029 = vadd.f32 0.0, %v1028
        %v1030 = vpop.f32.mrf.mxu0
        %1031 = vmatprep.mubr.f32.mxu0 0.0
        %1032 = vmatmul.mubr.f32.gmra.mxu0 %v763
        %v1033 = vpop.f32.mrf.mxu0
        %v1034 = vadd.f32 0.0, %v1033
        %v1035 = vpop.f32.mrf.mxu0
        %1036 = vdwg.mxu0
        %1037 = vmatprep.subr.mxu0 0.0
        %1038 = vmatpush1.xpose.msra.mxu0 0.0
        %1039 = vmatprep.subr.mxu0 0.0
        %1040 = vmatpush1.xpose.msra.mxu0 0.0
        %1041 = vmatprep.subr.mxu0 0.0
        %1042 = vmatpush1.xpose.msra.mxu0 0.0
        %1043 = vmatprep.subr.mxu0 0.0
        %1044 = vmatpush1.xpose.msra.mxu0 0.0
        %1045 = vmatprep.subr.mxu0 0.0
        %1046 = vmatpush1.xpose.msra.mxu0 0.0
        %1047 = vmatprep.subr.mxu0 0.0
        %1048 = vmatpush1.xpose.msra.mxu0 0.0
        %1049 = vmatprep.subr.mxu0 0.0
        %1050 = vmatpush1.xpose.msra.mxu0 0.0
        %1051 = vmatprep.subr.mxu0 0.0
        %1052 = vmatpush1.xpose.msra.mxu0 0.0
        %1053 = vmatprep.subr.mxu0 0.0
        %1054 = vmatpush1.xpose.msra.mxu0 0.0
        %1055 = vmatprep.subr.mxu0 0.0
        %1056 = vmatpush1.xpose.msra.mxu0 0.0
        %1057 = vmatprep.subr.mxu0 0.0
        %1058 = vmatpush1.xpose.msra.mxu0 0.0
        %1059 = vmatprep.subr.mxu0 0.0
        %1060 = vmatpush1.xpose.msra.mxu0 0.0
        %1061 = vmatprep.subr.mxu0 0.0
        %1062 = vmatpush1.xpose.msra.mxu0 0.0
        %1063 = vmatprep.subr.mxu0 0.0
        %1064 = vmatpush1.xpose.msra.mxu0 0.0
        %1065 = vmatprep.subr.mxu0 0.0
        %1066 = vmatpush1.xpose.msra.mxu0 %v943
        %1067 = vmatprep.subr.mxu0 0.0
        %1068 = vmatpush1.xpose.msra.mxu0 %v938
        %1069 = vmatprep.subr.mxu0 0.0
        %1070 = vmatpush2.xpose.msra.mxu0 0.0
        %1071 = vmatprep.subr.mxu0 0.0
        %1072 = vmatpush2.xpose.msra.mxu0 0.0
        %1073 = vmatprep.subr.mxu0 0.0
        %1074 = vmatpush2.xpose.msra.mxu0 0.0
        %1075 = vmatprep.subr.mxu0 0.0
        %1076 = vmatpush2.xpose.msra.mxu0 0.0
        %1077 = vmatprep.subr.mxu0 0.0
        %1078 = vmatpush2.xpose.msra.mxu0 0.0
        %1079 = vmatprep.subr.mxu0 0.0
        %1080 = vmatpush2.xpose.msra.mxu0 0.0
        %1081 = vmatprep.subr.mxu0 0.0
        %1082 = vmatpush2.xpose.msra.mxu0 0.0
        %1083 = vmatprep.subr.mxu0 0.0
        %1084 = vmatpush2.xpose.msra.mxu0 0.0
        %1085 = vmatprep.subr.mxu0 0.0
        %1086 = vmatpush2.xpose.msra.mxu0 0.0
        %1087 = vmatprep.subr.mxu0 0.0
        %1088 = vmatpush2.xpose.msra.mxu0 0.0
        %1089 = vmatprep.subr.mxu0 0.0
        %1090 = vmatpush2.xpose.msra.mxu0 0.0
        %1091 = vmatprep.subr.mxu0 0.0
        %1092 = vmatpush2.xpose.msra.mxu0 0.0
        %1093 = vmatprep.subr.mxu0 0.0
        %1094 = vmatpush2.xpose.msra.mxu0 0.0
        %1095 = vmatprep.subr.mxu0 0.0
        %1096 = vmatpush2.xpose.msra.mxu0 0.0
        %1097 = vmatprep.subr.mxu0 0.0
        %1098 = vmatpush2.xpose.msra.mxu0 0.0
        %1099 = vmatprep.subr.mxu0 0.0
        %1100 = vmatpush2.xpose.msra.mxu0 0.0
        %1101 = vmatprep.mubr.f32.mxu0 0.0
        %1102 = vmatmul.mubr.f32.gmra.mxu0 %v847
        %v1103 = vpop.f32.mrf.mxu0
        %v1104 = vadd.f32 0.0, %v1103
        %v1105 = vpop.f32.mrf.mxu0
        %1106 = vmatprep.mubr.f32.mxu0 0.0
        %1107 = vmatmul.mubr.f32.gmra.mxu0 %v852
        %v1108 = vpop.f32.mrf.mxu0
        %v1109 = vadd.f32 0.0, %v1108
        %v1110 = vpop.f32.mrf.mxu0
        %1111 = vdwg.mxu0
        %v1112 = vmul.f32 %v1104, 0.088388346
        %v1113 = vmul.f32 %v1109, 0.088388346
        %v1114 = vlaneseq
        %v1115 = vshrl.u32 %v1114, 7
        %v1116 = vadd.s32 %v1115, 8
        %v1117 = vlaneseq
        %v1118 = vand.u32 %v1117, 127
        %vm1119 = vcmp.gt.s32.totalorder %v1118, %v1115
        %vm1120 = vcmp.gt.s32.totalorder %v1118, %v1116
        %v1121 = vsel %vm1119, -3.4028235e+38, %v1112
        %v1122 = vsel %vm1120, -3.4028235e+38, %v1113
        %vm1123 = vcmask 130048
        %v1124 = vsel %vm1123, %v1121, -inf
        %1125 = vmax.xlane.f32.xlu0 %v1124
        %v1126 = vpop.xlane.xlu0 %1125
        %v1127 = vsel %vm1123, %v1122, -inf
        %1128 = vmax.xlane.f32.xlu0 %v1127
        %v1129 = vpop.xlane.xlu0 %1128
        %v1130 = vsub.f32 %v1121, %v1126
        %v1131 = vsub.f32 %v1122, %v1129
        %v1132 = vmul.f32 %v1130, 1.442695
        %v1133 = vpow.pop %v1132
        %v1134 = vmul.f32 %v1131, 1.442695
        %v1135 = vpow.pop %v1134
        %v1136 = vsel %vm1123, %v1133, 0.0
        %1137 = vadd.xlane.f32.xlu0 %v1136
        %v1138 = vpop.xlane.xlu0 %1137
        %v1139 = vsel %vm1123, %v1135, 0.0
        %1140 = vadd.xlane.f32.xlu0 %v1139
        %v1141 = vpop.xlane.xlu0 %1140
        %v1142 = vrcp.pop %v1138
        %v1143 = vrcp.pop %v1141
        %v1144 = vmul.f32 %v1133, %v1142
        %v1145 = vmul.f32 %v1135, %v1143
        %v1147 = vsel %vm1123, %v1144, 0
        %v1150 = vsel %vm1123, %v1145, 0
        %1152 = vmatprep.subr.mxu0 0.0
        %1153 = vmatpush1.msra.mxu0 0.0
        %1154 = vmatprep.subr.mxu0 0.0
        %1155 = vmatpush1.msra.mxu0 0.0
        %1156 = vmatprep.subr.mxu0 0.0
        %1157 = vmatpush1.msra.mxu0 0.0
        %1158 = vmatprep.subr.mxu0 0.0
        %1159 = vmatpush1.msra.mxu0 0.0
        %1160 = vmatprep.subr.mxu0 0.0
        %1161 = vmatpush1.msra.mxu0 0.0
        %1162 = vmatprep.subr.mxu0 0.0
        %1163 = vmatpush1.msra.mxu0 0.0
        %1164 = vmatprep.subr.mxu0 0.0
        %1165 = vmatpush1.msra.mxu0 0.0
        %1166 = vmatprep.subr.mxu0 0.0
        %1167 = vmatpush1.msra.mxu0 0.0
        %1168 = vmatprep.subr.mxu0 0.0
        %1169 = vmatpush1.msra.mxu0 0.0
        %1170 = vmatprep.subr.mxu0 0.0
        %1171 = vmatpush1.msra.mxu0 0.0
        %1172 = vmatprep.subr.mxu0 0.0
        %1173 = vmatpush1.msra.mxu0 0.0
        %1174 = vmatprep.subr.mxu0 0.0
        %1175 = vmatpush1.msra.mxu0 0.0
        %1176 = vmatprep.subr.mxu0 0.0
        %1177 = vmatpush1.msra.mxu0 0.0
        %1178 = vmatprep.subr.mxu0 0.0
        %1179 = vmatpush1.msra.mxu0 0.0
        %1180 = vmatprep.subr.mxu0 0.0
        %1181 = vmatpush1.msra.mxu0 %v1034
        %1182 = vmatprep.subr.mxu0 0.0
        %1183 = vmatpush1.msra.mxu0 %v1029
        %1184 = vmatprep.subr.mxu0 0.0
        %1185 = vmatpush2.msra.mxu0 0.0
        %1186 = vmatprep.subr.mxu0 0.0
        %1187 = vmatpush2.msra.mxu0 0.0
        %1188 = vmatprep.subr.mxu0 0.0
        %1189 = vmatpush2.msra.mxu0 0.0
        %1190 = vmatprep.subr.mxu0 0.0
        %1191 = vmatpush2.msra.mxu0 0.0
        %1192 = vmatprep.subr.mxu0 0.0
        %1193 = vmatpush2.msra.mxu0 0.0
        %1194 = vmatprep.subr.mxu0 0.0
        %1195 = vmatpush2.msra.mxu0 0.0
        %1196 = vmatprep.subr.mxu0 0.0
        %1197 = vmatpush2.msra.mxu0 0.0
        %1198 = vmatprep.subr.mxu0 0.0
        %1199 = vmatpush2.msra.mxu0 0.0
        %1200 = vmatprep.subr.mxu0 0.0
        %1201 = vmatpush2.msra.mxu0 0.0
        %1202 = vmatprep.subr.mxu0 0.0
        %1203 = vmatpush2.msra.mxu0 0.0
        %1204 = vmatprep.subr.mxu0 0.0
        %1205 = vmatpush2.msra.mxu0 0.0
        %1206 = vmatprep.subr.mxu0 0.0
        %1207 = vmatpush2.msra.mxu0 0.0
        %1208 = vmatprep.subr.mxu0 0.0
        %1209 = vmatpush2.msra.mxu0 0.0
        %1210 = vmatprep.subr.mxu0 0.0
        %1211 = vmatpush2.msra.mxu0 0.0
        %1212 = vmatprep.subr.mxu0 0.0
        %1213 = vmatpush2.msra.mxu0 0.0
        %1214 = vmatprep.subr.mxu0 0.0
        %1215 = vmatpush2.msra.mxu0 0.0
        %1216 = vmatprep.mubr.f32.mxu0 0.0
        %1217 = vmatmul.mubr.f32.gmra.mxu0 %v1147
        %v1218 = vpop.f32.mrf.mxu0
        %v1219 = vadd.f32 0.0, %v1218
        %v1220 = vpop.f32.mrf.mxu0
        %1221 = vmatprep.mubr.f32.mxu0 0.0
        %1222 = vmatmul.mubr.f32.gmra.mxu0 %v1150
        %v1223 = vpop.f32.mrf.mxu0
        %v1224 = vadd.f32 0.0, %v1223
        %v1225 = vpop.f32.mrf.mxu0
        %1226 = vdwg.mxu0
        %v1227 = vld [vmem:[#allocation13] sm:$0xff]
        %v1228 = vld [vmem:[#allocation13 + $0x8] sm:$0xff]
        %v1229 = vld [vmem:[#allocation13 + $0x10] sm:$0xff]
        %v1230 = vld [vmem:[#allocation13 + $0x18] sm:$0xff]
        %v1231 = vld [vmem:[#allocation13 + $0x20] sm:$0xff]
        %v1232 = vld [vmem:[#allocation13 + $0x28] sm:$0xff]
        %v1233 = vld [vmem:[#allocation13 + $0x30] sm:$0xff]
        %v1234 = vld [vmem:[#allocation13 + $0x38] sm:$0xff]
        %v1235 = vld [vmem:[#allocation13 + $0x40] sm:$0xff]
        %v1236 = vld [vmem:[#allocation13 + $0x48] sm:$0xff]
        %v1237 = vld [vmem:[#allocation13 + $0x50] sm:$0xff]
        %v1238 = vld [vmem:[#allocation13 + $0x58] sm:$0xff]
        %v1239 = vld [vmem:[#allocation13 + $0x60] sm:$0xff]
        %v1240 = vld [vmem:[#allocation13 + $0x68] sm:$0xff]
        %v1241 = vld [vmem:[#allocation13 + $0x70] sm:$0xff]
        %v1242 = vld [vmem:[#allocation13 + $0x78] sm:$0xff]
        %v1243 = vld [vmem:[#allocation13 + $0x80] sm:$0xff]
        %v1244 = vld [vmem:[#allocation13 + $0x88] sm:$0xff]
        %v1245 = vld [vmem:[#allocation13 + $0x90] sm:$0xff]
        %v1246 = vld [vmem:[#allocation13 + $0x98] sm:$0xff]
        %v1247 = vld [vmem:[#allocation13 + $0xa0] sm:$0xff]
        %v1248 = vld [vmem:[#allocation13 + $0xa8] sm:$0xff]
        %v1249 = vld [vmem:[#allocation13 + $0xb0] sm:$0xff]
        %v1250 = vld [vmem:[#allocation13 + $0xb8] sm:$0xff]
        %v1251 = vld [vmem:[#allocation13 + $0xc0] sm:$0xff]
        %v1252 = vld [vmem:[#allocation13 + $0xc8] sm:$0xff]
        %v1253 = vld [vmem:[#allocation13 + $0xd0] sm:$0xff]
        %v1254 = vld [vmem:[#allocation13 + $0xd8] sm:$0xff]
        %v1255 = vld [vmem:[#allocation13 + $0xe0] sm:$0xff]
        %v1256 = vld [vmem:[#allocation13 + $0xe8] sm:$0xff]
        %v1257 = vld [vmem:[#allocation13 + $0xf0] sm:$0xff]
        %v1258 = vld [vmem:[#allocation13 + $0xf8] sm:$0xff]
        %v1259 = vld [vmem:[%s7] sm:$0x3]
        %v1261 = vlaneseq
        %v1262 = vshrl.u32 %v1261, 7
        %v1263 = vsub.s32 0, %v1262
        %v1264 = vrot.slane %v1259, %v1263
        %v1265 = vlaneseq
        %v1266 = vshrl.u32 %v1265, 7
        %v1267 = vsub.s32 1, %v1266
        %v1268 = vrot.slane %v1259, %v1267
        %1271 = vmatprep.subr.mxu0 %v1258
        %1272 = vmatpush1.msra.mxu0 %v1257
        %1273 = vmatprep.subr.mxu0 %v1256
        %1274 = vmatpush1.msra.mxu0 %v1255
        %1275 = vmatprep.subr.mxu0 %v1254
        %1276 = vmatpush1.msra.mxu0 %v1253
        %1277 = vmatprep.subr.mxu0 %v1252
        %1278 = vmatpush1.msra.mxu0 %v1251
        %1279 = vmatprep.subr.mxu0 %v1250
        %1280 = vmatpush1.msra.mxu0 %v1249
        %1281 = vmatprep.subr.mxu0 %v1248
        %1282 = vmatpush1.msra.mxu0 %v1247
        %1283 = vmatprep.subr.mxu0 %v1246
        %1284 = vmatpush1.msra.mxu0 %v1245
        %1285 = vmatprep.subr.mxu0 %v1244
        %1286 = vmatpush1.msra.mxu0 %v1243
        %1287 = vmatprep.subr.mxu0 %v1242
        %1288 = vmatpush1.msra.mxu0 %v1241
        %1289 = vmatprep.subr.mxu0 %v1240
        %1290 = vmatpush1.msra.mxu0 %v1239
        %1291 = vmatprep.subr.mxu0 %v1238
        %1292 = vmatpush1.msra.mxu0 %v1237
        %1293 = vmatprep.subr.mxu0 %v1236
        %1294 = vmatpush1.msra.mxu0 %v1235
        %1295 = vmatprep.subr.mxu0 %v1234
        %1296 = vmatpush1.msra.mxu0 %v1233
        %1297 = vmatprep.subr.mxu0 %v1232
        %1298 = vmatpush1.msra.mxu0 %v1231
        %1299 = vmatprep.subr.mxu0 %v1230
        %1300 = vmatpush1.msra.mxu0 %v1229
        %1301 = vmatprep.subr.mxu0 %v1228
        %1302 = vmatpush1.msra.mxu0 %v1227
        %1303 = vmatprep.subr.mxu0 0.0
        %1304 = vmatpush2.msra.mxu0 0.0
        %1305 = vmatprep.subr.mxu0 0.0
        %1306 = vmatpush2.msra.mxu0 0.0
        %1307 = vmatprep.subr.mxu0 0.0
        %1308 = vmatpush2.msra.mxu0 0.0
        %1309 = vmatprep.subr.mxu0 0.0
        %1310 = vmatpush2.msra.mxu0 0.0
        %1311 = vmatprep.subr.mxu0 0.0
        %1312 = vmatpush2.msra.mxu0 0.0
        %1313 = vmatprep.subr.mxu0 0.0
        %1314 = vmatpush2.msra.mxu0 0.0
        %1315 = vmatprep.subr.mxu0 0.0
        %1316 = vmatpush2.msra.mxu0 0.0
        %1317 = vmatprep.subr.mxu0 0.0
        %1318 = vmatpush2.msra.mxu0 0.0
        %1319 = vmatprep.subr.mxu0 0.0
        %1320 = vmatpush2.msra.mxu0 0.0
        %1321 = vmatprep.subr.mxu0 0.0
        %1322 = vmatpush2.msra.mxu0 0.0
        %1323 = vmatprep.subr.mxu0 0.0
        %1324 = vmatpush2.msra.mxu0 0.0
        %1325 = vmatprep.subr.mxu0 0.0
        %1326 = vmatpush2.msra.mxu0 0.0
        %1327 = vmatprep.subr.mxu0 0.0
        %1328 = vmatpush2.msra.mxu0 0.0
        %1329 = vmatprep.subr.mxu0 0.0
        %1330 = vmatpush2.msra.mxu0 0.0
        %1331 = vmatprep.subr.mxu0 0.0
        %1332 = vmatpush2.msra.mxu0 0.0
        %1333 = vmatprep.subr.mxu0 0.0
        %1334 = vmatpush2.msra.mxu0 0.0
        %1335 = vmatprep.mubr.f32.mxu0 0.0
        %1336 = vmatmul.mubr.f32.gmra.mxu0 %v1219
        %v1337 = vpop.f32.mrf.mxu0
        %v1338 = vadd.f32 %v1264, %v1337
        %v1339 = vpop.f32.mrf.mxu0
        %v1340 = vadd.f32 %v1268, %v1339
        %1341 = vmatprep.mubr.f32.mxu0 0.0
        %1342 = vmatmul.mubr.f32.gmra.mxu0 %v1224
        %v1343 = vpop.f32.mrf.mxu0
        %v1344 = vadd.f32 %v1264, %v1343
        %v1345 = vpop.f32.mrf.mxu0
        %v1346 = vadd.f32 %v1268, %v1345
        %1347 = vdwg.mxu0
        %v1348 = vld [vmem:[#allocation14] sm:$0xff]
        %v1349 = vld [vmem:[#allocation14 + $0x8] sm:$0xff]
        %v1350 = vld [vmem:[#allocation14 + $0x10] sm:$0xff]
        %v1351 = vld [vmem:[#allocation14 + $0x18] sm:$0xff]
        %v1352 = vld [vmem:[#allocation14 + $0x20] sm:$0xff]
        %v1353 = vld [vmem:[#allocation14 + $0x28] sm:$0xff]
        %v1354 = vld [vmem:[#allocation14 + $0x30] sm:$0xff]
        %v1355 = vld [vmem:[#allocation14 + $0x38] sm:$0xff]
        %v1356 = vld [vmem:[#allocation14 + $0x40] sm:$0xff]
        %v1357 = vld [vmem:[#allocation14 + $0x48] sm:$0xff]
        %v1358 = vld [vmem:[#allocation14 + $0x50] sm:$0xff]
        %v1359 = vld [vmem:[#allocation14 + $0x58] sm:$0xff]
        %v1360 = vld [vmem:[#allocation14 + $0x60] sm:$0xff]
        %v1361 = vld [vmem:[#allocation14 + $0x68] sm:$0xff]
        %v1362 = vld [vmem:[#allocation14 + $0x70] sm:$0xff]
        %v1363 = vld [vmem:[#allocation14 + $0x78] sm:$0xff]
        %v1364 = vld [vmem:[#allocation14 + $0x80] sm:$0xff]
        %v1365 = vld [vmem:[#allocation14 + $0x88] sm:$0xff]
        %v1366 = vld [vmem:[#allocation14 + $0x90] sm:$0xff]
        %v1367 = vld [vmem:[#allocation14 + $0x98] sm:$0xff]
        %v1368 = vld [vmem:[#allocation14 + $0xa0] sm:$0xff]
        %v1369 = vld [vmem:[#allocation14 + $0xa8] sm:$0xff]
        %v1370 = vld [vmem:[#allocation14 + $0xb0] sm:$0xff]
        %v1371 = vld [vmem:[#allocation14 + $0xb8] sm:$0xff]
        %v1372 = vld [vmem:[#allocation14 + $0xc0] sm:$0xff]
        %v1373 = vld [vmem:[#allocation14 + $0xc8] sm:$0xff]
        %v1374 = vld [vmem:[#allocation14 + $0xd0] sm:$0xff]
        %v1375 = vld [vmem:[#allocation14 + $0xd8] sm:$0xff]
        %v1376 = vld [vmem:[#allocation14 + $0xe0] sm:$0xff]
        %v1377 = vld [vmem:[#allocation14 + $0xe8] sm:$0xff]
        %v1378 = vld [vmem:[#allocation14 + $0xf0] sm:$0xff]
        %v1379 = vld [vmem:[#allocation14 + $0xf8] sm:$0xff]
        %v1380 = vld [vmem:[%s9] sm:$0x3]
        %v1382 = vlaneseq
        %v1383 = vshrl.u32 %v1382, 7
        %v1384 = vsub.s32 0, %v1383
        %v1385 = vrot.slane %v1380, %v1384
        %v1386 = vlaneseq
        %v1387 = vshrl.u32 %v1386, 7
        %v1388 = vsub.s32 1, %v1387
        %v1389 = vrot.slane %v1380, %v1388
        %1392 = vmatprep.subr.mxu0 %v1379
        %1393 = vmatpush1.msra.mxu0 %v1378
        %1394 = vmatprep.subr.mxu0 %v1377
        %1395 = vmatpush1.msra.mxu0 %v1376
        %1396 = vmatprep.subr.mxu0 %v1375
        %1397 = vmatpush1.msra.mxu0 %v1374
        %1398 = vmatprep.subr.mxu0 %v1373
        %1399 = vmatpush1.msra.mxu0 %v1372
        %1400 = vmatprep.subr.mxu0 %v1371
        %1401 = vmatpush1.msra.mxu0 %v1370
        %1402 = vmatprep.subr.mxu0 %v1369
        %1403 = vmatpush1.msra.mxu0 %v1368
        %1404 = vmatprep.subr.mxu0 %v1367
        %1405 = vmatpush1.msra.mxu0 %v1366
        %1406 = vmatprep.subr.mxu0 %v1365
        %1407 = vmatpush1.msra.mxu0 %v1364
        %1408 = vmatprep.subr.mxu0 %v1363
        %1409 = vmatpush1.msra.mxu0 %v1362
        %1410 = vmatprep.subr.mxu0 %v1361
        %1411 = vmatpush1.msra.mxu0 %v1360
        %1412 = vmatprep.subr.mxu0 %v1359
        %1413 = vmatpush1.msra.mxu0 %v1358
        %1414 = vmatprep.subr.mxu0 %v1357
        %1415 = vmatpush1.msra.mxu0 %v1356
        %1416 = vmatprep.subr.mxu0 %v1355
        %1417 = vmatpush1.msra.mxu0 %v1354
        %1418 = vmatprep.subr.mxu0 %v1353
        %1419 = vmatpush1.msra.mxu0 %v1352
        %1420 = vmatprep.subr.mxu0 %v1351
        %1421 = vmatpush1.msra.mxu0 %v1350
        %1422 = vmatprep.subr.mxu0 %v1349
        %1423 = vmatpush1.msra.mxu0 %v1348
        %1424 = vmatprep.subr.mxu0 0.0
        %1425 = vmatpush2.msra.mxu0 0.0
        %1426 = vmatprep.subr.mxu0 0.0
        %1427 = vmatpush2.msra.mxu0 0.0
        %1428 = vmatprep.subr.mxu0 0.0
        %1429 = vmatpush2.msra.mxu0 0.0
        %1430 = vmatprep.subr.mxu0 0.0
        %1431 = vmatpush2.msra.mxu0 0.0
        %1432 = vmatprep.subr.mxu0 0.0
        %1433 = vmatpush2.msra.mxu0 0.0
        %1434 = vmatprep.subr.mxu0 0.0
        %1435 = vmatpush2.msra.mxu0 0.0
        %1436 = vmatprep.subr.mxu0 0.0
        %1437 = vmatpush2.msra.mxu0 0.0
        %1438 = vmatprep.subr.mxu0 0.0
        %1439 = vmatpush2.msra.mxu0 0.0
        %1440 = vmatprep.subr.mxu0 0.0
        %1441 = vmatpush2.msra.mxu0 0.0
        %1442 = vmatprep.subr.mxu0 0.0
        %1443 = vmatpush2.msra.mxu0 0.0
        %1444 = vmatprep.subr.mxu0 0.0
        %1445 = vmatpush2.msra.mxu0 0.0
        %1446 = vmatprep.subr.mxu0 0.0
        %1447 = vmatpush2.msra.mxu0 0.0
        %1448 = vmatprep.subr.mxu0 0.0
        %1449 = vmatpush2.msra.mxu0 0.0
        %1450 = vmatprep.subr.mxu0 0.0
        %1451 = vmatpush2.msra.mxu0 0.0
        %1452 = vmatprep.subr.mxu0 0.0
        %1453 = vmatpush2.msra.mxu0 0.0
        %1454 = vmatprep.subr.mxu0 0.0
        %1455 = vmatpush2.msra.mxu0 0.0
        %1456 = vmatprep.mubr.f32.mxu0 0.0
        %1457 = vmatmul.mubr.f32.gmra.mxu0 %v762
        %v1458 = vpop.f32.mrf.mxu0
        %v1459 = vadd.f32 %v1385, %v1458
        %v1460 = vpop.f32.mrf.mxu0
        %v1461 = vadd.f32 %v1389, %v1460
        %1462 = vmatprep.mubr.f32.mxu0 0.0
        %1463 = vmatmul.mubr.f32.gmra.mxu0 %v763
        %v1464 = vpop.f32.mrf.mxu0
        %v1465 = vadd.f32 %v1385, %v1464
        %v1466 = vpop.f32.mrf.mxu0
        %v1467 = vadd.f32 %v1389, %v1466
        %1468 = vdwg.mxu0
        %v1469 = vmul.f32 %v1459, 0.5
        %v1470 = vmul.f32 %v1461, 0.5
        %v1471 = vmul.f32 %v1465, 0.5
        %v1472 = vmul.f32 %v1467, 0.5
        %v1473 = vmul.f32 %v1459, 0.044715
        %v1474 = vmul.f32 %v1461, 0.044715
        %v1475 = vmul.f32 %v1465, 0.044715
        %v1476 = vmul.f32 %v1467, 0.044715
        %v1477 = vmul.f32 %v1473, %v1459
        %v1478 = vmul.f32 %v1474, %v1461
        %v1479 = vmul.f32 %v1475, %v1465
        %v1480 = vmul.f32 %v1476, %v1467
        %v1481 = vmul.f32 %v1477, %v1459
        %v1482 = vmul.f32 %v1478, %v1461
        %v1483 = vmul.f32 %v1479, %v1465
        %v1484 = vmul.f32 %v1480, %v1467
        %v1485 = vadd.f32 %v1459, %v1481
        %v1486 = vadd.f32 %v1461, %v1482
        %v1487 = vadd.f32 %v1465, %v1483
        %v1488 = vadd.f32 %v1467, %v1484
        %v1489 = vmul.f32 %v1485, 0.7978846
        %v1490 = vmul.f32 %v1486, 0.7978846
        %v1491 = vmul.f32 %v1487, 0.7978846
        %v1492 = vmul.f32 %v1488, 0.7978846
        %v1493 = vtanh.pop %v1489
        %v1494 = vtanh.pop %v1490
        %v1495 = vtanh.pop %v1491
        %v1496 = vtanh.pop %v1492
        %v1497 = vadd.f32 %v1493, 1.0
        %v1498 = vadd.f32 %v1494, 1.0
        %v1499 = vadd.f32 %v1495, 1.0
        %v1500 = vadd.f32 %v1496, 1.0
        %v1501 = vmul.f32 %v1469, %v1497
        %v1502 = vmul.f32 %v1470, %v1498
        %v1503 = vmul.f32 %v1471, %v1499
        %v1504 = vmul.f32 %v1472, %v1500
        %v1505 = vld [vmem:[#allocation16] sm:$0xff]
        %v1506 = vld [vmem:[#allocation16 + $0x8] sm:$0xff]
        %v1507 = vld [vmem:[#allocation16 + $0x10] sm:$0xff]
        %v1508 = vld [vmem:[#allocation16 + $0x18] sm:$0xff]
        %v1509 = vld [vmem:[#allocation16 + $0x20] sm:$0xff]
        %v1510 = vld [vmem:[#allocation16 + $0x28] sm:$0xff]
        %v1511 = vld [vmem:[#allocation16 + $0x30] sm:$0xff]
        %v1512 = vld [vmem:[#allocation16 + $0x38] sm:$0xff]
        %v1513 = vld [vmem:[#allocation16 + $0x40] sm:$0xff]
        %v1514 = vld [vmem:[#allocation16 + $0x48] sm:$0xff]
        %v1515 = vld [vmem:[#allocation16 + $0x50] sm:$0xff]
        %v1516 = vld [vmem:[#allocation16 + $0x58] sm:$0xff]
        %v1517 = vld [vmem:[#allocation16 + $0x60] sm:$0xff]
        %v1518 = vld [vmem:[#allocation16 + $0x68] sm:$0xff]
        %v1519 = vld [vmem:[#allocation16 + $0x70] sm:$0xff]
        %v1520 = vld [vmem:[#allocation16 + $0x78] sm:$0xff]
        %v1521 = vld [vmem:[#allocation16 + $0x80] sm:$0xff]
        %v1522 = vld [vmem:[#allocation16 + $0x88] sm:$0xff]
        %v1523 = vld [vmem:[#allocation16 + $0x90] sm:$0xff]
        %v1524 = vld [vmem:[#allocation16 + $0x98] sm:$0xff]
        %v1525 = vld [vmem:[#allocation16 + $0xa0] sm:$0xff]
        %v1526 = vld [vmem:[#allocation16 + $0xa8] sm:$0xff]
        %v1527 = vld [vmem:[#allocation16 + $0xb0] sm:$0xff]
        %v1528 = vld [vmem:[#allocation16 + $0xb8] sm:$0xff]
        %v1529 = vld [vmem:[#allocation16 + $0xc0] sm:$0xff]
        %v1530 = vld [vmem:[#allocation16 + $0xc8] sm:$0xff]
        %v1531 = vld [vmem:[#allocation16 + $0xd0] sm:$0xff]
        %v1532 = vld [vmem:[#allocation16 + $0xd8] sm:$0xff]
        %v1533 = vld [vmem:[#allocation16 + $0xe0] sm:$0xff]
        %v1534 = vld [vmem:[#allocation16 + $0xe8] sm:$0xff]
        %v1535 = vld [vmem:[#allocation16 + $0xf0] sm:$0xff]
        %v1536 = vld [vmem:[#allocation16 + $0xf8] sm:$0xff]
        %v1537 = vld [vmem:[%s11] sm:$0x3]
        %v1539 = vlaneseq
        %v1540 = vshrl.u32 %v1539, 7
        %v1541 = vsub.s32 0, %v1540
        %v1542 = vrot.slane %v1537, %v1541
        %v1543 = vlaneseq
        %v1544 = vshrl.u32 %v1543, 7
        %v1545 = vsub.s32 1, %v1544
        %v1546 = vrot.slane %v1537, %v1545
        %1549 = vmatprep.subr.mxu0 %v1536
        %1550 = vmatpush1.msra.mxu0 %v1535
        %1551 = vmatprep.subr.mxu0 %v1534
        %1552 = vmatpush1.msra.mxu0 %v1533
        %1553 = vmatprep.subr.mxu0 %v1532
        %1554 = vmatpush1.msra.mxu0 %v1531
        %1555 = vmatprep.subr.mxu0 %v1530
        %1556 = vmatpush1.msra.mxu0 %v1529
        %1557 = vmatprep.subr.mxu0 %v1528
        %1558 = vmatpush1.msra.mxu0 %v1527
        %1559 = vmatprep.subr.mxu0 %v1526
        %1560 = vmatpush1.msra.mxu0 %v1525
        %1561 = vmatprep.subr.mxu0 %v1524
        %1562 = vmatpush1.msra.mxu0 %v1523
        %1563 = vmatprep.subr.mxu0 %v1522
        %1564 = vmatpush1.msra.mxu0 %v1521
        %1565 = vmatprep.subr.mxu0 %v1520
        %1566 = vmatpush1.msra.mxu0 %v1519
        %1567 = vmatprep.subr.mxu0 %v1518
        %1568 = vmatpush1.msra.mxu0 %v1517
        %1569 = vmatprep.subr.mxu0 %v1516
        %1570 = vmatpush1.msra.mxu0 %v1515
        %1571 = vmatprep.subr.mxu0 %v1514
        %1572 = vmatpush1.msra.mxu0 %v1513
        %1573 = vmatprep.subr.mxu0 %v1512
        %1574 = vmatpush1.msra.mxu0 %v1511
        %1575 = vmatprep.subr.mxu0 %v1510
        %1576 = vmatpush1.msra.mxu0 %v1509
        %1577 = vmatprep.subr.mxu0 %v1508
        %1578 = vmatpush1.msra.mxu0 %v1507
        %1579 = vmatprep.subr.mxu0 %v1506
        %1580 = vmatpush1.msra.mxu0 %v1505
        %1581 = vmatprep.subr.mxu0 0.0
        %1582 = vmatpush2.msra.mxu0 0.0
        %1583 = vmatprep.subr.mxu0 0.0
        %1584 = vmatpush2.msra.mxu0 0.0
        %1585 = vmatprep.subr.mxu0 0.0
        %1586 = vmatpush2.msra.mxu0 0.0
        %1587 = vmatprep.subr.mxu0 0.0
        %1588 = vmatpush2.msra.mxu0 0.0
        %1589 = vmatprep.subr.mxu0 0.0
        %1590 = vmatpush2.msra.mxu0 0.0
        %1591 = vmatprep.subr.mxu0 0.0
        %1592 = vmatpush2.msra.mxu0 0.0
        %1593 = vmatprep.subr.mxu0 0.0
        %1594 = vmatpush2.msra.mxu0 0.0
        %1595 = vmatprep.subr.mxu0 0.0
        %1596 = vmatpush2.msra.mxu0 0.0
        %1597 = vmatprep.subr.mxu0 0.0
        %1598 = vmatpush2.msra.mxu0 0.0
        %1599 = vmatprep.subr.mxu0 0.0
        %1600 = vmatpush2.msra.mxu0 0.0
        %1601 = vmatprep.subr.mxu0 0.0
        %1602 = vmatpush2.msra.mxu0 0.0
        %1603 = vmatprep.subr.mxu0 0.0
        %1604 = vmatpush2.msra.mxu0 0.0
        %1605 = vmatprep.subr.mxu0 0.0
        %1606 = vmatpush2.msra.mxu0 0.0
        %1607 = vmatprep.subr.mxu0 0.0
        %1608 = vmatpush2.msra.mxu0 0.0
        %1609 = vmatprep.subr.mxu0 0.0
        %1610 = vmatpush2.msra.mxu0 0.0
        %1611 = vmatprep.subr.mxu0 0.0
        %1612 = vmatpush2.msra.mxu0 0.0
        %1613 = vmatprep.mubr.f32.mxu0 0.0
        %1614 = vmatmul.mubr.f32.gmra.mxu0 %v762
        %v1615 = vpop.f32.mrf.mxu0
        %v1616 = vadd.f32 %v1542, %v1615
        %v1617 = vpop.f32.mrf.mxu0
        %v1618 = vadd.f32 %v1546, %v1617
        %1619 = vmatprep.mubr.f32.mxu0 0.0
        %1620 = vmatmul.mubr.f32.gmra.mxu0 %v763
        %v1621 = vpop.f32.mrf.mxu0
        %v1622 = vadd.f32 %v1542, %v1621
        %v1623 = vpop.f32.mrf.mxu0
        %v1624 = vadd.f32 %v1546, %v1623
        %1625 = vdwg.mxu0
        %v1626 = vmul.f32 %v1616, 0.5
        %v1627 = vmul.f32 %v1618, 0.5
        %v1628 = vmul.f32 %v1622, 0.5
        %v1629 = vmul.f32 %v1624, 0.5
        %v1630 = vmul.f32 %v1616, 0.044715
        %v1631 = vmul.f32 %v1618, 0.044715
        %v1632 = vmul.f32 %v1622, 0.044715
        %v1633 = vmul.f32 %v1624, 0.044715
        %v1634 = vmul.f32 %v1630, %v1616
        %v1635 = vmul.f32 %v1631, %v1618
        %v1636 = vmul.f32 %v1632, %v1622
        %v1637 = vmul.f32 %v1633, %v1624
        %v1638 = vmul.f32 %v1634, %v1616
        %v1639 = vmul.f32 %v1635, %v1618
        %v1640 = vmul.f32 %v1636, %v1622
        %v1641 = vmul.f32 %v1637, %v1624
        %v1642 = vadd.f32 %v1616, %v1638
        %v1643 = vadd.f32 %v1618, %v1639
        %v1644 = vadd.f32 %v1622, %v1640
        %v1645 = vadd.f32 %v1624, %v1641
        %v1646 = vmul.f32 %v1642, 0.7978846
        %v1647 = vmul.f32 %v1643, 0.7978846
        %v1648 = vmul.f32 %v1644, 0.7978846
        %v1649 = vmul.f32 %v1645, 0.7978846
        %v1650 = vtanh.pop %v1646
        %v1651 = vtanh.pop %v1647
        %v1652 = vtanh.pop %v1648
        %v1653 = vtanh.pop %v1649
        %v1654 = vadd.f32 %v1650, 1.0
        %v1655 = vadd.f32 %v1651, 1.0
        %v1656 = vadd.f32 %v1652, 1.0
        %v1657 = vadd.f32 %v1653, 1.0
        %v1658 = vmul.f32 %v1626, %v1654
        %v1659 = vmul.f32 %v1627, %v1655
        %v1660 = vmul.f32 %v1628, %v1656
        %v1661 = vmul.f32 %v1629, %v1657
        %v1662 = vld [vmem:[%s12] sm:$0x3]
        %v1663 = vld [vmem:[%s13] sm:$0x3]
        %v1664 = vadd.f32 %v1658, %v1659
        %1665 = vadd.xlane.f32.xlu0 %v1664
        %v1666 = vpop.xlane.xlu0 %1665
        %v1667 = vadd.f32 %v1660, %v1661
        %1668 = vadd.xlane.f32.xlu0 %v1667
        %v1669 = vpop.xlane.xlu0 %1668
        %v1670 = vrcp.pop 256.0
        %v1671 = vmul.f32 %v1666, %v1670
        %v1672 = vmul.f32 %v1669, %v1670
        %v1673 = vsub.f32 %v1658, %v1671
        %v1674 = vsub.f32 %v1659, %v1671
        %v1675 = vsub.f32 %v1660, %v1672
        %v1676 = vsub.f32 %v1661, %v1672
        %v1677 = vmul.f32 %v1673, %v1673
        %v1678 = vmul.f32 %v1674, %v1674
        %v1679 = vmul.f32 %v1675, %v1675
        %v1680 = vmul.f32 %v1676, %v1676
        %v1681 = vadd.f32 %v1677, %v1678
        %1682 = vadd.xlane.f32.xlu0 %v1681
        %v1683 = vpop.xlane.xlu0 %1682
        %v1684 = vadd.f32 %v1679, %v1680
        %1685 = vadd.xlane.f32.xlu0 %v1684
        %v1686 = vpop.xlane.xlu0 %1685
        %v1687 = vmul.f32 %v1683, %v1670
        %v1688 = vmul.f32 %v1686, %v1670
        %v1689 = vadd.f32 %v1687, 1e-05
        %v1690 = vadd.f32 %v1688, 1e-05
        %v1691 = vrsqrt.pop %v1689
        %v1692 = vrsqrt.pop %v1690
        %v1693 = vmul.f32 %v1673, %v1691
        %v1694 = vmul.f32 %v1674, %v1691
        %v1695 = vmul.f32 %v1675, %v1692
        %v1696 = vmul.f32 %v1676, %v1692
        %v1698 = vlaneseq
        %v1699 = vshrl.u32 %v1698, 7
        %v1700 = vsub.s32 0, %v1699
        %v1701 = vrot.slane %v1662, %v1700
        %v1702 = vlaneseq
        %v1703 = vshrl.u32 %v1702, 7
        %v1704 = vsub.s32 1, %v1703
        %v1705 = vrot.slane %v1662, %v1704
        %v1708 = vmul.f32 %v1693, %v1701
        %v1709 = vmul.f32 %v1694, %v1705
        %v1710 = vmul.f32 %v1695, %v1701
        %v1711 = vmul.f32 %v1696, %v1705
        %v1713 = vlaneseq
        %v1714 = vshrl.u32 %v1713, 7
        %v1715 = vsub.s32 0, %v1714
        %v1716 = vrot.slane %v1663, %v1715
        %v1717 = vlaneseq
        %v1718 = vshrl.u32 %v1717, 7
        %v1719 = vsub.s32 1, %v1718
        %v1720 = vrot.slane %v1663, %v1719
        %v1723 = vadd.f32 %v1708, %v1716
        %v1724 = vadd.f32 %v1709, %v1720
        %v1725 = vadd.f32 %v1710, %v1716
        %v1726 = vadd.f32 %v1711, %v1720
        %v1727 = vadd.s32 %v1118, 1
        %vm1728 = vcmp.eq.s32.totalorder %v1115, %v1727
        %vm1729 = vcmp.eq.s32.totalorder %v1116, %v1727
        %v1730 = vsel %vm1728, 1, 0
        %v1731 = vsel %vm1729, 1, 0
        %v1732 = vcvt.s32.f32 %v1730
        %v1733 = vcvt.s32.f32 %v1731
        %v1735 = vsel %vm1123, %v1732, 0
        %v1738 = vsel %vm1123, %v1733, 0
        %1740 = vmatprep.subr.mxu0 0.0
        %1741 = vmatpush1.msra.mxu0 0.0
        %1742 = vmatprep.subr.mxu0 0.0
        %1743 = vmatpush1.msra.mxu0 0.0
        %1744 = vmatprep.subr.mxu0 0.0
        %1745 = vmatpush1.msra.mxu0 0.0
        %1746 = vmatprep.subr.mxu0 0.0
        %1747 = vmatpush1.msra.mxu0 0.0
        %1748 = vmatprep.subr.mxu0 0.0
        %1749 = vmatpush1.msra.mxu0 0.0
        %1750 = vmatprep.subr.mxu0 0.0
        %1751 = vmatpush1.msra.mxu0 0.0
        %1752 = vmatprep.subr.mxu0 0.0
        %1753 = vmatpush1.msra.mxu0 0.0
        %1754 = vmatprep.subr.mxu0 0.0
        %1755 = vmatpush1.msra.mxu0 0.0
        %1756 = vmatprep.subr.mxu0 0.0
        %1757 = vmatpush1.msra.mxu0 0.0
        %1758 = vmatprep.subr.mxu0 0.0
        %1759 = vmatpush1.msra.mxu0 0.0
        %1760 = vmatprep.subr.mxu0 0.0
        %1761 = vmatpush1.msra.mxu0 0.0
        %1762 = vmatprep.subr.mxu0 0.0
        %1763 = vmatpush1.msra.mxu0 0.0
        %1764 = vmatprep.subr.mxu0 0.0
        %1765 = vmatpush1.msra.mxu0 0.0
        %1766 = vmatprep.subr.mxu0 0.0
        %1767 = vmatpush1.msra.mxu0 0.0
        %1768 = vmatprep.subr.mxu0 0.0
        %1769 = vmatpush1.msra.mxu0 %v1725
        %1770 = vmatprep.subr.mxu0 0.0
        %1771 = vmatpush1.msra.mxu0 %v1723
        %1772 = vmatprep.subr.mxu0 0.0
        %1773 = vmatpush2.msra.mxu0 0.0
        %1774 = vmatprep.subr.mxu0 0.0
        %1775 = vmatpush2.msra.mxu0 0.0
        %1776 = vmatprep.subr.mxu0 0.0
        %1777 = vmatpush2.msra.mxu0 0.0
        %1778 = vmatprep.subr.mxu0 0.0
        %1779 = vmatpush2.msra.mxu0 0.0
        %1780 = vmatprep.subr.mxu0 0.0
        %1781 = vmatpush2.msra.mxu0 0.0
        %1782 = vmatprep.subr.mxu0 0.0
        %1783 = vmatpush2.msra.mxu0 0.0
        %1784 = vmatprep.subr.mxu0 0.0
        %1785 = vmatpush2.msra.mxu0 0.0
        %1786 = vmatprep.subr.mxu0 0.0
        %1787 = vmatpush2.msra.mxu0 0.0
        %1788 = vmatprep.subr.mxu0 0.0
        %1789 = vmatpush2.msra.mxu0 0.0
        %1790 = vmatprep.subr.mxu0 0.0
        %1791 = vmatpush2.msra.mxu0 0.0
        %1792 = vmatprep.subr.mxu0 0.0
        %1793 = vmatpush2.msra.mxu0 0.0
        %1794 = vmatprep.subr.mxu0 0.0
        %1795 = vmatpush2.msra.mxu0 0.0
        %1796 = vmatprep.subr.mxu0 0.0
        %1797 = vmatpush2.msra.mxu0 0.0
        %1798 = vmatprep.subr.mxu0 0.0
        %1799 = vmatpush2.msra.mxu0 0.0
        %1800 = vmatprep.subr.mxu0 0.0
        %1801 = vmatpush2.msra.mxu0 0.0
        %1802 = vmatprep.subr.mxu0 0.0
        %1803 = vmatpush2.msra.mxu0 0.0
        %1804 = vmatprep.mubr.f32.mxu0 0.0
        %1805 = vmatmul.mubr.f32.gmra.mxu0 %v1735
        %v1806 = vpop.f32.mrf.mxu0
        %v1807 = vadd.f32 0.0, %v1806
        %v1808 = vpop.f32.mrf.mxu0
        %1809 = vmatprep.mubr.f32.mxu0 0.0
        %1810 = vmatmul.mubr.f32.gmra.mxu0 %v1738
        %v1811 = vpop.f32.mrf.mxu0
        %v1812 = vadd.f32 0.0, %v1811
        %v1813 = vpop.f32.mrf.mxu0
        %1814 = vdwg.mxu0
        %v1815 = vadd.s32 %v1115, 1
        %v1816 = vadd.s32 %v1116, 1
        %vm1817 = vcmp.eq.s32.totalorder %v1118, %v1815
        %vm1818 = vcmp.eq.s32.totalorder %v1118, %v1816
        %v1819 = vsel %vm1817, 1, 0
        %v1820 = vsel %vm1818, 1, 0
        %v1821 = vcvt.s32.f32 %v1819
        %v1822 = vcvt.s32.f32 %v1820
        %v1824 = vsel %vm1123, %v1821, 0
        %v1827 = vsel %vm1123, %v1822, 0
        %1829 = vmatprep.subr.mxu0 0.0
        %1830 = vmatpush1.msra.mxu0 0.0
        %1831 = vmatprep.subr.mxu0 0.0
        %1832 = vmatpush1.msra.mxu0 0.0
        %1833 = vmatprep.subr.mxu0 0.0
        %1834 = vmatpush1.msra.mxu0 0.0
        %1835 = vmatprep.subr.mxu0 0.0
        %1836 = vmatpush1.msra.mxu0 0.0
        %1837 = vmatprep.subr.mxu0 0.0
        %1838 = vmatpush1.msra.mxu0 0.0
        %1839 = vmatprep.subr.mxu0 0.0
        %1840 = vmatpush1.msra.mxu0 0.0
        %1841 = vmatprep.subr.mxu0 0.0
        %1842 = vmatpush1.msra.mxu0 0.0
        %1843 = vmatprep.subr.mxu0 0.0
        %1844 = vmatpush1.msra.mxu0 0.0
        %1845 = vmatprep.subr.mxu0 0.0
        %1846 = vmatpush1.msra.mxu0 0.0
        %1847 = vmatprep.subr.mxu0 0.0
        %1848 = vmatpush1.msra.mxu0 0.0
        %1849 = vmatprep.subr.mxu0 0.0
        %1850 = vmatpush1.msra.mxu0 0.0
        %1851 = vmatprep.subr.mxu0 0.0
        %1852 = vmatpush1.msra.mxu0 0.0
        %1853 = vmatprep.subr.mxu0 0.0
        %1854 = vmatpush1.msra.mxu0 0.0
        %1855 = vmatprep.subr.mxu0 0.0
        %1856 = vmatpush1.msra.mxu0 0.0
        %1857 = vmatprep.subr.mxu0 0.0
        %1858 = vmatpush1.msra.mxu0 %v1726
        %1859 = vmatprep.subr.mxu0 0.0
        %1860 = vmatpush1.msra.mxu0 %v1724
        %1861 = vmatprep.subr.mxu0 0.0
        %1862 = vmatpush2.msra.mxu0 0.0
        %1863 = vmatprep.subr.mxu0 0.0
        %1864 = vmatpush2.msra.mxu0 0.0
        %1865 = vmatprep.subr.mxu0 0.0
        %1866 = vmatpush2.msra.mxu0 0.0
        %1867 = vmatprep.subr.mxu0 0.0
        %1868 = vmatpush2.msra.mxu0 0.0
        %1869 = vmatprep.subr.mxu0 0.0
        %1870 = vmatpush2.msra.mxu0 0.0
        %1871 = vmatprep.subr.mxu0 0.0
        %1872 = vmatpush2.msra.mxu0 0.0
        %1873 = vmatprep.subr.mxu0 0.0
        %1874 = vmatpush2.msra.mxu0 0.0
        %1875 = vmatprep.subr.mxu0 0.0
        %1876 = vmatpush2.msra.mxu0 0.0
        %1877 = vmatprep.subr.mxu0 0.0
        %1878 = vmatpush2.msra.mxu0 0.0
        %1879 = vmatprep.subr.mxu0 0.0
        %1880 = vmatpush2.msra.mxu0 0.0
        %1881 = vmatprep.subr.mxu0 0.0
        %1882 = vmatpush2.msra.mxu0 0.0
        %1883 = vmatprep.subr.mxu0 0.0
        %1884 = vmatpush2.msra.mxu0 0.0
        %1885 = vmatprep.subr.mxu0 0.0
        %1886 = vmatpush2.msra.mxu0 0.0
        %1887 = vmatprep.subr.mxu0 0.0
        %1888 = vmatpush2.msra.mxu0 0.0
        %1889 = vmatprep.subr.mxu0 0.0
        %1890 = vmatpush2.msra.mxu0 0.0
        %1891 = vmatprep.subr.mxu0 0.0
        %1892 = vmatpush2.msra.mxu0 0.0
        %1893 = vmatprep.mubr.f32.mxu0 0.0
        %1894 = vmatmul.mubr.f32.gmra.mxu0 %v1824
        %v1895 = vpop.f32.mrf.mxu0
        %v1896 = vadd.f32 0.0, %v1895
        %v1897 = vpop.f32.mrf.mxu0
        %1898 = vmatprep.mubr.f32.mxu0 0.0
        %1899 = vmatmul.mubr.f32.gmra.mxu0 %v1827
        %v1900 = vpop.f32.mrf.mxu0
        %v1901 = vadd.f32 0.0, %v1900
        %v1902 = vpop.f32.mrf.mxu0
        %1903 = vdwg.mxu0
        %v1904 = vadd.f32 %v1807, %v1338
        %v1905 = vadd.f32 %v1896, %v1340
        %v1906 = vadd.f32 %v1812, %v1344
        %v1907 = vadd.f32 %v1901, %v1346
        %v1908 = vmul.f32 %v1904, 0.5
        %v1909 = vmul.f32 %v1905, 0.5
        %v1910 = vmul.f32 %v1906, 0.5
        %v1911 = vmul.f32 %v1907, 0.5
        %v1912 = vmul.f32 %v1904, 0.044715
        %v1913 = vmul.f32 %v1905, 0.044715
        %v1914 = vmul.f32 %v1906, 0.044715
        %v1915 = vmul.f32 %v1907, 0.044715
        %v1916 = vmul.f32 %v1912, %v1904
        %v1917 = vmul.f32 %v1913, %v1905
        %v1918 = vmul.f32 %v1914, %v1906
        %v1919 = vmul.f32 %v1915, %v1907
        %v1920 = vmul.f32 %v1916, %v1904
        %v1921 = vmul.f32 %v1917, %v1905
        %v1922 = vmul.f32 %v1918, %v1906
        %v1923 = vmul.f32 %v1919, %v1907
        %v1924 = vadd.f32 %v1904, %v1920
        %v1925 = vadd.f32 %v1905, %v1921
        %v1926 = vadd.f32 %v1906, %v1922
        %v1927 = vadd.f32 %v1907, %v1923
        %v1928 = vmul.f32 %v1924, 0.7978846
        %v1929 = vmul.f32 %v1925, 0.7978846
        %v1930 = vmul.f32 %v1926, 0.7978846
        %v1931 = vmul.f32 %v1927, 0.7978846
        %v1932 = vtanh.pop %v1928
        %v1933 = vtanh.pop %v1929
        %v1934 = vtanh.pop %v1930
        %v1935 = vtanh.pop %v1931
        %v1936 = vadd.f32 %v1932, 1.0
        %v1937 = vadd.f32 %v1933, 1.0
        %v1938 = vadd.f32 %v1934, 1.0
        %v1939 = vadd.f32 %v1935, 1.0
        %v1940 = vmul.f32 %v1908, %v1936
        %v1941 = vmul.f32 %v1909, %v1937
        %v1942 = vmul.f32 %v1910, %v1938
        %v1943 = vmul.f32 %v1911, %v1939
        %v1944 = vmul.f32 %v1940, %v1501
        %v1945 = vmul.f32 %v1941, %v1502
        %v1946 = vmul.f32 %v1942, %v1503
        %v1947 = vmul.f32 %v1943, %v1504
        %v1948 = vld [vmem:[#allocation17] sm:$0xff]
        %v1949 = vld [vmem:[#allocation17 + $0x8] sm:$0xff]
        %v1950 = vld [vmem:[#allocation17 + $0x10] sm:$0xff]
        %v1951 = vld [vmem:[#allocation17 + $0x18] sm:$0xff]
        %v1952 = vld [vmem:[#allocation17 + $0x20] sm:$0xff]
        %v1953 = vld [vmem:[#allocation17 + $0x28] sm:$0xff]
        %v1954 = vld [vmem:[#allocation17 + $0x30] sm:$0xff]
        %v1955 = vld [vmem:[#allocation17 + $0x38] sm:$0xff]
        %v1956 = vld [vmem:[#allocation17 + $0x40] sm:$0xff]
        %v1957 = vld [vmem:[#allocation17 + $0x48] sm:$0xff]
        %v1958 = vld [vmem:[#allocation17 + $0x50] sm:$0xff]
        %v1959 = vld [vmem:[#allocation17 + $0x58] sm:$0xff]
        %v1960 = vld [vmem:[#allocation17 + $0x60] sm:$0xff]
        %v1961 = vld [vmem:[#allocation17 + $0x68] sm:$0xff]
        %v1962 = vld [vmem:[#allocation17 + $0x70] sm:$0xff]
        %v1963 = vld [vmem:[#allocation17 + $0x78] sm:$0xff]
        %v1964 = vld [vmem:[#allocation17 + $0x80] sm:$0xff]
        %v1965 = vld [vmem:[#allocation17 + $0x88] sm:$0xff]
        %v1966 = vld [vmem:[#allocation17 + $0x90] sm:$0xff]
        %v1967 = vld [vmem:[#allocation17 + $0x98] sm:$0xff]
        %v1968 = vld [vmem:[#allocation17 + $0xa0] sm:$0xff]
        %v1969 = vld [vmem:[#allocation17 + $0xa8] sm:$0xff]
        %v1970 = vld [vmem:[#allocation17 + $0xb0] sm:$0xff]
        %v1971 = vld [vmem:[#allocation17 + $0xb8] sm:$0xff]
        %v1972 = vld [vmem:[#allocation17 + $0xc0] sm:$0xff]
        %v1973 = vld [vmem:[#allocation17 + $0xc8] sm:$0xff]
        %v1974 = vld [vmem:[#allocation17 + $0xd0] sm:$0xff]
        %v1975 = vld [vmem:[#allocation17 + $0xd8] sm:$0xff]
        %v1976 = vld [vmem:[#allocation17 + $0xe0] sm:$0xff]
        %v1977 = vld [vmem:[#allocation17 + $0xe8] sm:$0xff]
        %v1978 = vld [vmem:[#allocation17 + $0xf0] sm:$0xff]
        %v1979 = vld [vmem:[#allocation17 + $0xf8] sm:$0xff]
        %v1980 = vld [vmem:[%s15] sm:$0x1]
        %v1982 = vlaneseq
        %v1983 = vshrl.u32 %v1982, 7
        %v1984 = vsub.s32 0, %v1983
        %v1985 = vrot.slane %v1980, %v1984
        %1987 = vmatprep.subr.mxu0 0.0
        %1988 = vmatpush1.msra.mxu0 %v1963
        %1989 = vmatprep.subr.mxu0 0.0
        %1990 = vmatpush1.msra.mxu0 %v1962
        %1991 = vmatprep.subr.mxu0 0.0
        %1992 = vmatpush1.msra.mxu0 %v1961
        %1993 = vmatprep.subr.mxu0 0.0
        %1994 = vmatpush1.msra.mxu0 %v1960
        %1995 = vmatprep.subr.mxu0 0.0
        %1996 = vmatpush1.msra.mxu0 %v1959
        %1997 = vmatprep.subr.mxu0 0.0
        %1998 = vmatpush1.msra.mxu0 %v1958
        %1999 = vmatprep.subr.mxu0 0.0
        %2000 = vmatpush1.msra.mxu0 %v1957
        %2001 = vmatprep.subr.mxu0 0.0
        %2002 = vmatpush1.msra.mxu0 %v1956
        %2003 = vmatprep.subr.mxu0 0.0
        %2004 = vmatpush1.msra.mxu0 %v1955
        %2005 = vmatprep.subr.mxu0 0.0
        %2006 = vmatpush1.msra.mxu0 %v1954
        %2007 = vmatprep.subr.mxu0 0.0
        %2008 = vmatpush1.msra.mxu0 %v1953
        %2009 = vmatprep.subr.mxu0 0.0
        %2010 = vmatpush1.msra.mxu0 %v1952
        %2011 = vmatprep.subr.mxu0 0.0
        %2012 = vmatpush1.msra.mxu0 %v1951
        %2013 = vmatprep.subr.mxu0 0.0
        %2014 = vmatpush1.msra.mxu0 %v1950
        %2015 = vmatprep.subr.mxu0 0.0
        %2016 = vmatpush1.msra.mxu0 %v1949
        %2017 = vmatprep.subr.mxu0 0.0
        %2018 = vmatpush1.msra.mxu0 %v1948
        %2019 = vmatprep.subr.mxu0 0.0
        %2020 = vmatpush2.msra.mxu0 %v1979
        %2021 = vmatprep.subr.mxu0 0.0
        %2022 = vmatpush2.msra.mxu0 %v1978
        %2023 = vmatprep.subr.mxu0 0.0
        %2024 = vmatpush2.msra.mxu0 %v1977
        %2025 = vmatprep.subr.mxu0 0.0
        %2026 = vmatpush2.msra.mxu0 %v1976
        %2027 = vmatprep.subr.mxu0 0.0
        %2028 = vmatpush2.msra.mxu0 %v1975
        %2029 = vmatprep.subr.mxu0 0.0
        %2030 = vmatpush2.msra.mxu0 %v1974
        %2031 = vmatprep.subr.mxu0 0.0
        %2032 = vmatpush2.msra.mxu0 %v1973
        %2033 = vmatprep.subr.mxu0 0.0
        %2034 = vmatpush2.msra.mxu0 %v1972
        %2035 = vmatprep.subr.mxu0 0.0
        %2036 = vmatpush2.msra.mxu0 %v1971
        %2037 = vmatprep.subr.mxu0 0.0
        %2038 = vmatpush2.msra.mxu0 %v1970
        %2039 = vmatprep.subr.mxu0 0.0
        %2040 = vmatpush2.msra.mxu0 %v1969
        %2041 = vmatprep.subr.mxu0 0.0
        %2042 = vmatpush2.msra.mxu0 %v1968
        %2043 = vmatprep.subr.mxu0 0.0
        %2044 = vmatpush2.msra.mxu0 %v1967
        %2045 = vmatprep.subr.mxu0 0.0
        %2046 = vmatpush2.msra.mxu0 %v1966
        %2047 = vmatprep.subr.mxu0 0.0
        %2048 = vmatpush2.msra.mxu0 %v1965
        %2049 = vmatprep.subr.mxu0 0.0
        %2050 = vmatpush2.msra.mxu0 %v1964
        %2051 = vmatprep.mubr.f32.mxu0 %v1945
        %2052 = vmatmul.mubr.f32.gmra.mxu0 %v1944
        %v2053 = vpop.f32.mrf.mxu0
        %v2054 = vadd.f32 %v1985, %v2053
        %v2055 = vpop.f32.mrf.mxu0
        %2056 = vmatprep.mubr.f32.mxu0 %v1947
        %2057 = vmatmul.mubr.f32.gmra.mxu0 %v1946
        %v2058 = vpop.f32.mrf.mxu0
        %v2059 = vadd.f32 %v1985, %v2058
        %v2060 = vpop.f32.mrf.mxu0
        %2061 = vdwg.mxu0
        %v2062 = vadd.f32 %v721, %v2054
        %v2063 = vadd.f32 %v722, %v2059
        %v2064 = vld [vmem:[%s16] sm:$0x1]
        %v2065 = vld [vmem:[%s17] sm:$0x1]
        %2066 = vadd.xlane.f32.xlu0 %v2062
        %v2067 = vpop.xlane.xlu0 %2066
        %2068 = vadd.xlane.f32.xlu0 %v2063
        %v2069 = vpop.xlane.xlu0 %2068
        %v2070 = vmul.f32 %v2067, %v729
        %v2071 = vmul.f32 %v2069, %v729
        %v2072 = vsub.f32 %v2062, %v2070
        %v2073 = vsub.f32 %v2063, %v2071
        %v2074 = vmul.f32 %v2072, %v2072
        %v2075 = vmul.f32 %v2073, %v2073
        %2076 = vadd.xlane.f32.xlu0 %v2074
        %v2077 = vpop.xlane.xlu0 %2076
        %2078 = vadd.xlane.f32.xlu0 %v2075
        %v2079 = vpop.xlane.xlu0 %2078
        %v2080 = vmul.f32 %v2077, %v729
        %v2081 = vmul.f32 %v2079, %v729
        %v2082 = vadd.f32 %v2080, 1e-05
        %v2083 = vadd.f32 %v2081, 1e-05
        %v2084 = vrsqrt.pop %v2082
        %v2085 = vrsqrt.pop %v2083
        %v2086 = vmul.f32 %v2072, %v2084
        %v2087 = vmul.f32 %v2073, %v2085
        %v2089 = vlaneseq
        %v2090 = vshrl.u32 %v2089, 7
        %v2091 = vsub.s32 0, %v2090
        %v2092 = vrot.slane %v2064, %v2091
        %v2094 = vmul.f32 %v2086, %v2092
        %v2095 = vmul.f32 %v2087, %v2092
        %v2097 = vlaneseq
        %v2098 = vshrl.u32 %v2097, 7
        %v2099 = vsub.s32 0, %v2098
        %v2100 = vrot.slane %v2065, %v2099
        %v2102 = vadd.f32 %v2094, %v2100
        %v2103 = vadd.f32 %v2095, %v2100
        %2104 = vst [vmem:[%s720] sm:$0xff] %v2102
        %2105 = vst [vmem:[%s720 + $0x8] sm:$0xff] %v2103
        %s2106 = sand.u32 %s431, 1
        %s2107 = scalar_lea.sflag [#allocation4], %s2106
        %s2108 = sand.u32 %s431, 1
        %s2109 = smul.addr %s2108, 16
        %s2110 = scalar_lea.vmem [#allocation19], %s2109
        // Predicated region
        $region133: #{tpu_custom_call.1} parent=91 // pred_check
          %p2111 = pneg %p441
        $region134: #{tpu_custom_call.1} parent=91 // pred_check_branch
          %2113 = sbr.rel (%p2111) target = $region136
        $region135: #{tpu_custom_call.1} parent=91 // pred_region
          %s2115 = ssub.s32 256, 256
          %2116 = vsyncadd %s2107, %s2115
          %s2117 = smul.addr %s40, 2
          %s2118 = smul.addr %s2117, 128
          %s2119 = scalar_lea.hbm %s18, %s2118
          %s2120 = sshll.u32 %s2110, 4
          %s2121 = int_to_ptr.vmem [resolvable:$true] %s2120
          %2126 = dma.vmem_to_hbm [thread:$0]  %s2121, 256, %s2119, %s2107, 128, 128, 8
        $region136: #{tpu_custom_call.1} parent=91 // pred_fallthru
          _
      $region92: #{tpu_custom_call.1} parent=5 // pred_fallthru
        _
      %p2127 = scmp.le.s32.totalorder 2, %s35
      // Predicated region
      $region137: #{tpu_custom_call.1} parent=5 // pred_check
        %p2128 = pneg %p2127
      $region138: #{tpu_custom_call.1} parent=5 // pred_check_branch
        %2130 = sbr.rel (%p2128) target = $region140
      $region139: #{tpu_custom_call.1} parent=5 // pred_region
        %s2131 = ssub.s32 %s35, 2
        // Predicated region
        $region141: #{tpu_custom_call.1} parent=139 // pred_check
          %p2132 = pneg %p447
        $region142: #{tpu_custom_call.1} parent=139 // pred_check_branch
          %2134 = sbr.rel (%p2132) target = $region144
        $region143: #{tpu_custom_call.1} parent=139 // pred_region
          %s2135 = sand.u32 %s432, 1
          %s2136 = scalar_lea.sflag [#allocation4], %s2135
          %s2137 = sand.u32 %s432, 1
          %s2138 = smul.addr %s2137, 16
          %s2139 = scalar_lea.vmem [#allocation19], %s2138
          %2140 = dma.done %s2136, 256
        $region144: #{tpu_custom_call.1} parent=139 // pred_fallthru
          _
      $region140: #{tpu_custom_call.1} parent=5 // pred_fallthru
        _
    $region6: #{tpu_custom_call.1} parent=1 // loop_footer
      %s39 = sadd.s32 1, %s35
    $region7: #{tpu_custom_call.1} parent=1 // loop_footer_branch
      %34 = sbr.rel target = $region3
    $region8: #{tpu_custom_call.1} parent=1 // loop_exit
      _
    %2141 = vsyncpa [#allocation3], 1
    %s2142 = scalar_lea.sflag [#allocation3], 1
    %2143 = vsyncpa %s2142, 1
    %2144 = vsyncpa [#allocation6], 1
    %2145 = vsyncpa [#allocation9], 1
    %2146 = vsyncpa [#allocation12], 1
    %2147 = vsyncpa [#allocation15], 1
    %2148 = vsyncpa [#allocation18], 1
    %2149 = vsyncpa [#allocation4], 1
    %s2150 = scalar_lea.sflag [#allocation4], 1
    %2151 = vsyncpa %s2150, 1

</llo_original>
